<compile_context>
chip_gen: v7x
topology: tpu7x:2x2x1
jax: 0.10.0
libtpu: 0.0.40
codegen_flags: <defaults>
</compile_context>

<pallas_src>
import functools
import itertools

import numpy as np
import jax
import jax.numpy as jnp
from jax import lax
from jax.experimental import pallas as pl
from jax.experimental.pallas import tpu as pltpu

# Matches torch.tensor([0.25, 1]) hard-coded in the reference module.
CLASS_WEIGHTS = (0.25, 1.0)


# ----------------------------------------------------------------------------
# Fused kernel: matcher cost + exact assignment (argmin over permutations) +
# weighted CE + L1 bbox + GIoU losses, all in one invocation.
# ----------------------------------------------------------------------------
def _fused_kernel(lg0_ref, lg1_ref, predc_ref, tgtc_ref, rep_q_ref, rep_t_ref,
                  onehot_ref, qhot_ref, qhot_t_ref, out_ref, *,
                  B, T, n_perm, w_ce, w_bbox, w_giou, w_cls0, w_cls1):
    f32 = jnp.float32

    # ---- build the flattened (q, t) pair axis on lanes, in-kernel ----------
    # predc: (4B, Q) component-major pred boxes (row i*B+b -> component i, img b)
    # tgtc : (4B, T) component-major target boxes
    # rep_q[q, q*T+t] = 1, rep_t[t, q*T+t] = 1  (static 0/1 replication tables)
    pr = jnp.dot(predc_ref[...], rep_q_ref[...], preferred_element_type=f32)   # (4B, QT)
    tg = jnp.dot(tgtc_ref[...], rep_t_ref[...], preferred_element_type=f32)    # (4B, QT)

    pcx, pcy, pw, ph = pr[0 * B:1 * B], pr[1 * B:2 * B], pr[2 * B:3 * B], pr[3 * B:4 * B]
    tcx, tcy, tw, th = tg[0 * B:1 * B], tg[1 * B:2 * B], tg[2 * B:3 * B], tg[3 * B:4 * B]

    # pairwise L1 (cdist, p=1) over cxcywh
    cost_bbox = (jnp.abs(pcx - tcx) + jnp.abs(pcy - tcy)
                 + jnp.abs(pw - tw) + jnp.abs(ph - th))                          # (B, QT)

    # pairwise generalized IoU in xyxy space (reference semantics, no eps)
    px0, py0, px1, py1 = pcx - pw * 0.5, pcy - ph * 0.5, pcx + pw * 0.5, pcy + ph * 0.5
    tx0, ty0, tx1, ty1 = tcx - tw * 0.5, tcy - th * 0.5, tcx + tw * 0.5, tcy + th * 0.5
    area_p = (px1 - px0) * (py1 - py0)
    area_t = (tx1 - tx0) * (ty1 - ty0)
    iw = jnp.maximum(jnp.minimum(px1, tx1) - jnp.maximum(px0, tx0), 0.0)
    ih = jnp.maximum(jnp.minimum(py1, ty1) - jnp.maximum(py0, ty0), 0.0)
    inter = iw * ih
    union = area_p + area_t - inter
    iou = inter / union
    ew = jnp.maximum(jnp.maximum(px1, tx1) - jnp.minimum(px0, tx0), 0.0)
    eh = jnp.maximum(jnp.maximum(py1, ty1) - jnp.minimum(py0, ty0), 0.0)
    earea = ew * eh
    giou = iou - (earea - union) / earea                                         # (B, QT)

    # ---- per-permutation totals via MXU against the static one-hot tables --
    # onehot[q*T+t, p] = 1 iff perm p assigns query q to target t (padded cols = 0)
    # qhot[q, p]       = 1 iff query q is used by perm p
    onehot = onehot_ref[...]                                                     # (QT, Ppad)
    l1_tot = jnp.dot(cost_bbox, onehot, preferred_element_type=f32)             # (B, Ppad)
    gi_tot = jnp.dot(giou, onehot, preferred_element_type=f32)                  # (B, Ppad)
    lg1 = lg1_ref[...]                                                           # (B, Q)
    cc_tot = jnp.dot(lg1, qhot_ref[...], preferred_element_type=f32)            # (B, Ppad)

    totals = -w_ce * cc_tot + w_bbox * l1_tot - w_giou * gi_tot                  # (B, Ppad)

    # mask padded permutation columns with +inf (all-zero columns could
    # otherwise win the argmin when real totals are negative)
    ppad = totals.shape[1]
    lane = lax.broadcasted_iota(jnp.int32, totals.shape, 1)
    totals = jnp.where(lane < n_perm, totals, f32(jnp.inf))

    # exact optimal assignment: argmin over all permutations (first-min tiebreak)
    mn = jnp.min(totals, axis=1, keepdims=True)                                  # (B, 1)
    best = jnp.min(jnp.where(totals == mn, lane, ppad), axis=1, keepdims=True)   # (B, 1) int32
    sel = (lane == best).astype(f32)                                             # (B, Ppad) one-hot

    # ---- losses -------------------------------------------------------------
    # L1Loss: mean over all 4 coords of all matched pairs
    loss_bbox = jnp.sum(sel * l1_tot, keepdims=True) / float(B * T * 4)          # (1,1)
    # mean(1 - diag(GIoU)) over matched pairs
    loss_giou = 1.0 - jnp.sum(sel * gi_tot, keepdims=True) / float(B * T)        # (1,1)

    # per-query labels: 1 iff the query is matched by the winning permutation
    labels = jnp.dot(sel, qhot_t_ref[...], preferred_element_type=f32)           # (B, Q) exact {0,1}
    lg0 = lg0_ref[...]                                                            # (B, Q)
    mx = jnp.maximum(lg0, lg1)
    lse = mx + jnp.log(jnp.exp(lg0 - mx) + jnp.exp(lg1 - mx))
    pos = labels > 0.5
    logp_sel = jnp.where(pos, lg1 - lse, lg0 - lse)
    wts = jnp.where(pos, f32(w_cls1), f32(w_cls0))
    loss_ce = jnp.sum(-wts * logp_sel, keepdims=True) / jnp.sum(wts, keepdims=True)

    # pack the 3 scalars into one full (8,128) tile: row 0 -> ce, 1 -> l1, 2 -> giou
    sub = lax.broadcasted_iota(jnp.int32, out_ref.shape, 0)
    out_ref[...] = jnp.where(sub == 0, loss_ce,
                             jnp.where(sub == 1, loss_bbox, loss_giou))


# ----------------------------------------------------------------------------
# Static tables (permutation one-hots padded to a 128-lane multiple).
# ----------------------------------------------------------------------------
@functools.lru_cache(maxsize=None)
def _static_tables(Q, T):
    # TODO(synk): exhaustive P(Q,T) = Q!/(Q-T)! enumeration is exact but only
    # viable for small Q,T; large Q/T needs a Hungarian solver and a P-axis
    # grid tiling (VMEM guard, esp. on v7x).
    perms = np.asarray(list(itertools.permutations(range(Q), T)), dtype=np.int32)  # (P, T)
    P = perms.shape[0]
    QT = Q * T
    Ppad = ((P + 127) // 128) * 128
    cols = np.repeat(np.arange(P), T)
    rows = (perms * T + np.arange(T, dtype=np.int32)[None, :]).reshape(-1)
    onehot = np.zeros((QT, Ppad), np.float32)
    onehot[rows, cols] = 1.0                    # onehot[q*T+t, p] = 1 iff perms[p, t] == q
    qhot = np.zeros((Q, Ppad), np.float32)
    qhot[perms.reshape(-1), cols] = 1.0         # qhot[q, p] = 1 iff q in perms[p]
    rep_q = np.zeros((Q, QT), np.float32)
    rep_q[np.repeat(np.arange(Q), T), np.arange(QT)] = 1.0     # rep_q[q, q*T+t] = 1
    rep_t = np.zeros((T, QT), np.float32)
    rep_t[np.tile(np.arange(T), Q), np.arange(QT)] = 1.0       # rep_t[t, q*T+t] = 1
    return P, onehot, qhot, np.ascontiguousarray(qhot.T), rep_q, rep_t


@functools.lru_cache(maxsize=None)
def _device_tables(Q, T):
    P, onehot, qhot, qhot_t, rep_q, rep_t = _static_tables(Q, T)
    return (P, jnp.asarray(onehot), jnp.asarray(qhot), jnp.asarray(qhot_t),
            jnp.asarray(rep_q), jnp.asarray(rep_t))


# ----------------------------------------------------------------------------
# Forward (single jit, single pallas_call, everything on-device).
# ----------------------------------------------------------------------------
@functools.partial(jax.jit, static_argnames=("n_perm", "w_ce", "w_bbox", "w_giou"))
def _forward(output_class, bbox_pred, target_boxes,
             onehot, qhot, qhot_t, rep_q, rep_t, *,
             n_perm, w_ce, w_bbox, w_giou):
    B, Q, _ = output_class.shape
    T = target_boxes.shape[1]

    oc = output_class.astype(jnp.float32)
    bp = bbox_pred.astype(jnp.float32)
    tb = target_boxes.astype(jnp.float32)

    # minimal layout plumbing (tiny arrays, fused by XLA): class logits split,
    # boxes component-major so the kernel reads components as sublane rows.
    lg0 = oc[:, :, 0]                                              # (B, Q)
    lg1 = oc[:, :, 1]                                              # (B, Q)
    predc = jnp.transpose(bp, (2, 0, 1)).reshape(4 * B, Q)         # (4B, Q)
    tgtc = jnp.transpose(tb, (2, 0, 1)).reshape(4 * B, T)          # (4B, T)

    kernel = functools.partial(
        _fused_kernel, B=B, T=T, n_perm=n_perm,
        w_ce=float(w_ce), w_bbox=float(w_bbox), w_giou=float(w_giou),
        w_cls0=float(CLASS_WEIGHTS[0]), w_cls1=float(CLASS_WEIGHTS[1]))

    vmem = pl.BlockSpec(memory_space=pltpu.MemorySpace.VMEM)       # untiled, whole array
    packed = pl.pallas_call(
        kernel,
        out_shape=jax.ShapeDtypeStruct((8, 128), jnp.float32),
        in_specs=[vmem] * 9,
        out_specs=vmem,
    )(lg0, lg1, predc, tgtc, rep_q, rep_t, onehot, qhot, qhot_t)

    return packed[0, 0], packed[1, 0], packed[2, 0]


def loss_fn_forward(output_class, bbox_pred, target_boxes, cost_weight_dict):
    """output_class (B,Q,2), bbox_pred (B,Q,4) cxcywh, target_boxes (B,T,4) cxcywh."""
    B, Q, _ = output_class.shape
    T = target_boxes.shape[1]
    assert Q >= T, "permutation matcher assumes Q >= T (all targets matched)"
    n_perm, onehot, qhot, qhot_t, rep_q, rep_t = _device_tables(Q, T)
    return _forward(output_class, bbox_pred, target_boxes,
                    onehot, qhot, qhot_t, rep_q, rep_t,
                    n_perm=n_perm,
                    w_ce=float(cost_weight_dict['loss_ce']),
                    w_bbox=float(cost_weight_dict['loss_bbox']),
                    w_giou=float(cost_weight_dict['loss_giou']))


# ----------------------------------------------------------------------------
# Pure-numpy reference (mirrors the PyTorch module) for the self-check.
# ----------------------------------------------------------------------------
def _reference_numpy(output_class, bbox_pred, target_boxes, cw):
    oc = np.asarray(output_class, np.float64)
    bp = np.asarray(bbox_pred, np.float64)
    tb = np.asarray(target_boxes, np.float64)
    B, Q, C = oc.shape
    T = tb.shape[1]

    def xyxy(b):
        cx, cy, w, h = b[:, 0], b[:, 1], b[:, 2], b[:, 3]
        return np.stack([cx - w / 2, cy - h / 2, cx + w / 2, cy + h / 2], axis=1)

    def giou_pair(b1, b2):
        a1 = (b1[:, 2] - b1[:, 0]) * (b1[:, 3] - b1[:, 1])
        a2 = (b2[:, 2] - b2[:, 0]) * (b2[:, 3] - b2[:, 1])
        lt = np.maximum(b1[:, None, :2], b2[None, :, :2])
        rb = np.minimum(b1[:, None, 2:], b2[None, :, 2:])
        wh = np.clip(rb - lt, 0, None)
        inter = wh[..., 0] * wh[..., 1]
        union = a1[:, None] + a2[None, :] - inter
        iou = inter / union
        lt2 = np.minimum(b1[:, None, :2], b2[None, :, :2])
        rb2 = np.maximum(b1[:, None, 2:], b2[None, :, 2:])
        wh2 = np.clip(rb2 - lt2, 0, None)
        area = wh2[..., 0] * wh2[..., 1]
        return iou - (area - union) / area

    match = np.full(B * Q, -1, np.int64)
    tmp = 0
    for b in range(B):
        cost = (cw['loss_ce'] * (-oc[b][:, [1] * T])
                + cw['loss_bbox'] * np.abs(bp[b][:, None, :] - tb[b][None, :, :]).sum(-1)
                + cw['loss_giou'] * (-giou_pair(xyxy(bp[b]), xyxy(tb[b]))))
        best, bestc = None, np.inf
        for perm in itertools.permutations(range(Q), T):
            c = cost[list(perm), np.arange(T)].sum()
            if c < bestc:
                bestc, best = c, np.asarray(perm)
        order = np.argsort(best)
        match[best[order] + b * Q] = order + tmp
        tmp += T

    ocf, bpf, tbf = oc.reshape(B * Q, C), bp.reshape(B * Q, 4), tb.reshape(B * T, 4)
    mask = match != -1
    labels = np.zeros(B * Q, np.int64)
    labels[mask] = 1
    m = ocf.max(1, keepdims=True)
    logp = ocf - (m + np.log(np.exp(ocf - m).sum(1, keepdims=True)))
    wts = np.where(labels == 1, CLASS_WEIGHTS[1], CLASS_WEIGHTS[0])
    nll = -logp[np.arange(B * Q), labels]
    loss_ce = (wts * nll).sum() / wts.sum()
    mt, mp = tbf[match[mask]], bpf[mask]
    loss_bbox = np.abs(mt - mp).mean()
    loss_giou = (1.0 - np.diag(giou_pair(xyxy(mt), xyxy(mp)))).mean()
    return np.array([loss_ce, loss_bbox, loss_giou])


if __name__ == "__main__":
    B, Q, C, T = 2, 8, 2, 4
    key = jax.random.PRNGKey(0)
    k1, k2, k3 = jax.random.split(key, 3)

    output_class = jax.random.normal(k1, (B, Q, C), dtype=jnp.float32)
    bp_cxcy = jax.random.uniform(k2, (B, Q, 2), minval=0.2, maxval=0.8)
    bp_wh = jax.random.uniform(jax.random.fold_in(k2, 1), (B, Q, 2), minval=0.1, maxval=0.3)
    bbox_pred = jnp.concatenate([bp_cxcy, bp_wh], axis=-1).astype(jnp.float32)
    tg_cxcy = jax.random.uniform(k3, (B, T, 2), minval=0.2, maxval=0.8)
    tg_wh = jax.random.uniform(jax.random.fold_in(k3, 1), (B, T, 2), minval=0.1, maxval=0.3)
    target_boxes = jnp.concatenate([tg_cxcy, tg_wh], axis=-1).astype(jnp.float32)

    cost_weight_dict = {'loss_ce': 1.0, 'loss_bbox': 5.0, 'loss_giou': 2.0}

    losses = loss_fn_forward(output_class, bbox_pred, target_boxes, cost_weight_dict)
    loss_ce, loss_bbox, loss_giou = jax.block_until_ready(losses)

    got = np.array([float(loss_ce), float(loss_bbox), float(loss_giou)])
    ref = _reference_numpy(output_class, bbox_pred, target_boxes, cost_weight_dict)
    assert np.all(np.isfinite(got)), got
    assert np.allclose(got, ref, rtol=1e-3, atol=1e-3), (got, ref)
    print("KERNEL_OK")
</pallas_src>

<mosaic_0001>
module attributes {stable_mosaic.version = 11 : i64} {
  func.func @_fused_kernel(%arg0: memref<2x8xf32, #tpu.memory_space<vmem>>, %arg1: memref<2x8xf32, #tpu.memory_space<vmem>>, %arg2: memref<8x8xf32, #tpu.memory_space<vmem>>, %arg3: memref<8x4xf32, #tpu.memory_space<vmem>>, %arg4: memref<8x32xf32, #tpu.memory_space<vmem>>, %arg5: memref<4x32xf32, #tpu.memory_space<vmem>>, %arg6: memref<32x1792xf32, #tpu.memory_space<vmem>>, %arg7: memref<8x1792xf32, #tpu.memory_space<vmem>>, %arg8: memref<1792x8xf32, #tpu.memory_space<vmem>>, %arg9: memref<8x128xf32, #tpu.memory_space<vmem>>) attributes {dimension_semantics = [], scalar_prefetch = 0 : i64, scratch_operands = 0 : i64, tpu.core_type = #tpu.core_type<tc>} {
    %c0 = arith.constant 0 : index
    %c0_0 = arith.constant 0 : index
    %0 = vector.load %arg2[%c0, %c0_0] : memref<8x8xf32, #tpu.memory_space<vmem>>, vector<8x8xf32>
    %c0_1 = arith.constant 0 : index
    %c0_2 = arith.constant 0 : index
    %1 = vector.load %arg4[%c0_1, %c0_2] : memref<8x32xf32, #tpu.memory_space<vmem>>, vector<8x32xf32>
    %cst = arith.constant dense<0.000000e+00> : vector<8x32xf32>
    %2 = tpu.matmul %0, %1, %cst {dimension_numbers = #tpu.dot_dimension_numbers<[1], [0], [0], [1], [0, 0, 1, 1], [], []>} : vector<8x8xf32>, vector<8x32xf32>, vector<8x32xf32> -> vector<8x32xf32>
    %c0_3 = arith.constant 0 : index
    %c0_4 = arith.constant 0 : index
    %3 = vector.load %arg3[%c0_3, %c0_4] : memref<8x4xf32, #tpu.memory_space<vmem>>, vector<8x4xf32>
    %c0_5 = arith.constant 0 : index
    %c0_6 = arith.constant 0 : index
    %4 = vector.load %arg5[%c0_5, %c0_6] : memref<4x32xf32, #tpu.memory_space<vmem>>, vector<4x32xf32>
    %cst_7 = arith.constant dense<0.000000e+00> : vector<8x32xf32>
    %5 = tpu.matmul %3, %4, %cst_7 {dimension_numbers = #tpu.dot_dimension_numbers<[1], [0], [0], [1], [0, 0, 1, 1], [], []>} : vector<8x4xf32>, vector<4x32xf32>, vector<8x32xf32> -> vector<8x32xf32>
    %6 = vector.extract_strided_slice %2 {offsets = [0, 0], sizes = [2, 32], strides = [1, 1]} : vector<8x32xf32> to vector<2x32xf32>
    %7 = vector.extract_strided_slice %2 {offsets = [2, 0], sizes = [2, 32], strides = [1, 1]} : vector<8x32xf32> to vector<2x32xf32>
    %8 = vector.extract_strided_slice %2 {offsets = [4, 0], sizes = [2, 32], strides = [1, 1]} : vector<8x32xf32> to vector<2x32xf32>
    %9 = vector.extract_strided_slice %2 {offsets = [6, 0], sizes = [2, 32], strides = [1, 1]} : vector<8x32xf32> to vector<2x32xf32>
    %10 = vector.extract_strided_slice %5 {offsets = [0, 0], sizes = [2, 32], strides = [1, 1]} : vector<8x32xf32> to vector<2x32xf32>
    %11 = vector.extract_strided_slice %5 {offsets = [2, 0], sizes = [2, 32], strides = [1, 1]} : vector<8x32xf32> to vector<2x32xf32>
    %12 = vector.extract_strided_slice %5 {offsets = [4, 0], sizes = [2, 32], strides = [1, 1]} : vector<8x32xf32> to vector<2x32xf32>
    %13 = vector.extract_strided_slice %5 {offsets = [6, 0], sizes = [2, 32], strides = [1, 1]} : vector<8x32xf32> to vector<2x32xf32>
    %14 = arith.subf %6, %10 : vector<2x32xf32>
    %15 = math.absf %14 : vector<2x32xf32>
    %16 = arith.subf %7, %11 : vector<2x32xf32>
    %17 = math.absf %16 : vector<2x32xf32>
    %18 = arith.addf %15, %17 : vector<2x32xf32>
    %19 = arith.subf %8, %12 : vector<2x32xf32>
    %20 = math.absf %19 : vector<2x32xf32>
    %21 = arith.addf %18, %20 : vector<2x32xf32>
    %22 = arith.subf %9, %13 : vector<2x32xf32>
    %23 = math.absf %22 : vector<2x32xf32>
    %24 = arith.addf %21, %23 : vector<2x32xf32>
    %cst_8 = arith.constant 5.000000e-01 : f32
    %25 = vector.broadcast %cst_8 : f32 to vector<2x32xf32>
    %26 = arith.mulf %8, %25 : vector<2x32xf32>
    %27 = arith.subf %6, %26 : vector<2x32xf32>
    %cst_9 = arith.constant 5.000000e-01 : f32
    %28 = vector.broadcast %cst_9 : f32 to vector<2x32xf32>
    %29 = arith.mulf %9, %28 : vector<2x32xf32>
    %30 = arith.subf %7, %29 : vector<2x32xf32>
    %cst_10 = arith.constant 5.000000e-01 : f32
    %31 = vector.broadcast %cst_10 : f32 to vector<2x32xf32>
    %32 = arith.mulf %8, %31 : vector<2x32xf32>
    %33 = arith.addf %6, %32 : vector<2x32xf32>
    %cst_11 = arith.constant 5.000000e-01 : f32
    %34 = vector.broadcast %cst_11 : f32 to vector<2x32xf32>
    %35 = arith.mulf %9, %34 : vector<2x32xf32>
    %36 = arith.addf %7, %35 : vector<2x32xf32>
    %cst_12 = arith.constant 5.000000e-01 : f32
    %37 = vector.broadcast %cst_12 : f32 to vector<2x32xf32>
    %38 = arith.mulf %12, %37 : vector<2x32xf32>
    %39 = arith.subf %10, %38 : vector<2x32xf32>
    %cst_13 = arith.constant 5.000000e-01 : f32
    %40 = vector.broadcast %cst_13 : f32 to vector<2x32xf32>
    %41 = arith.mulf %13, %40 : vector<2x32xf32>
    %42 = arith.subf %11, %41 : vector<2x32xf32>
    %cst_14 = arith.constant 5.000000e-01 : f32
    %43 = vector.broadcast %cst_14 : f32 to vector<2x32xf32>
    %44 = arith.mulf %12, %43 : vector<2x32xf32>
    %45 = arith.addf %10, %44 : vector<2x32xf32>
    %cst_15 = arith.constant 5.000000e-01 : f32
    %46 = vector.broadcast %cst_15 : f32 to vector<2x32xf32>
    %47 = arith.mulf %13, %46 : vector<2x32xf32>
    %48 = arith.addf %11, %47 : vector<2x32xf32>
    %49 = arith.subf %33, %27 : vector<2x32xf32>
    %50 = arith.subf %36, %30 : vector<2x32xf32>
    %51 = arith.mulf %49, %50 : vector<2x32xf32>
    %52 = arith.subf %45, %39 : vector<2x32xf32>
    %53 = arith.subf %48, %42 : vector<2x32xf32>
    %54 = arith.mulf %52, %53 : vector<2x32xf32>
    %55 = arith.minimumf %33, %45 : vector<2x32xf32>
    %56 = arith.maximumf %27, %39 : vector<2x32xf32>
    %57 = arith.subf %55, %56 : vector<2x32xf32>
    %cst_16 = arith.constant 0.000000e+00 : f32
    %58 = vector.broadcast %cst_16 : f32 to vector<2x32xf32>
    %59 = arith.maximumf %57, %58 : vector<2x32xf32>
    %60 = arith.minimumf %36, %48 : vector<2x32xf32>
    %61 = arith.maximumf %30, %42 : vector<2x32xf32>
    %62 = arith.subf %60, %61 : vector<2x32xf32>
    %cst_17 = arith.constant 0.000000e+00 : f32
    %63 = vector.broadcast %cst_17 : f32 to vector<2x32xf32>
    %64 = arith.maximumf %62, %63 : vector<2x32xf32>
    %65 = arith.mulf %59, %64 : vector<2x32xf32>
    %66 = arith.addf %51, %54 : vector<2x32xf32>
    %67 = arith.subf %66, %65 : vector<2x32xf32>
    %68 = arith.divf %65, %67 : vector<2x32xf32>
    %69 = arith.maximumf %33, %45 : vector<2x32xf32>
    %70 = arith.minimumf %27, %39 : vector<2x32xf32>
    %71 = arith.subf %69, %70 : vector<2x32xf32>
    %cst_18 = arith.constant 0.000000e+00 : f32
    %72 = vector.broadcast %cst_18 : f32 to vector<2x32xf32>
    %73 = arith.maximumf %71, %72 : vector<2x32xf32>
    %74 = arith.maximumf %36, %48 : vector<2x32xf32>
    %75 = arith.minimumf %30, %42 : vector<2x32xf32>
    %76 = arith.subf %74, %75 : vector<2x32xf32>
    %cst_19 = arith.constant 0.000000e+00 : f32
    %77 = vector.broadcast %cst_19 : f32 to vector<2x32xf32>
    %78 = arith.maximumf %76, %77 : vector<2x32xf32>
    %79 = arith.mulf %73, %78 : vector<2x32xf32>
    %80 = arith.subf %79, %67 : vector<2x32xf32>
    %81 = arith.divf %80, %79 : vector<2x32xf32>
    %82 = arith.subf %68, %81 : vector<2x32xf32>
    %c0_20 = arith.constant 0 : index
    %c0_21 = arith.constant 0 : index
    %83 = vector.load %arg6[%c0_20, %c0_21] : memref<32x1792xf32, #tpu.memory_space<vmem>>, vector<32x1792xf32>
    %cst_22 = arith.constant dense<0.000000e+00> : vector<2x1792xf32>
    %84 = tpu.matmul %24, %83, %cst_22 {dimension_numbers = #tpu.dot_dimension_numbers<[1], [0], [0], [1], [0, 0, 1, 1], [], []>} : vector<2x32xf32>, vector<32x1792xf32>, vector<2x1792xf32> -> vector<2x1792xf32>
    %cst_23 = arith.constant dense<0.000000e+00> : vector<2x1792xf32>
    %85 = tpu.matmul %82, %83, %cst_23 {dimension_numbers = #tpu.dot_dimension_numbers<[1], [0], [0], [1], [0, 0, 1, 1], [], []>} : vector<2x32xf32>, vector<32x1792xf32>, vector<2x1792xf32> -> vector<2x1792xf32>
    %c0_24 = arith.constant 0 : index
    %c0_25 = arith.constant 0 : index
    %86 = vector.load %arg1[%c0_24, %c0_25] : memref<2x8xf32, #tpu.memory_space<vmem>>, vector<2x8xf32>
    %c0_26 = arith.constant 0 : index
    %c0_27 = arith.constant 0 : index
    %87 = vector.load %arg7[%c0_26, %c0_27] : memref<8x1792xf32, #tpu.memory_space<vmem>>, vector<8x1792xf32>
    %cst_28 = arith.constant dense<0.000000e+00> : vector<2x1792xf32>
    %88 = tpu.matmul %86, %87, %cst_28 {dimension_numbers = #tpu.dot_dimension_numbers<[1], [0], [0], [1], [0, 0, 1, 1], [], []>} : vector<2x8xf32>, vector<8x1792xf32>, vector<2x1792xf32> -> vector<2x1792xf32>
    %cst_29 = arith.constant -1.000000e+00 : f32
    %89 = vector.broadcast %cst_29 : f32 to vector<2x1792xf32>
    %90 = arith.mulf %89, %88 : vector<2x1792xf32>
    %cst_30 = arith.constant 5.000000e+00 : f32
    %91 = vector.broadcast %cst_30 : f32 to vector<2x1792xf32>
    %92 = arith.mulf %91, %84 : vector<2x1792xf32>
    %93 = arith.addf %90, %92 : vector<2x1792xf32>
    %cst_31 = arith.constant 2.000000e+00 : f32
    %94 = vector.broadcast %cst_31 : f32 to vector<2x1792xf32>
    %95 = arith.mulf %94, %85 : vector<2x1792xf32>
    %96 = arith.subf %93, %95 : vector<2x1792xf32>
    %97 = tpu.iota {dimensions = array<i32: 1>} : vector<2x1792xi32>
    %c1680_i32 = arith.constant 1680 : i32
    %98 = vector.broadcast %c1680_i32 : i32 to vector<2x1792xi32>
    %99 = arith.cmpi slt, %97, %98 : vector<2x1792xi32>
    %cst_32 = arith.constant 0x7F800000 : f32
    %100 = vector.broadcast %cst_32 : f32 to vector<2x1792xf32>
    %101 = arith.select %99, %96, %100 : vector<2x1792xi1>, vector<2x1792xf32>
    %cst_33 = arith.constant dense<0x7F800000> : vector<2xf32>
    %102 = vector.multi_reduction <minimumf>, %101, %cst_33 [1] : vector<2x1792xf32> to vector<2xf32>
    %103 = vector.shape_cast %102 : vector<2xf32> to vector<2x1xf32>
    %104 = vector.broadcast %103 : vector<2x1xf32> to vector<2x1792xf32>
    %105 = arith.cmpf oeq, %101, %104 : vector<2x1792xf32>
    %c1792_i32 = arith.constant 1792 : i32
    %106 = vector.broadcast %c1792_i32 : i32 to vector<2x1792xi32>
    %107 = arith.select %105, %97, %106 : vector<2x1792xi1>, vector<2x1792xi32>
    %cst_34 = arith.constant dense<2147483647> : vector<2xi32>
    %108 = vector.multi_reduction <minsi>, %107, %cst_34 [1] : vector<2x1792xi32> to vector<2xi32>
    %109 = vector.shape_cast %108 : vector<2xi32> to vector<2x1xi32>
    %110 = vector.broadcast %109 : vector<2x1xi32> to vector<2x1792xi32>
    %111 = arith.cmpi eq, %97, %110 : vector<2x1792xi32>
    %112 = arith.extui %111 : vector<2x1792xi1> to vector<2x1792xi32>
    %113 = arith.sitofp %112 : vector<2x1792xi32> to vector<2x1792xf32>
    %114 = arith.mulf %113, %84 : vector<2x1792xf32>
    %115 = vector.shape_cast %114 : vector<2x1792xf32> to vector<1x2x1792xf32>
    %cst_35 = arith.constant dense<0.000000e+00> : vector<1xf32>
    %116 = vector.multi_reduction <add>, %115, %cst_35 [1, 2] : vector<1x2x1792xf32> to vector<1xf32>
    %117 = vector.shape_cast %116 : vector<1xf32> to vector<1x1x1xf32>
    %118 = vector.extract %117[0, 0, 0] : f32 from vector<1x1x1xf32>
    %119 = vector.broadcast %118 : f32 to vector<1x1xf32>
    %cst_36 = arith.constant 3.200000e+01 : f32
    %120 = vector.broadcast %cst_36 : f32 to vector<1x1xf32>
    %121 = arith.divf %119, %120 : vector<1x1xf32>
    %122 = arith.mulf %113, %85 : vector<2x1792xf32>
    %123 = vector.shape_cast %122 : vector<2x1792xf32> to vector<1x2x1792xf32>
    %cst_37 = arith.constant dense<0.000000e+00> : vector<1xf32>
    %124 = vector.multi_reduction <add>, %123, %cst_37 [1, 2] : vector<1x2x1792xf32> to vector<1xf32>
    %125 = vector.shape_cast %124 : vector<1xf32> to vector<1x1x1xf32>
    %126 = vector.extract %125[0, 0, 0] : f32 from vector<1x1x1xf32>
    %127 = vector.broadcast %126 : f32 to vector<1x1xf32>
    %cst_38 = arith.constant 8.000000e+00 : f32
    %128 = vector.broadcast %cst_38 : f32 to vector<1x1xf32>
    %129 = arith.divf %127, %128 : vector<1x1xf32>
    %cst_39 = arith.constant 1.000000e+00 : f32
    %130 = vector.broadcast %cst_39 : f32 to vector<1x1xf32>
    %131 = arith.subf %130, %129 : vector<1x1xf32>
    %c0_40 = arith.constant 0 : index
    %c0_41 = arith.constant 0 : index
    %132 = vector.load %arg8[%c0_40, %c0_41] : memref<1792x8xf32, #tpu.memory_space<vmem>>, vector<1792x8xf32>
    %cst_42 = arith.constant dense<0.000000e+00> : vector<2x8xf32>
    %133 = tpu.matmul %113, %132, %cst_42 {dimension_numbers = #tpu.dot_dimension_numbers<[1], [0], [0], [1], [0, 0, 1, 1], [], []>} : vector<2x1792xf32>, vector<1792x8xf32>, vector<2x8xf32> -> vector<2x8xf32>
    %c0_43 = arith.constant 0 : index
    %c0_44 = arith.constant 0 : index
    %134 = vector.load %arg0[%c0_43, %c0_44] : memref<2x8xf32, #tpu.memory_space<vmem>>, vector<2x8xf32>
    %135 = arith.maximumf %134, %86 : vector<2x8xf32>
    %136 = arith.subf %134, %135 : vector<2x8xf32>
    %137 = math.exp %136 : vector<2x8xf32>
    %138 = arith.subf %86, %135 : vector<2x8xf32>
    %139 = math.exp %138 : vector<2x8xf32>
    %140 = arith.addf %137, %139 : vector<2x8xf32>
    %141 = math.log %140 : vector<2x8xf32>
    %142 = arith.addf %135, %141 : vector<2x8xf32>
    %cst_45 = arith.constant 5.000000e-01 : f32
    %143 = vector.broadcast %cst_45 : f32 to vector<2x8xf32>
    %144 = arith.cmpf ogt, %133, %143 : vector<2x8xf32>
    %145 = arith.subf %86, %142 : vector<2x8xf32>
    %146 = arith.subf %134, %142 : vector<2x8xf32>
    %147 = arith.select %144, %145, %146 : vector<2x8xi1>, vector<2x8xf32>
    %cst_46 = arith.constant 1.000000e+00 : f32
    %cst_47 = arith.constant 2.500000e-01 : f32
    %148 = vector.broadcast %cst_46 : f32 to vector<2x8xf32>
    %149 = vector.broadcast %cst_47 : f32 to vector<2x8xf32>
    %150 = arith.select %144, %148, %149 : vector<2x8xi1>, vector<2x8xf32>
    %cst_48 = arith.constant 0.000000e+00 : f32
    %151 = vector.broadcast %cst_48 : f32 to vector<2x8xf32>
    %152 = arith.subf %151, %150 : vector<2x8xf32>
    %153 = arith.mulf %152, %147 : vector<2x8xf32>
    %154 = vector.shape_cast %153 : vector<2x8xf32> to vector<1x2x8xf32>
    %cst_49 = arith.constant dense<0.000000e+00> : vector<1xf32>
    %155 = vector.multi_reduction <add>, %154, %cst_49 [1, 2] : vector<1x2x8xf32> to vector<1xf32>
    %156 = vector.shape_cast %155 : vector<1xf32> to vector<1x1x1xf32>
    %157 = vector.extract %156[0, 0, 0] : f32 from vector<1x1x1xf32>
    %158 = vector.broadcast %157 : f32 to vector<1x1xf32>
    %159 = vector.shape_cast %150 : vector<2x8xf32> to vector<1x2x8xf32>
    %cst_50 = arith.constant dense<0.000000e+00> : vector<1xf32>
    %160 = vector.multi_reduction <add>, %159, %cst_50 [1, 2] : vector<1x2x8xf32> to vector<1xf32>
    %161 = vector.shape_cast %160 : vector<1xf32> to vector<1x1x1xf32>
    %162 = vector.extract %161[0, 0, 0] : f32 from vector<1x1x1xf32>
    %163 = vector.broadcast %162 : f32 to vector<1x1xf32>
    %164 = arith.divf %158, %163 : vector<1x1xf32>
    %165 = tpu.iota {dimensions = array<i32: 0>} : vector<8x128xi32>
    %c0_i32 = arith.constant 0 : i32
    %166 = vector.broadcast %c0_i32 : i32 to vector<8x128xi32>
    %167 = arith.cmpi eq, %165, %166 : vector<8x128xi32>
    %c1_i32 = arith.constant 1 : i32
    %168 = vector.broadcast %c1_i32 : i32 to vector<8x128xi32>
    %169 = arith.cmpi eq, %165, %168 : vector<8x128xi32>
    %170 = vector.shape_cast %121 : vector<1x1xf32> to vector<1x1xf32>
    %171 = vector.broadcast %170 : vector<1x1xf32> to vector<8x128xf32>
    %172 = vector.shape_cast %131 : vector<1x1xf32> to vector<1x1xf32>
    %173 = vector.broadcast %172 : vector<1x1xf32> to vector<8x128xf32>
    %174 = arith.select %169, %171, %173 : vector<8x128xi1>, vector<8x128xf32>
    %175 = vector.shape_cast %164 : vector<1x1xf32> to vector<1x1xf32>
    %176 = vector.broadcast %175 : vector<1x1xf32> to vector<8x128xf32>
    %177 = arith.select %167, %176, %174 : vector<8x128xi1>, vector<8x128xf32>
    %c0_51 = arith.constant 0 : index
    %c0_52 = arith.constant 0 : index
    %178 = vector.load %arg9[%c0_51, %c0_52] : memref<8x128xf32, #tpu.memory_space<vmem>>, vector<8x128xf32>
    tpu.vector_store %arg9[%c0_51, %c0_52], %177 {strides = array<i32>} : memref<8x128xf32, #tpu.memory_space<vmem>>, vector<8x128xf32>,
    return
  }
}

</mosaic_0001>

<llo_original>
// kernel: _forward.1
$region0: #{_forward.1}
  #allocation0 [shape = 'u32[]', space=smem, size = 0x4, offset = 0x4, fixed_abs, tag = 'smem constant byte address 0x4 - core index']
  #allocation1 [shape = 'u32[144,128]{1,0:T(1,128)}', space=vmem, size = 0x12000, scoped, tag = 'internal scratch']
  %s0 = inlined_call_operand.vmem [shape: f32[2,8], index: 0, kind: input, shape index: {}]
  %s1 = inlined_call_operand.vmem [shape: f32[2,8], index: 1, kind: input, shape index: {}]
  %s2 = inlined_call_operand.vmem [shape: f32[8,8], index: 2, kind: input, shape index: {}]
  %s3 = inlined_call_operand.vmem [shape: f32[8,4], index: 3, kind: input, shape index: {}]
  %s4 = inlined_call_operand.vmem [shape: f32[8,32], index: 4, kind: input, shape index: {}]
  %s5 = inlined_call_operand.vmem [shape: f32[4,32], index: 5, kind: input, shape index: {}]
  %s6 = inlined_call_operand.vmem [shape: f32[32,1792], index: 6, kind: input, shape index: {}]
  %s7 = inlined_call_operand.vmem [shape: f32[8,1792], index: 7, kind: input, shape index: {}]
  %s8 = inlined_call_operand.vmem [shape: f32[1792,8], index: 8, kind: input, shape index: {}]
  %s9 = inlined_call_operand.vmem [shape: f32[8,128], index: 9, kind: output, shape index: {}]
  %s10 = sld [smem:[#allocation0]]
  $region46: #{_forward.1} parent=0
    _
  %s12 = ssub.s32 1, %s10
  %s13 = scalar_select 0, %s12, %s10
  // Predicated region
  $region2: #{_forward.1} parent=0 // pred_check
    _
  $region3: #{_forward.1} parent=0 // pred_check_branch
    %15 = sbr.rel (0) target = $region5
  $region4: #{_forward.1} parent=0 // pred_region
    _
  $region5: #{_forward.1} parent=0 // pred_fallthru
    _
  // Predicated region
  $region6: #{_forward.1} parent=0 // pred_check
    _
  $region7: #{_forward.1} parent=0 // pred_check_branch
    %17 = sbr.rel (0) target = $region9
  $region8: #{_forward.1} parent=0 // pred_region
    _
  $region9: #{_forward.1} parent=0 // pred_fallthru
    _
  // Predicated region
  $region10: #{_forward.1} parent=0 // pred_check
    _
  $region11: #{_forward.1} parent=0 // pred_check_branch
    %19 = sbr.rel (0) target = $region13
  $region12: #{_forward.1} parent=0 // pred_region
    _
  $region13: #{_forward.1} parent=0 // pred_fallthru
    _
  // Predicated region
  $region14: #{_forward.1} parent=0 // pred_check
    _
  $region15: #{_forward.1} parent=0 // pred_check_branch
    %21 = sbr.rel (0) target = $region17
  $region16: #{_forward.1} parent=0 // pred_region
    _
  $region17: #{_forward.1} parent=0 // pred_fallthru
    _
  // Predicated region
  $region18: #{_forward.1} parent=0 // pred_check
    _
  $region19: #{_forward.1} parent=0 // pred_check_branch
    %23 = sbr.rel (0) target = $region21
  $region20: #{_forward.1} parent=0 // pred_region
    _
  $region21: #{_forward.1} parent=0 // pred_fallthru
    _
  // Predicated region
  $region22: #{_forward.1} parent=0 // pred_check
    _
  $region23: #{_forward.1} parent=0 // pred_check_branch
    %25 = sbr.rel (0) target = $region25
  $region24: #{_forward.1} parent=0 // pred_region
    _
  $region25: #{_forward.1} parent=0 // pred_fallthru
    _
  // Predicated region
  $region26: #{_forward.1} parent=0 // pred_check
    _
  $region27: #{_forward.1} parent=0 // pred_check_branch
    %27 = sbr.rel (0) target = $region29
  $region28: #{_forward.1} parent=0 // pred_region
    _
  $region29: #{_forward.1} parent=0 // pred_fallthru
    _
  // Predicated region
  $region30: #{_forward.1} parent=0 // pred_check
    _
  $region31: #{_forward.1} parent=0 // pred_check_branch
    %29 = sbr.rel (0) target = $region33
  $region32: #{_forward.1} parent=0 // pred_region
    _
  $region33: #{_forward.1} parent=0 // pred_fallthru
    _
  // Predicated region
  $region34: #{_forward.1} parent=0 // pred_check
    _
  $region35: #{_forward.1} parent=0 // pred_check_branch
    %31 = sbr.rel (0) target = $region37
  $region36: #{_forward.1} parent=0 // pred_region
    _
  $region37: #{_forward.1} parent=0 // pred_fallthru
    _
  %v32 = vld [vmem:[%s2] sm:$0xff]
  %v33 = vld [vmem:[%s4] sm:$0xff]
  %vm34 = vcmask 64512
  %v36 = vsel %vm34, %v32, 0
  %38 = vmatprep.subr.mxu0 0.0
  %39 = vmatpush1.msra.mxu0 %v33
  %40 = vmatprep.subr.mxu0 0.0
  %41 = vmatpush1.msra.mxu0 0.0
  %42 = vmatprep.subr.mxu0 0.0
  %43 = vmatpush1.msra.mxu0 0.0
  %44 = vmatprep.subr.mxu0 0.0
  %45 = vmatpush1.msra.mxu0 0.0
  %46 = vmatprep.subr.mxu0 0.0
  %47 = vmatpush1.msra.mxu0 0.0
  %48 = vmatprep.subr.mxu0 0.0
  %49 = vmatpush1.msra.mxu0 0.0
  %50 = vmatprep.subr.mxu0 0.0
  %51 = vmatpush1.msra.mxu0 0.0
  %52 = vmatprep.subr.mxu0 0.0
  %53 = vmatpush1.msra.mxu0 0.0
  %54 = vmatprep.subr.mxu0 0.0
  %55 = vmatpush1.msra.mxu0 0.0
  %56 = vmatprep.subr.mxu0 0.0
  %57 = vmatpush1.msra.mxu0 0.0
  %58 = vmatprep.subr.mxu0 0.0
  %59 = vmatpush1.msra.mxu0 0.0
  %60 = vmatprep.subr.mxu0 0.0
  %61 = vmatpush1.msra.mxu0 0.0
  %62 = vmatprep.subr.mxu0 0.0
  %63 = vmatpush1.msra.mxu0 0.0
  %64 = vmatprep.subr.mxu0 0.0
  %65 = vmatpush1.msra.mxu0 0.0
  %66 = vmatprep.subr.mxu0 0.0
  %67 = vmatpush1.msra.mxu0 0.0
  %68 = vmatprep.subr.mxu0 0.0
  %69 = vmatpush1.msra.mxu0 0.0
  %70 = vmatprep.subr.mxu0 0.0
  %71 = vmatpush1.msra.mxu0 0.0
  %72 = vmatprep.subr.mxu0 0.0
  %73 = vmatpush1.msra.mxu0 0.0
  %74 = vmatprep.subr.mxu0 0.0
  %75 = vmatpush1.msra.mxu0 0.0
  %76 = vmatprep.subr.mxu0 0.0
  %77 = vmatpush1.msra.mxu0 0.0
  %78 = vmatprep.subr.mxu0 0.0
  %79 = vmatpush1.msra.mxu0 0.0
  %80 = vmatprep.subr.mxu0 0.0
  %81 = vmatpush1.msra.mxu0 0.0
  %82 = vmatprep.subr.mxu0 0.0
  %83 = vmatpush1.msra.mxu0 0.0
  %84 = vmatprep.subr.mxu0 0.0
  %85 = vmatpush1.msra.mxu0 0.0
  %86 = vmatprep.subr.mxu0 0.0
  %87 = vmatpush1.msra.mxu0 0.0
  %88 = vmatprep.subr.mxu0 0.0
  %89 = vmatpush1.msra.mxu0 0.0
  %90 = vmatprep.subr.mxu0 0.0
  %91 = vmatpush1.msra.mxu0 0.0
  %92 = vmatprep.subr.mxu0 0.0
  %93 = vmatpush1.msra.mxu0 0.0
  %94 = vmatprep.subr.mxu0 0.0
  %95 = vmatpush1.msra.mxu0 0.0
  %96 = vmatprep.subr.mxu0 0.0
  %97 = vmatpush1.msra.mxu0 0.0
  %98 = vmatprep.subr.mxu0 0.0
  %99 = vmatpush1.msra.mxu0 0.0
  %100 = vmatprep.subr.mxu0 0.0
  %101 = vmatpush1.msra.mxu0 0.0
  %102 = vmatprep.mubr.f32.mxu0 0.0
  %103 = vmatmul.mubr.f32.gmra.mrb[0].mxu0 %v36
  %v104 = vpop.f32.mrb[0].mxu0
  %v105 = vadd.f32 0.0, %v104
  %v106 = vpop.f32.mrb[0].mxu0
  %107 = vdwg.mxu0
  %v108 = vld [vmem:[%s3] sm:$0xff]
  %v109 = vld [vmem:[%s5] sm:$0xf]
  %vm110 = vcmask 31744
  %v112 = vsel %vm110, %v108, 0
  %vm114 = vcmask 1043456
  %v116 = vsel %vm114, %v109, 0
  %118 = vmatprep.subr.mxu0 0.0
  %119 = vmatpush1.msra.mxu0 %v116
  %120 = vmatprep.subr.mxu0 0.0
  %121 = vmatpush1.msra.mxu0 0.0
  %122 = vmatprep.subr.mxu0 0.0
  %123 = vmatpush1.msra.mxu0 0.0
  %124 = vmatprep.subr.mxu0 0.0
  %125 = vmatpush1.msra.mxu0 0.0
  %126 = vmatprep.subr.mxu0 0.0
  %127 = vmatpush1.msra.mxu0 0.0
  %128 = vmatprep.subr.mxu0 0.0
  %129 = vmatpush1.msra.mxu0 0.0
  %130 = vmatprep.subr.mxu0 0.0
  %131 = vmatpush1.msra.mxu0 0.0
  %132 = vmatprep.subr.mxu0 0.0
  %133 = vmatpush1.msra.mxu0 0.0
  %134 = vmatprep.subr.mxu0 0.0
  %135 = vmatpush1.msra.mxu0 0.0
  %136 = vmatprep.subr.mxu0 0.0
  %137 = vmatpush1.msra.mxu0 0.0
  %138 = vmatprep.subr.mxu0 0.0
  %139 = vmatpush1.msra.mxu0 0.0
  %140 = vmatprep.subr.mxu0 0.0
  %141 = vmatpush1.msra.mxu0 0.0
  %142 = vmatprep.subr.mxu0 0.0
  %143 = vmatpush1.msra.mxu0 0.0
  %144 = vmatprep.subr.mxu0 0.0
  %145 = vmatpush1.msra.mxu0 0.0
  %146 = vmatprep.subr.mxu0 0.0
  %147 = vmatpush1.msra.mxu0 0.0
  %148 = vmatprep.subr.mxu0 0.0
  %149 = vmatpush1.msra.mxu0 0.0
  %150 = vmatprep.subr.mxu0 0.0
  %151 = vmatpush1.msra.mxu0 0.0
  %152 = vmatprep.subr.mxu0 0.0
  %153 = vmatpush1.msra.mxu0 0.0
  %154 = vmatprep.subr.mxu0 0.0
  %155 = vmatpush1.msra.mxu0 0.0
  %156 = vmatprep.subr.mxu0 0.0
  %157 = vmatpush1.msra.mxu0 0.0
  %158 = vmatprep.subr.mxu0 0.0
  %159 = vmatpush1.msra.mxu0 0.0
  %160 = vmatprep.subr.mxu0 0.0
  %161 = vmatpush1.msra.mxu0 0.0
  %162 = vmatprep.subr.mxu0 0.0
  %163 = vmatpush1.msra.mxu0 0.0
  %164 = vmatprep.subr.mxu0 0.0
  %165 = vmatpush1.msra.mxu0 0.0
  %166 = vmatprep.subr.mxu0 0.0
  %167 = vmatpush1.msra.mxu0 0.0
  %168 = vmatprep.subr.mxu0 0.0
  %169 = vmatpush1.msra.mxu0 0.0
  %170 = vmatprep.subr.mxu0 0.0
  %171 = vmatpush1.msra.mxu0 0.0
  %172 = vmatprep.subr.mxu0 0.0
  %173 = vmatpush1.msra.mxu0 0.0
  %174 = vmatprep.subr.mxu0 0.0
  %175 = vmatpush1.msra.mxu0 0.0
  %176 = vmatprep.subr.mxu0 0.0
  %177 = vmatpush1.msra.mxu0 0.0
  %178 = vmatprep.subr.mxu0 0.0
  %179 = vmatpush1.msra.mxu0 0.0
  %180 = vmatprep.subr.mxu0 0.0
  %181 = vmatpush1.msra.mxu0 0.0
  %182 = vmatprep.mubr.f32.mxu0 0.0
  %183 = vmatmul.mubr.f32.gmra.mrb[0].mxu0 %v112
  %v184 = vpop.f32.mrb[0].mxu0
  %v185 = vadd.f32 0.0, %v184
  %v186 = vpop.f32.mrb[0].mxu0
  %187 = vdwg.mxu0
  %v188 = vsub.f32 %v105, %v185
  %v189 = vand.u32 2147483647, %v188
  %v191 = vrot.slane %v189, 2
  %v193 = vadd.f32 %v189, %v191
  %v194 = vrot.slane %v189, 4
  %v196 = vadd.f32 %v193, %v194
  %v197 = vrot.slane %v189, 6
  %v199 = vadd.f32 %v196, %v197
  %v200 = vmul.f32 %v105, 0.5
  %v202 = vrot.slane %v200, 4
  %v204 = vsub.f32 %v105, %v202
  %v205 = vadd.f32 %v105, %v202
  %v206 = vmul.f32 %v185, 0.5
  %v208 = vrot.slane %v206, 4
  %v210 = vsub.f32 %v185, %v208
  %v211 = vadd.f32 %v185, %v208
  %v212 = vsub.f32 %v205, %v204
  %v214 = vrot.slane %v212, 2
  %v216 = vmul.f32 %v212, %v214
  %v217 = vsub.f32 %v211, %v210
  %v219 = vrot.slane %v217, 2
  %v221 = vmul.f32 %v217, %v219
  %v222 = vmin.f32 %v205, %v211
  %v223 = vmax.f32 %v204, %v210
  %v224 = vsub.f32 %v222, %v223
  %v225 = vmax.f32 %v224, 0.0
  %v227 = vrot.slane %v225, 2
  %v229 = vmul.f32 %v225, %v227
  %v230 = vadd.f32 %v216, %v221
  %v231 = vsub.f32 %v230, %v229
  %v232 = vrcp.pop %v231
  %v233 = vmul.f32 %v229, %v232
  %v234 = vmax.f32 %v205, %v211
  %v235 = vmin.f32 %v204, %v210
  %v236 = vsub.f32 %v234, %v235
  %v237 = vmax.f32 %v236, 0.0
  %v239 = vrot.slane %v237, 2
  %v241 = vmul.f32 %v237, %v239
  %v242 = vsub.f32 %v241, %v231
  %v243 = vrcp.pop %v241
  %v244 = vmul.f32 %v242, %v243
  %v245 = vsub.f32 %v233, %v244
  %v246 = vld [vmem:[%s6] sm:$0xff]
  %v247 = vld [vmem:[%s6 + $0x8] sm:$0xff]
  %v248 = vld [vmem:[%s6 + $0x10] sm:$0xff]
  %v249 = vld [vmem:[%s6 + $0x18] sm:$0xff]
  %v250 = vld [vmem:[%s6 + $0x20] sm:$0xff]
  %v251 = vld [vmem:[%s6 + $0x28] sm:$0xff]
  %v252 = vld [vmem:[%s6 + $0x30] sm:$0xff]
  %v253 = vld [vmem:[%s6 + $0x38] sm:$0xff]
  %v254 = vld [vmem:[%s6 + $0x40] sm:$0xff]
  %v255 = vld [vmem:[%s6 + $0x48] sm:$0xff]
  %v256 = vld [vmem:[%s6 + $0x50] sm:$0xff]
  %v257 = vld [vmem:[%s6 + $0x58] sm:$0xff]
  %v258 = vld [vmem:[%s6 + $0x60] sm:$0xff]
  %v259 = vld [vmem:[%s6 + $0x68] sm:$0xff]
  %v260 = vld [vmem:[%s6 + $0x70] sm:$0xff]
  %v261 = vld [vmem:[%s6 + $0x78] sm:$0xff]
  %v262 = vld [vmem:[%s6 + $0x80] sm:$0xff]
  %v263 = vld [vmem:[%s6 + $0x88] sm:$0xff]
  %v264 = vld [vmem:[%s6 + $0x90] sm:$0xff]
  %v265 = vld [vmem:[%s6 + $0x98] sm:$0xff]
  %v266 = vld [vmem:[%s6 + $0xa0] sm:$0xff]
  %v267 = vld [vmem:[%s6 + $0xa8] sm:$0xff]
  %v268 = vld [vmem:[%s6 + $0xb0] sm:$0xff]
  %v269 = vld [vmem:[%s6 + $0xb8] sm:$0xff]
  %v270 = vld [vmem:[%s6 + $0xc0] sm:$0xff]
  %v271 = vld [vmem:[%s6 + $0xc8] sm:$0xff]
  %v272 = vld [vmem:[%s6 + $0xd0] sm:$0xff]
  %v273 = vld [vmem:[%s6 + $0xd8] sm:$0xff]
  %v274 = vld [vmem:[%s6 + $0xe0] sm:$0xff]
  %v275 = vld [vmem:[%s6 + $0xe8] sm:$0xff]
  %v276 = vld [vmem:[%s6 + $0xf0] sm:$0xff]
  %v277 = vld [vmem:[%s6 + $0xf8] sm:$0xff]
  %v278 = vld [vmem:[%s6 + $0x100] sm:$0xff]
  %v279 = vld [vmem:[%s6 + $0x108] sm:$0xff]
  %v280 = vld [vmem:[%s6 + $0x110] sm:$0xff]
  %v281 = vld [vmem:[%s6 + $0x118] sm:$0xff]
  %v282 = vld [vmem:[%s6 + $0x120] sm:$0xff]
  %v283 = vld [vmem:[%s6 + $0x128] sm:$0xff]
  %v284 = vld [vmem:[%s6 + $0x130] sm:$0xff]
  %v285 = vld [vmem:[%s6 + $0x138] sm:$0xff]
  %v286 = vld [vmem:[%s6 + $0x140] sm:$0xff]
  %v287 = vld [vmem:[%s6 + $0x148] sm:$0xff]
  %v288 = vld [vmem:[%s6 + $0x150] sm:$0xff]
  %v289 = vld [vmem:[%s6 + $0x158] sm:$0xff]
  %v290 = vld [vmem:[%s6 + $0x160] sm:$0xff]
  %v291 = vld [vmem:[%s6 + $0x168] sm:$0xff]
  %v292 = vld [vmem:[%s6 + $0x170] sm:$0xff]
  %v293 = vld [vmem:[%s6 + $0x178] sm:$0xff]
  %v294 = vld [vmem:[%s6 + $0x180] sm:$0xff]
  %v295 = vld [vmem:[%s6 + $0x188] sm:$0xff]
  %v296 = vld [vmem:[%s6 + $0x190] sm:$0xff]
  %v297 = vld [vmem:[%s6 + $0x198] sm:$0xff]
  %v298 = vld [vmem:[%s6 + $0x1a0] sm:$0xff]
  %v299 = vld [vmem:[%s6 + $0x1a8] sm:$0xff]
  %v300 = vld [vmem:[%s6 + $0x1b0] sm:$0xff]
  %v301 = vld [vmem:[%s6 + $0x1b8] sm:$0xff]
  %vm302 = vcmask 261120
  %v304 = vsel %vm302, %v199, 0
  %306 = vmatprep.subr.mxu0 %v247
  %307 = vmatpush1.msra.mxu0 %v246
  %308 = vmatprep.subr.mxu0 %v261
  %309 = vmatpush1.msra.mxu0 %v260
  %310 = vmatprep.subr.mxu0 %v275
  %311 = vmatpush1.msra.mxu0 %v274
  %312 = vmatprep.subr.mxu0 %v289
  %313 = vmatpush1.msra.mxu0 %v288
  %314 = vmatprep.subr.mxu0 0.0
  %315 = vmatpush1.msra.mxu0 0.0
  %316 = vmatprep.subr.mxu0 0.0
  %317 = vmatpush1.msra.mxu0 0.0
  %318 = vmatprep.subr.mxu0 0.0
  %319 = vmatpush1.msra.mxu0 0.0
  %320 = vmatprep.subr.mxu0 0.0
  %321 = vmatpush1.msra.mxu0 0.0
  %322 = vmatprep.subr.mxu0 0.0
  %323 = vmatpush1.msra.mxu0 0.0
  %324 = vmatprep.subr.mxu0 0.0
  %325 = vmatpush1.msra.mxu0 0.0
  %326 = vmatprep.subr.mxu0 0.0
  %327 = vmatpush1.msra.mxu0 0.0
  %328 = vmatprep.subr.mxu0 0.0
  %329 = vmatpush1.msra.mxu0 0.0
  %330 = vmatprep.subr.mxu0 0.0
  %331 = vmatpush1.msra.mxu0 0.0
  %332 = vmatprep.subr.mxu0 0.0
  %333 = vmatpush1.msra.mxu0 0.0
  %334 = vmatprep.subr.mxu0 0.0
  %335 = vmatpush1.msra.mxu0 0.0
  %336 = vmatprep.subr.mxu0 0.0
  %337 = vmatpush1.msra.mxu0 0.0
  %338 = vmatprep.subr.mxu0 0.0
  %339 = vmatpush1.msra.mxu0 0.0
  %340 = vmatprep.subr.mxu0 0.0
  %341 = vmatpush1.msra.mxu0 0.0
  %342 = vmatprep.subr.mxu0 0.0
  %343 = vmatpush1.msra.mxu0 0.0
  %344 = vmatprep.subr.mxu0 0.0
  %345 = vmatpush1.msra.mxu0 0.0
  %346 = vmatprep.subr.mxu0 0.0
  %347 = vmatpush1.msra.mxu0 0.0
  %348 = vmatprep.subr.mxu0 0.0
  %349 = vmatpush1.msra.mxu0 0.0
  %350 = vmatprep.subr.mxu0 0.0
  %351 = vmatpush1.msra.mxu0 0.0
  %352 = vmatprep.subr.mxu0 0.0
  %353 = vmatpush1.msra.mxu0 0.0
  %354 = vmatprep.subr.mxu0 0.0
  %355 = vmatpush1.msra.mxu0 0.0
  %356 = vmatprep.subr.mxu0 0.0
  %357 = vmatpush1.msra.mxu0 0.0
  %358 = vmatprep.subr.mxu0 0.0
  %359 = vmatpush1.msra.mxu0 0.0
  %360 = vmatprep.subr.mxu0 0.0
  %361 = vmatpush1.msra.mxu0 0.0
  %362 = vmatprep.subr.mxu0 0.0
  %363 = vmatpush1.msra.mxu0 0.0
  %364 = vmatprep.subr.mxu0 0.0
  %365 = vmatpush1.msra.mxu0 0.0
  %366 = vmatprep.subr.mxu0 0.0
  %367 = vmatpush1.msra.mxu0 0.0
  %368 = vmatprep.subr.mxu0 0.0
  %369 = vmatpush1.msra.mxu0 0.0
  %370 = vmatprep.mubr.f32.mxu0 0.0
  %371 = vmatmul.mubr.f32.gmra.mrb[0].mxu0 %v304
  %v372 = vpop.f32.mrb[0].mxu0
  %v373 = vadd.f32 0.0, %v372
  %v374 = vpop.f32.mrb[0].mxu0
  %v375 = vadd.f32 0.0, %v374
  %376 = vdwg.mxu0
  %377 = vmatprep.subr.mxu0 %v249
  %378 = vmatpush1.msra.mxu0 %v248
  %379 = vmatprep.subr.mxu0 %v263
  %380 = vmatpush1.msra.mxu0 %v262
  %381 = vmatprep.subr.mxu0 %v277
  %382 = vmatpush1.msra.mxu0 %v276
  %383 = vmatprep.subr.mxu0 %v291
  %384 = vmatpush1.msra.mxu0 %v290
  %385 = vmatprep.subr.mxu0 0.0
  %386 = vmatpush1.msra.mxu0 0.0
  %387 = vmatprep.subr.mxu0 0.0
  %388 = vmatpush1.msra.mxu0 0.0
  %389 = vmatprep.subr.mxu0 0.0
  %390 = vmatpush1.msra.mxu0 0.0
  %391 = vmatprep.subr.mxu0 0.0
  %392 = vmatpush1.msra.mxu0 0.0
  %393 = vmatprep.subr.mxu0 0.0
  %394 = vmatpush1.msra.mxu0 0.0
  %395 = vmatprep.subr.mxu0 0.0
  %396 = vmatpush1.msra.mxu0 0.0
  %397 = vmatprep.subr.mxu0 0.0
  %398 = vmatpush1.msra.mxu0 0.0
  %399 = vmatprep.subr.mxu0 0.0
  %400 = vmatpush1.msra.mxu0 0.0
  %401 = vmatprep.subr.mxu0 0.0
  %402 = vmatpush1.msra.mxu0 0.0
  %403 = vmatprep.subr.mxu0 0.0
  %404 = vmatpush1.msra.mxu0 0.0
  %405 = vmatprep.subr.mxu0 0.0
  %406 = vmatpush1.msra.mxu0 0.0
  %407 = vmatprep.subr.mxu0 0.0
  %408 = vmatpush1.msra.mxu0 0.0
  %409 = vmatprep.subr.mxu0 0.0
  %410 = vmatpush1.msra.mxu0 0.0
  %411 = vmatprep.subr.mxu0 0.0
  %412 = vmatpush1.msra.mxu0 0.0
  %413 = vmatprep.subr.mxu0 0.0
  %414 = vmatpush1.msra.mxu0 0.0
  %415 = vmatprep.subr.mxu0 0.0
  %416 = vmatpush1.msra.mxu0 0.0
  %417 = vmatprep.subr.mxu0 0.0
  %418 = vmatpush1.msra.mxu0 0.0
  %419 = vmatprep.subr.mxu0 0.0
  %420 = vmatpush1.msra.mxu0 0.0
  %421 = vmatprep.subr.mxu0 0.0
  %422 = vmatpush1.msra.mxu0 0.0
  %423 = vmatprep.subr.mxu0 0.0
  %424 = vmatpush1.msra.mxu0 0.0
  %425 = vmatprep.subr.mxu0 0.0
  %426 = vmatpush1.msra.mxu0 0.0
  %427 = vmatprep.subr.mxu0 0.0
  %428 = vmatpush1.msra.mxu0 0.0
  %429 = vmatprep.subr.mxu0 0.0
  %430 = vmatpush1.msra.mxu0 0.0
  %431 = vmatprep.subr.mxu0 0.0
  %432 = vmatpush1.msra.mxu0 0.0
  %433 = vmatprep.subr.mxu0 0.0
  %434 = vmatpush1.msra.mxu0 0.0
  %435 = vmatprep.subr.mxu0 0.0
  %436 = vmatpush1.msra.mxu0 0.0
  %437 = vmatprep.subr.mxu0 0.0
  %438 = vmatpush1.msra.mxu0 0.0
  %439 = vmatprep.subr.mxu0 0.0
  %440 = vmatpush1.msra.mxu0 0.0
  %441 = vmatprep.mubr.f32.mxu0 0.0
  %442 = vmatmul.mubr.f32.gmra.mrb[0].mxu0 %v304
  %v443 = vpop.f32.mrb[0].mxu0
  %v444 = vadd.f32 0.0, %v443
  %v445 = vpop.f32.mrb[0].mxu0
  %v446 = vadd.f32 0.0, %v445
  %447 = vdwg.mxu0
  %448 = vmatprep.subr.mxu0 %v251
  %449 = vmatpush1.msra.mxu0 %v250
  %450 = vmatprep.subr.mxu0 %v265
  %451 = vmatpush1.msra.mxu0 %v264
  %452 = vmatprep.subr.mxu0 %v279
  %453 = vmatpush1.msra.mxu0 %v278
  %454 = vmatprep.subr.mxu0 %v293
  %455 = vmatpush1.msra.mxu0 %v292
  %456 = vmatprep.subr.mxu0 0.0
  %457 = vmatpush1.msra.mxu0 0.0
  %458 = vmatprep.subr.mxu0 0.0
  %459 = vmatpush1.msra.mxu0 0.0
  %460 = vmatprep.subr.mxu0 0.0
  %461 = vmatpush1.msra.mxu0 0.0
  %462 = vmatprep.subr.mxu0 0.0
  %463 = vmatpush1.msra.mxu0 0.0
  %464 = vmatprep.subr.mxu0 0.0
  %465 = vmatpush1.msra.mxu0 0.0
  %466 = vmatprep.subr.mxu0 0.0
  %467 = vmatpush1.msra.mxu0 0.0
  %468 = vmatprep.subr.mxu0 0.0
  %469 = vmatpush1.msra.mxu0 0.0
  %470 = vmatprep.subr.mxu0 0.0
  %471 = vmatpush1.msra.mxu0 0.0
  %472 = vmatprep.subr.mxu0 0.0
  %473 = vmatpush1.msra.mxu0 0.0
  %474 = vmatprep.subr.mxu0 0.0
  %475 = vmatpush1.msra.mxu0 0.0
  %476 = vmatprep.subr.mxu0 0.0
  %477 = vmatpush1.msra.mxu0 0.0
  %478 = vmatprep.subr.mxu0 0.0
  %479 = vmatpush1.msra.mxu0 0.0
  %480 = vmatprep.subr.mxu0 0.0
  %481 = vmatpush1.msra.mxu0 0.0
  %482 = vmatprep.subr.mxu0 0.0
  %483 = vmatpush1.msra.mxu0 0.0
  %484 = vmatprep.subr.mxu0 0.0
  %485 = vmatpush1.msra.mxu0 0.0
  %486 = vmatprep.subr.mxu0 0.0
  %487 = vmatpush1.msra.mxu0 0.0
  %488 = vmatprep.subr.mxu0 0.0
  %489 = vmatpush1.msra.mxu0 0.0
  %490 = vmatprep.subr.mxu0 0.0
  %491 = vmatpush1.msra.mxu0 0.0
  %492 = vmatprep.subr.mxu0 0.0
  %493 = vmatpush1.msra.mxu0 0.0
  %494 = vmatprep.subr.mxu0 0.0
  %495 = vmatpush1.msra.mxu0 0.0
  %496 = vmatprep.subr.mxu0 0.0
  %497 = vmatpush1.msra.mxu0 0.0
  %498 = vmatprep.subr.mxu0 0.0
  %499 = vmatpush1.msra.mxu0 0.0
  %500 = vmatprep.subr.mxu0 0.0
  %501 = vmatpush1.msra.mxu0 0.0
  %502 = vmatprep.subr.mxu0 0.0
  %503 = vmatpush1.msra.mxu0 0.0
  %504 = vmatprep.subr.mxu0 0.0
  %505 = vmatpush1.msra.mxu0 0.0
  %506 = vmatprep.subr.mxu0 0.0
  %507 = vmatpush1.msra.mxu0 0.0
  %508 = vmatprep.subr.mxu0 0.0
  %509 = vmatpush1.msra.mxu0 0.0
  %510 = vmatprep.subr.mxu0 0.0
  %511 = vmatpush1.msra.mxu0 0.0
  %512 = vmatprep.mubr.f32.mxu0 0.0
  %513 = vmatmul.mubr.f32.gmra.mrb[0].mxu0 %v304
  %v514 = vpop.f32.mrb[0].mxu0
  %v515 = vadd.f32 0.0, %v514
  %v516 = vpop.f32.mrb[0].mxu0
  %v517 = vadd.f32 0.0, %v516
  %518 = vdwg.mxu0
  %519 = vmatprep.subr.mxu0 %v253
  %520 = vmatpush1.msra.mxu0 %v252
  %521 = vmatprep.subr.mxu0 %v267
  %522 = vmatpush1.msra.mxu0 %v266
  %523 = vmatprep.subr.mxu0 %v281
  %524 = vmatpush1.msra.mxu0 %v280
  %525 = vmatprep.subr.mxu0 %v295
  %526 = vmatpush1.msra.mxu0 %v294
  %527 = vmatprep.subr.mxu0 0.0
  %528 = vmatpush1.msra.mxu0 0.0
  %529 = vmatprep.subr.mxu0 0.0
  %530 = vmatpush1.msra.mxu0 0.0
  %531 = vmatprep.subr.mxu0 0.0
  %532 = vmatpush1.msra.mxu0 0.0
  %533 = vmatprep.subr.mxu0 0.0
  %534 = vmatpush1.msra.mxu0 0.0
  %535 = vmatprep.subr.mxu0 0.0
  %536 = vmatpush1.msra.mxu0 0.0
  %537 = vmatprep.subr.mxu0 0.0
  %538 = vmatpush1.msra.mxu0 0.0
  %539 = vmatprep.subr.mxu0 0.0
  %540 = vmatpush1.msra.mxu0 0.0
  %541 = vmatprep.subr.mxu0 0.0
  %542 = vmatpush1.msra.mxu0 0.0
  %543 = vmatprep.subr.mxu0 0.0
  %544 = vmatpush1.msra.mxu0 0.0
  %545 = vmatprep.subr.mxu0 0.0
  %546 = vmatpush1.msra.mxu0 0.0
  %547 = vmatprep.subr.mxu0 0.0
  %548 = vmatpush1.msra.mxu0 0.0
  %549 = vmatprep.subr.mxu0 0.0
  %550 = vmatpush1.msra.mxu0 0.0
  %551 = vmatprep.subr.mxu0 0.0
  %552 = vmatpush1.msra.mxu0 0.0
  %553 = vmatprep.subr.mxu0 0.0
  %554 = vmatpush1.msra.mxu0 0.0
  %555 = vmatprep.subr.mxu0 0.0
  %556 = vmatpush1.msra.mxu0 0.0
  %557 = vmatprep.subr.mxu0 0.0
  %558 = vmatpush1.msra.mxu0 0.0
  %559 = vmatprep.subr.mxu0 0.0
  %560 = vmatpush1.msra.mxu0 0.0
  %561 = vmatprep.subr.mxu0 0.0
  %562 = vmatpush1.msra.mxu0 0.0
  %563 = vmatprep.subr.mxu0 0.0
  %564 = vmatpush1.msra.mxu0 0.0
  %565 = vmatprep.subr.mxu0 0.0
  %566 = vmatpush1.msra.mxu0 0.0
  %567 = vmatprep.subr.mxu0 0.0
  %568 = vmatpush1.msra.mxu0 0.0
  %569 = vmatprep.subr.mxu0 0.0
  %570 = vmatpush1.msra.mxu0 0.0
  %571 = vmatprep.subr.mxu0 0.0
  %572 = vmatpush1.msra.mxu0 0.0
  %573 = vmatprep.subr.mxu0 0.0
  %574 = vmatpush1.msra.mxu0 0.0
  %575 = vmatprep.subr.mxu0 0.0
  %576 = vmatpush1.msra.mxu0 0.0
  %577 = vmatprep.subr.mxu0 0.0
  %578 = vmatpush1.msra.mxu0 0.0
  %579 = vmatprep.subr.mxu0 0.0
  %580 = vmatpush1.msra.mxu0 0.0
  %581 = vmatprep.subr.mxu0 0.0
  %582 = vmatpush1.msra.mxu0 0.0
  %583 = vmatprep.mubr.f32.mxu0 0.0
  %584 = vmatmul.mubr.f32.gmra.mrb[0].mxu0 %v304
  %v585 = vpop.f32.mrb[0].mxu0
  %v586 = vadd.f32 0.0, %v585
  %v587 = vpop.f32.mrb[0].mxu0
  %v588 = vadd.f32 0.0, %v587
  %589 = vdwg.mxu0
  %590 = vmatprep.subr.mxu0 %v255
  %591 = vmatpush1.msra.mxu0 %v254
  %592 = vmatprep.subr.mxu0 %v269
  %593 = vmatpush1.msra.mxu0 %v268
  %594 = vmatprep.subr.mxu0 %v283
  %595 = vmatpush1.msra.mxu0 %v282
  %596 = vmatprep.subr.mxu0 %v297
  %597 = vmatpush1.msra.mxu0 %v296
  %598 = vmatprep.subr.mxu0 0.0
  %599 = vmatpush1.msra.mxu0 0.0
  %600 = vmatprep.subr.mxu0 0.0
  %601 = vmatpush1.msra.mxu0 0.0
  %602 = vmatprep.subr.mxu0 0.0
  %603 = vmatpush1.msra.mxu0 0.0
  %604 = vmatprep.subr.mxu0 0.0
  %605 = vmatpush1.msra.mxu0 0.0
  %606 = vmatprep.subr.mxu0 0.0
  %607 = vmatpush1.msra.mxu0 0.0
  %608 = vmatprep.subr.mxu0 0.0
  %609 = vmatpush1.msra.mxu0 0.0
  %610 = vmatprep.subr.mxu0 0.0
  %611 = vmatpush1.msra.mxu0 0.0
  %612 = vmatprep.subr.mxu0 0.0
  %613 = vmatpush1.msra.mxu0 0.0
  %614 = vmatprep.subr.mxu0 0.0
  %615 = vmatpush1.msra.mxu0 0.0
  %616 = vmatprep.subr.mxu0 0.0
  %617 = vmatpush1.msra.mxu0 0.0
  %618 = vmatprep.subr.mxu0 0.0
  %619 = vmatpush1.msra.mxu0 0.0
  %620 = vmatprep.subr.mxu0 0.0
  %621 = vmatpush1.msra.mxu0 0.0
  %622 = vmatprep.subr.mxu0 0.0
  %623 = vmatpush1.msra.mxu0 0.0
  %624 = vmatprep.subr.mxu0 0.0
  %625 = vmatpush1.msra.mxu0 0.0
  %626 = vmatprep.subr.mxu0 0.0
  %627 = vmatpush1.msra.mxu0 0.0
  %628 = vmatprep.subr.mxu0 0.0
  %629 = vmatpush1.msra.mxu0 0.0
  %630 = vmatprep.subr.mxu0 0.0
  %631 = vmatpush1.msra.mxu0 0.0
  %632 = vmatprep.subr.mxu0 0.0
  %633 = vmatpush1.msra.mxu0 0.0
  %634 = vmatprep.subr.mxu0 0.0
  %635 = vmatpush1.msra.mxu0 0.0
  %636 = vmatprep.subr.mxu0 0.0
  %637 = vmatpush1.msra.mxu0 0.0
  %638 = vmatprep.subr.mxu0 0.0
  %639 = vmatpush1.msra.mxu0 0.0
  %640 = vmatprep.subr.mxu0 0.0
  %641 = vmatpush1.msra.mxu0 0.0
  %642 = vmatprep.subr.mxu0 0.0
  %643 = vmatpush1.msra.mxu0 0.0
  %644 = vmatprep.subr.mxu0 0.0
  %645 = vmatpush1.msra.mxu0 0.0
  %646 = vmatprep.subr.mxu0 0.0
  %647 = vmatpush1.msra.mxu0 0.0
  %648 = vmatprep.subr.mxu0 0.0
  %649 = vmatpush1.msra.mxu0 0.0
  %650 = vmatprep.subr.mxu0 0.0
  %651 = vmatpush1.msra.mxu0 0.0
  %652 = vmatprep.subr.mxu0 0.0
  %653 = vmatpush1.msra.mxu0 0.0
  %654 = vmatprep.mubr.f32.mxu0 0.0
  %655 = vmatmul.mubr.f32.gmra.mrb[0].mxu0 %v304
  %v656 = vpop.f32.mrb[0].mxu0
  %v657 = vadd.f32 0.0, %v656
  %v658 = vpop.f32.mrb[0].mxu0
  %v659 = vadd.f32 0.0, %v658
  %660 = vdwg.mxu0
  %661 = vmatprep.subr.mxu0 %v257
  %662 = vmatpush1.msra.mxu0 %v256
  %663 = vmatprep.subr.mxu0 %v271
  %664 = vmatpush1.msra.mxu0 %v270
  %665 = vmatprep.subr.mxu0 %v285
  %666 = vmatpush1.msra.mxu0 %v284
  %667 = vmatprep.subr.mxu0 %v299
  %668 = vmatpush1.msra.mxu0 %v298
  %669 = vmatprep.subr.mxu0 0.0
  %670 = vmatpush1.msra.mxu0 0.0
  %671 = vmatprep.subr.mxu0 0.0
  %672 = vmatpush1.msra.mxu0 0.0
  %673 = vmatprep.subr.mxu0 0.0
  %674 = vmatpush1.msra.mxu0 0.0
  %675 = vmatprep.subr.mxu0 0.0
  %676 = vmatpush1.msra.mxu0 0.0
  %677 = vmatprep.subr.mxu0 0.0
  %678 = vmatpush1.msra.mxu0 0.0
  %679 = vmatprep.subr.mxu0 0.0
  %680 = vmatpush1.msra.mxu0 0.0
  %681 = vmatprep.subr.mxu0 0.0
  %682 = vmatpush1.msra.mxu0 0.0
  %683 = vmatprep.subr.mxu0 0.0
  %684 = vmatpush1.msra.mxu0 0.0
  %685 = vmatprep.subr.mxu0 0.0
  %686 = vmatpush1.msra.mxu0 0.0
  %687 = vmatprep.subr.mxu0 0.0
  %688 = vmatpush1.msra.mxu0 0.0
  %689 = vmatprep.subr.mxu0 0.0
  %690 = vmatpush1.msra.mxu0 0.0
  %691 = vmatprep.subr.mxu0 0.0
  %692 = vmatpush1.msra.mxu0 0.0
  %693 = vmatprep.subr.mxu0 0.0
  %694 = vmatpush1.msra.mxu0 0.0
  %695 = vmatprep.subr.mxu0 0.0
  %696 = vmatpush1.msra.mxu0 0.0
  %697 = vmatprep.subr.mxu0 0.0
  %698 = vmatpush1.msra.mxu0 0.0
  %699 = vmatprep.subr.mxu0 0.0
  %700 = vmatpush1.msra.mxu0 0.0
  %701 = vmatprep.subr.mxu0 0.0
  %702 = vmatpush1.msra.mxu0 0.0
  %703 = vmatprep.subr.mxu0 0.0
  %704 = vmatpush1.msra.mxu0 0.0
  %705 = vmatprep.subr.mxu0 0.0
  %706 = vmatpush1.msra.mxu0 0.0
  %707 = vmatprep.subr.mxu0 0.0
  %708 = vmatpush1.msra.mxu0 0.0
  %709 = vmatprep.subr.mxu0 0.0
  %710 = vmatpush1.msra.mxu0 0.0
  %711 = vmatprep.subr.mxu0 0.0
  %712 = vmatpush1.msra.mxu0 0.0
  %713 = vmatprep.subr.mxu0 0.0
  %714 = vmatpush1.msra.mxu0 0.0
  %715 = vmatprep.subr.mxu0 0.0
  %716 = vmatpush1.msra.mxu0 0.0
  %717 = vmatprep.subr.mxu0 0.0
  %718 = vmatpush1.msra.mxu0 0.0
  %719 = vmatprep.subr.mxu0 0.0
  %720 = vmatpush1.msra.mxu0 0.0
  %721 = vmatprep.subr.mxu0 0.0
  %722 = vmatpush1.msra.mxu0 0.0
  %723 = vmatprep.subr.mxu0 0.0
  %724 = vmatpush1.msra.mxu0 0.0
  %725 = vmatprep.mubr.f32.mxu0 0.0
  %726 = vmatmul.mubr.f32.gmra.mrb[0].mxu0 %v304
  %v727 = vpop.f32.mrb[0].mxu0
  %v728 = vadd.f32 0.0, %v727
  %v729 = vpop.f32.mrb[0].mxu0
  %v730 = vadd.f32 0.0, %v729
  %731 = vdwg.mxu0
  %732 = vmatprep.subr.mxu0 %v259
  %733 = vmatpush1.msra.mxu0 %v258
  %734 = vmatprep.subr.mxu0 %v273
  %735 = vmatpush1.msra.mxu0 %v272
  %736 = vmatprep.subr.mxu0 %v287
  %737 = vmatpush1.msra.mxu0 %v286
  %738 = vmatprep.subr.mxu0 %v301
  %739 = vmatpush1.msra.mxu0 %v300
  %740 = vmatprep.subr.mxu0 0.0
  %741 = vmatpush1.msra.mxu0 0.0
  %742 = vmatprep.subr.mxu0 0.0
  %743 = vmatpush1.msra.mxu0 0.0
  %744 = vmatprep.subr.mxu0 0.0
  %745 = vmatpush1.msra.mxu0 0.0
  %746 = vmatprep.subr.mxu0 0.0
  %747 = vmatpush1.msra.mxu0 0.0
  %748 = vmatprep.subr.mxu0 0.0
  %749 = vmatpush1.msra.mxu0 0.0
  %750 = vmatprep.subr.mxu0 0.0
  %751 = vmatpush1.msra.mxu0 0.0
  %752 = vmatprep.subr.mxu0 0.0
  %753 = vmatpush1.msra.mxu0 0.0
  %754 = vmatprep.subr.mxu0 0.0
  %755 = vmatpush1.msra.mxu0 0.0
  %756 = vmatprep.subr.mxu0 0.0
  %757 = vmatpush1.msra.mxu0 0.0
  %758 = vmatprep.subr.mxu0 0.0
  %759 = vmatpush1.msra.mxu0 0.0
  %760 = vmatprep.subr.mxu0 0.0
  %761 = vmatpush1.msra.mxu0 0.0
  %762 = vmatprep.subr.mxu0 0.0
  %763 = vmatpush1.msra.mxu0 0.0
  %764 = vmatprep.subr.mxu0 0.0
  %765 = vmatpush1.msra.mxu0 0.0
  %766 = vmatprep.subr.mxu0 0.0
  %767 = vmatpush1.msra.mxu0 0.0
  %768 = vmatprep.subr.mxu0 0.0
  %769 = vmatpush1.msra.mxu0 0.0
  %770 = vmatprep.subr.mxu0 0.0
  %771 = vmatpush1.msra.mxu0 0.0
  %772 = vmatprep.subr.mxu0 0.0
  %773 = vmatpush1.msra.mxu0 0.0
  %774 = vmatprep.subr.mxu0 0.0
  %775 = vmatpush1.msra.mxu0 0.0
  %776 = vmatprep.subr.mxu0 0.0
  %777 = vmatpush1.msra.mxu0 0.0
  %778 = vmatprep.subr.mxu0 0.0
  %779 = vmatpush1.msra.mxu0 0.0
  %780 = vmatprep.subr.mxu0 0.0
  %781 = vmatpush1.msra.mxu0 0.0
  %782 = vmatprep.subr.mxu0 0.0
  %783 = vmatpush1.msra.mxu0 0.0
  %784 = vmatprep.subr.mxu0 0.0
  %785 = vmatpush1.msra.mxu0 0.0
  %786 = vmatprep.subr.mxu0 0.0
  %787 = vmatpush1.msra.mxu0 0.0
  %788 = vmatprep.subr.mxu0 0.0
  %789 = vmatpush1.msra.mxu0 0.0
  %790 = vmatprep.subr.mxu0 0.0
  %791 = vmatpush1.msra.mxu0 0.0
  %792 = vmatprep.subr.mxu0 0.0
  %793 = vmatpush1.msra.mxu0 0.0
  %794 = vmatprep.subr.mxu0 0.0
  %795 = vmatpush1.msra.mxu0 0.0
  %796 = vmatprep.mubr.f32.mxu0 0.0
  %797 = vmatmul.mubr.f32.gmra.mrb[0].mxu0 %v304
  %v798 = vpop.f32.mrb[0].mxu0
  %v799 = vadd.f32 0.0, %v798
  %v800 = vpop.f32.mrb[0].mxu0
  %v801 = vadd.f32 0.0, %v800
  %802 = vdwg.mxu0
  %v804 = vsel %vm302, %v245, 0
  %806 = vmatprep.subr.mxu0 %v247
  %807 = vmatpush1.msra.mxu0 %v246
  %808 = vmatprep.subr.mxu0 %v261
  %809 = vmatpush1.msra.mxu0 %v260
  %810 = vmatprep.subr.mxu0 %v275
  %811 = vmatpush1.msra.mxu0 %v274
  %812 = vmatprep.subr.mxu0 %v289
  %813 = vmatpush1.msra.mxu0 %v288
  %814 = vmatprep.subr.mxu0 0.0
  %815 = vmatpush1.msra.mxu0 0.0
  %816 = vmatprep.subr.mxu0 0.0
  %817 = vmatpush1.msra.mxu0 0.0
  %818 = vmatprep.subr.mxu0 0.0
  %819 = vmatpush1.msra.mxu0 0.0
  %820 = vmatprep.subr.mxu0 0.0
  %821 = vmatpush1.msra.mxu0 0.0
  %822 = vmatprep.subr.mxu0 0.0
  %823 = vmatpush1.msra.mxu0 0.0
  %824 = vmatprep.subr.mxu0 0.0
  %825 = vmatpush1.msra.mxu0 0.0
  %826 = vmatprep.subr.mxu0 0.0
  %827 = vmatpush1.msra.mxu0 0.0
  %828 = vmatprep.subr.mxu0 0.0
  %829 = vmatpush1.msra.mxu0 0.0
  %830 = vmatprep.subr.mxu0 0.0
  %831 = vmatpush1.msra.mxu0 0.0
  %832 = vmatprep.subr.mxu0 0.0
  %833 = vmatpush1.msra.mxu0 0.0
  %834 = vmatprep.subr.mxu0 0.0
  %835 = vmatpush1.msra.mxu0 0.0
  %836 = vmatprep.subr.mxu0 0.0
  %837 = vmatpush1.msra.mxu0 0.0
  %838 = vmatprep.subr.mxu0 0.0
  %839 = vmatpush1.msra.mxu0 0.0
  %840 = vmatprep.subr.mxu0 0.0
  %841 = vmatpush1.msra.mxu0 0.0
  %842 = vmatprep.subr.mxu0 0.0
  %843 = vmatpush1.msra.mxu0 0.0
  %844 = vmatprep.subr.mxu0 0.0
  %845 = vmatpush1.msra.mxu0 0.0
  %846 = vmatprep.subr.mxu0 0.0
  %847 = vmatpush1.msra.mxu0 0.0
  %848 = vmatprep.subr.mxu0 0.0
  %849 = vmatpush1.msra.mxu0 0.0
  %850 = vmatprep.subr.mxu0 0.0
  %851 = vmatpush1.msra.mxu0 0.0
  %852 = vmatprep.subr.mxu0 0.0
  %853 = vmatpush1.msra.mxu0 0.0
  %854 = vmatprep.subr.mxu0 0.0
  %855 = vmatpush1.msra.mxu0 0.0
  %856 = vmatprep.subr.mxu0 0.0
  %857 = vmatpush1.msra.mxu0 0.0
  %858 = vmatprep.subr.mxu0 0.0
  %859 = vmatpush1.msra.mxu0 0.0
  %860 = vmatprep.subr.mxu0 0.0
  %861 = vmatpush1.msra.mxu0 0.0
  %862 = vmatprep.subr.mxu0 0.0
  %863 = vmatpush1.msra.mxu0 0.0
  %864 = vmatprep.subr.mxu0 0.0
  %865 = vmatpush1.msra.mxu0 0.0
  %866 = vmatprep.subr.mxu0 0.0
  %867 = vmatpush1.msra.mxu0 0.0
  %868 = vmatprep.subr.mxu0 0.0
  %869 = vmatpush1.msra.mxu0 0.0
  %870 = vmatprep.mubr.f32.mxu0 0.0
  %871 = vmatmul.mubr.f32.gmra.mrb[0].mxu0 %v804
  %v872 = vpop.f32.mrb[0].mxu0
  %v873 = vadd.f32 0.0, %v872
  %v874 = vpop.f32.mrb[0].mxu0
  %v875 = vadd.f32 0.0, %v874
  %876 = vdwg.mxu0
  %877 = vmatprep.subr.mxu0 %v249
  %878 = vmatpush1.msra.mxu0 %v248
  %879 = vmatprep.subr.mxu0 %v263
  %880 = vmatpush1.msra.mxu0 %v262
  %881 = vmatprep.subr.mxu0 %v277
  %882 = vmatpush1.msra.mxu0 %v276
  %883 = vmatprep.subr.mxu0 %v291
  %884 = vmatpush1.msra.mxu0 %v290
  %885 = vmatprep.subr.mxu0 0.0
  %886 = vmatpush1.msra.mxu0 0.0
  %887 = vmatprep.subr.mxu0 0.0
  %888 = vmatpush1.msra.mxu0 0.0
  %889 = vmatprep.subr.mxu0 0.0
  %890 = vmatpush1.msra.mxu0 0.0
  %891 = vmatprep.subr.mxu0 0.0
  %892 = vmatpush1.msra.mxu0 0.0
  %893 = vmatprep.subr.mxu0 0.0
  %894 = vmatpush1.msra.mxu0 0.0
  %895 = vmatprep.subr.mxu0 0.0
  %896 = vmatpush1.msra.mxu0 0.0
  %897 = vmatprep.subr.mxu0 0.0
  %898 = vmatpush1.msra.mxu0 0.0
  %899 = vmatprep.subr.mxu0 0.0
  %900 = vmatpush1.msra.mxu0 0.0
  %901 = vmatprep.subr.mxu0 0.0
  %902 = vmatpush1.msra.mxu0 0.0
  %903 = vmatprep.subr.mxu0 0.0
  %904 = vmatpush1.msra.mxu0 0.0
  %905 = vmatprep.subr.mxu0 0.0
  %906 = vmatpush1.msra.mxu0 0.0
  %907 = vmatprep.subr.mxu0 0.0
  %908 = vmatpush1.msra.mxu0 0.0
  %909 = vmatprep.subr.mxu0 0.0
  %910 = vmatpush1.msra.mxu0 0.0
  %911 = vmatprep.subr.mxu0 0.0
  %912 = vmatpush1.msra.mxu0 0.0
  %913 = vmatprep.subr.mxu0 0.0
  %914 = vmatpush1.msra.mxu0 0.0
  %915 = vmatprep.subr.mxu0 0.0
  %916 = vmatpush1.msra.mxu0 0.0
  %917 = vmatprep.subr.mxu0 0.0
  %918 = vmatpush1.msra.mxu0 0.0
  %919 = vmatprep.subr.mxu0 0.0
  %920 = vmatpush1.msra.mxu0 0.0
  %921 = vmatprep.subr.mxu0 0.0
  %922 = vmatpush1.msra.mxu0 0.0
  %923 = vmatprep.subr.mxu0 0.0
  %924 = vmatpush1.msra.mxu0 0.0
  %925 = vmatprep.subr.mxu0 0.0
  %926 = vmatpush1.msra.mxu0 0.0
  %927 = vmatprep.subr.mxu0 0.0
  %928 = vmatpush1.msra.mxu0 0.0
  %929 = vmatprep.subr.mxu0 0.0
  %930 = vmatpush1.msra.mxu0 0.0
  %931 = vmatprep.subr.mxu0 0.0
  %932 = vmatpush1.msra.mxu0 0.0
  %933 = vmatprep.subr.mxu0 0.0
  %934 = vmatpush1.msra.mxu0 0.0
  %935 = vmatprep.subr.mxu0 0.0
  %936 = vmatpush1.msra.mxu0 0.0
  %937 = vmatprep.subr.mxu0 0.0
  %938 = vmatpush1.msra.mxu0 0.0
  %939 = vmatprep.subr.mxu0 0.0
  %940 = vmatpush1.msra.mxu0 0.0
  %941 = vmatprep.mubr.f32.mxu0 0.0
  %942 = vmatmul.mubr.f32.gmra.mrb[0].mxu0 %v804
  %v943 = vpop.f32.mrb[0].mxu0
  %v944 = vadd.f32 0.0, %v943
  %v945 = vpop.f32.mrb[0].mxu0
  %v946 = vadd.f32 0.0, %v945
  %947 = vdwg.mxu0
  %948 = vmatprep.subr.mxu0 %v251
  %949 = vmatpush1.msra.mxu0 %v250
  %950 = vmatprep.subr.mxu0 %v265
  %951 = vmatpush1.msra.mxu0 %v264
  %952 = vmatprep.subr.mxu0 %v279
  %953 = vmatpush1.msra.mxu0 %v278
  %954 = vmatprep.subr.mxu0 %v293
  %955 = vmatpush1.msra.mxu0 %v292
  %956 = vmatprep.subr.mxu0 0.0
  %957 = vmatpush1.msra.mxu0 0.0
  %958 = vmatprep.subr.mxu0 0.0
  %959 = vmatpush1.msra.mxu0 0.0
  %960 = vmatprep.subr.mxu0 0.0
  %961 = vmatpush1.msra.mxu0 0.0
  %962 = vmatprep.subr.mxu0 0.0
  %963 = vmatpush1.msra.mxu0 0.0
  %964 = vmatprep.subr.mxu0 0.0
  %965 = vmatpush1.msra.mxu0 0.0
  %966 = vmatprep.subr.mxu0 0.0
  %967 = vmatpush1.msra.mxu0 0.0
  %968 = vmatprep.subr.mxu0 0.0
  %969 = vmatpush1.msra.mxu0 0.0
  %970 = vmatprep.subr.mxu0 0.0
  %971 = vmatpush1.msra.mxu0 0.0
  %972 = vmatprep.subr.mxu0 0.0
  %973 = vmatpush1.msra.mxu0 0.0
  %974 = vmatprep.subr.mxu0 0.0
  %975 = vmatpush1.msra.mxu0 0.0
  %976 = vmatprep.subr.mxu0 0.0
  %977 = vmatpush1.msra.mxu0 0.0
  %978 = vmatprep.subr.mxu0 0.0
  %979 = vmatpush1.msra.mxu0 0.0
  %980 = vmatprep.subr.mxu0 0.0
  %981 = vmatpush1.msra.mxu0 0.0
  %982 = vmatprep.subr.mxu0 0.0
  %983 = vmatpush1.msra.mxu0 0.0
  %984 = vmatprep.subr.mxu0 0.0
  %985 = vmatpush1.msra.mxu0 0.0
  %986 = vmatprep.subr.mxu0 0.0
  %987 = vmatpush1.msra.mxu0 0.0
  %988 = vmatprep.subr.mxu0 0.0
  %989 = vmatpush1.msra.mxu0 0.0
  %990 = vmatprep.subr.mxu0 0.0
  %991 = vmatpush1.msra.mxu0 0.0
  %992 = vmatprep.subr.mxu0 0.0
  %993 = vmatpush1.msra.mxu0 0.0
  %994 = vmatprep.subr.mxu0 0.0
  %995 = vmatpush1.msra.mxu0 0.0
  %996 = vmatprep.subr.mxu0 0.0
  %997 = vmatpush1.msra.mxu0 0.0
  %998 = vmatprep.subr.mxu0 0.0
  %999 = vmatpush1.msra.mxu0 0.0
  %1000 = vmatprep.subr.mxu0 0.0
  %1001 = vmatpush1.msra.mxu0 0.0
  %1002 = vmatprep.subr.mxu0 0.0
  %1003 = vmatpush1.msra.mxu0 0.0
  %1004 = vmatprep.subr.mxu0 0.0
  %1005 = vmatpush1.msra.mxu0 0.0
  %1006 = vmatprep.subr.mxu0 0.0
  %1007 = vmatpush1.msra.mxu0 0.0
  %1008 = vmatprep.subr.mxu0 0.0
  %1009 = vmatpush1.msra.mxu0 0.0
  %1010 = vmatprep.subr.mxu0 0.0
  %1011 = vmatpush1.msra.mxu0 0.0
  %1012 = vmatprep.mubr.f32.mxu0 0.0
  %1013 = vmatmul.mubr.f32.gmra.mrb[0].mxu0 %v804
  %v1014 = vpop.f32.mrb[0].mxu0
  %v1015 = vadd.f32 0.0, %v1014
  %v1016 = vpop.f32.mrb[0].mxu0
  %v1017 = vadd.f32 0.0, %v1016
  %1018 = vdwg.mxu0
  %1019 = vmatprep.subr.mxu0 %v253
  %1020 = vmatpush1.msra.mxu0 %v252
  %1021 = vmatprep.subr.mxu0 %v267
  %1022 = vmatpush1.msra.mxu0 %v266
  %1023 = vmatprep.subr.mxu0 %v281
  %1024 = vmatpush1.msra.mxu0 %v280
  %1025 = vmatprep.subr.mxu0 %v295
  %1026 = vmatpush1.msra.mxu0 %v294
  %1027 = vmatprep.subr.mxu0 0.0
  %1028 = vmatpush1.msra.mxu0 0.0
  %1029 = vmatprep.subr.mxu0 0.0
  %1030 = vmatpush1.msra.mxu0 0.0
  %1031 = vmatprep.subr.mxu0 0.0
  %1032 = vmatpush1.msra.mxu0 0.0
  %1033 = vmatprep.subr.mxu0 0.0
  %1034 = vmatpush1.msra.mxu0 0.0
  %1035 = vmatprep.subr.mxu0 0.0
  %1036 = vmatpush1.msra.mxu0 0.0
  %1037 = vmatprep.subr.mxu0 0.0
  %1038 = vmatpush1.msra.mxu0 0.0
  %1039 = vmatprep.subr.mxu0 0.0
  %1040 = vmatpush1.msra.mxu0 0.0
  %1041 = vmatprep.subr.mxu0 0.0
  %1042 = vmatpush1.msra.mxu0 0.0
  %1043 = vmatprep.subr.mxu0 0.0
  %1044 = vmatpush1.msra.mxu0 0.0
  %1045 = vmatprep.subr.mxu0 0.0
  %1046 = vmatpush1.msra.mxu0 0.0
  %1047 = vmatprep.subr.mxu0 0.0
  %1048 = vmatpush1.msra.mxu0 0.0
  %1049 = vmatprep.subr.mxu0 0.0
  %1050 = vmatpush1.msra.mxu0 0.0
  %1051 = vmatprep.subr.mxu0 0.0
  %1052 = vmatpush1.msra.mxu0 0.0
  %1053 = vmatprep.subr.mxu0 0.0
  %1054 = vmatpush1.msra.mxu0 0.0
  %1055 = vmatprep.subr.mxu0 0.0
  %1056 = vmatpush1.msra.mxu0 0.0
  %1057 = vmatprep.subr.mxu0 0.0
  %1058 = vmatpush1.msra.mxu0 0.0
  %1059 = vmatprep.subr.mxu0 0.0
  %1060 = vmatpush1.msra.mxu0 0.0
  %1061 = vmatprep.subr.mxu0 0.0
  %1062 = vmatpush1.msra.mxu0 0.0
  %1063 = vmatprep.subr.mxu0 0.0
  %1064 = vmatpush1.msra.mxu0 0.0
  %1065 = vmatprep.subr.mxu0 0.0
  %1066 = vmatpush1.msra.mxu0 0.0
  %1067 = vmatprep.subr.mxu0 0.0
  %1068 = vmatpush1.msra.mxu0 0.0
  %1069 = vmatprep.subr.mxu0 0.0
  %1070 = vmatpush1.msra.mxu0 0.0
  %1071 = vmatprep.subr.mxu0 0.0
  %1072 = vmatpush1.msra.mxu0 0.0
  %1073 = vmatprep.subr.mxu0 0.0
  %1074 = vmatpush1.msra.mxu0 0.0
  %1075 = vmatprep.subr.mxu0 0.0
  %1076 = vmatpush1.msra.mxu0 0.0
  %1077 = vmatprep.subr.mxu0 0.0
  %1078 = vmatpush1.msra.mxu0 0.0
  %1079 = vmatprep.subr.mxu0 0.0
  %1080 = vmatpush1.msra.mxu0 0.0
  %1081 = vmatprep.subr.mxu0 0.0
  %1082 = vmatpush1.msra.mxu0 0.0
  %1083 = vmatprep.mubr.f32.mxu0 0.0
  %1084 = vmatmul.mubr.f32.gmra.mrb[0].mxu0 %v804
  %v1085 = vpop.f32.mrb[0].mxu0
  %v1086 = vadd.f32 0.0, %v1085
  %v1087 = vpop.f32.mrb[0].mxu0
  %v1088 = vadd.f32 0.0, %v1087
  %1089 = vdwg.mxu0
  %1090 = vmatprep.subr.mxu0 %v255
  %1091 = vmatpush1.msra.mxu0 %v254
  %1092 = vmatprep.subr.mxu0 %v269
  %1093 = vmatpush1.msra.mxu0 %v268
  %1094 = vmatprep.subr.mxu0 %v283
  %1095 = vmatpush1.msra.mxu0 %v282
  %1096 = vmatprep.subr.mxu0 %v297
  %1097 = vmatpush1.msra.mxu0 %v296
  %1098 = vmatprep.subr.mxu0 0.0
  %1099 = vmatpush1.msra.mxu0 0.0
  %1100 = vmatprep.subr.mxu0 0.0
  %1101 = vmatpush1.msra.mxu0 0.0
  %1102 = vmatprep.subr.mxu0 0.0
  %1103 = vmatpush1.msra.mxu0 0.0
  %1104 = vmatprep.subr.mxu0 0.0
  %1105 = vmatpush1.msra.mxu0 0.0
  %1106 = vmatprep.subr.mxu0 0.0
  %1107 = vmatpush1.msra.mxu0 0.0
  %1108 = vmatprep.subr.mxu0 0.0
  %1109 = vmatpush1.msra.mxu0 0.0
  %1110 = vmatprep.subr.mxu0 0.0
  %1111 = vmatpush1.msra.mxu0 0.0
  %1112 = vmatprep.subr.mxu0 0.0
  %1113 = vmatpush1.msra.mxu0 0.0
  %1114 = vmatprep.subr.mxu0 0.0
  %1115 = vmatpush1.msra.mxu0 0.0
  %1116 = vmatprep.subr.mxu0 0.0
  %1117 = vmatpush1.msra.mxu0 0.0
  %1118 = vmatprep.subr.mxu0 0.0
  %1119 = vmatpush1.msra.mxu0 0.0
  %1120 = vmatprep.subr.mxu0 0.0
  %1121 = vmatpush1.msra.mxu0 0.0
  %1122 = vmatprep.subr.mxu0 0.0
  %1123 = vmatpush1.msra.mxu0 0.0
  %1124 = vmatprep.subr.mxu0 0.0
  %1125 = vmatpush1.msra.mxu0 0.0
  %1126 = vmatprep.subr.mxu0 0.0
  %1127 = vmatpush1.msra.mxu0 0.0
  %1128 = vmatprep.subr.mxu0 0.0
  %1129 = vmatpush1.msra.mxu0 0.0
  %1130 = vmatprep.subr.mxu0 0.0
  %1131 = vmatpush1.msra.mxu0 0.0
  %1132 = vmatprep.subr.mxu0 0.0
  %1133 = vmatpush1.msra.mxu0 0.0
  %1134 = vmatprep.subr.mxu0 0.0
  %1135 = vmatpush1.msra.mxu0 0.0
  %1136 = vmatprep.subr.mxu0 0.0
  %1137 = vmatpush1.msra.mxu0 0.0
  %1138 = vmatprep.subr.mxu0 0.0
  %1139 = vmatpush1.msra.mxu0 0.0
  %1140 = vmatprep.subr.mxu0 0.0
  %1141 = vmatpush1.msra.mxu0 0.0
  %1142 = vmatprep.subr.mxu0 0.0
  %1143 = vmatpush1.msra.mxu0 0.0
  %1144 = vmatprep.subr.mxu0 0.0
  %1145 = vmatpush1.msra.mxu0 0.0
  %1146 = vmatprep.subr.mxu0 0.0
  %1147 = vmatpush1.msra.mxu0 0.0
  %1148 = vmatprep.subr.mxu0 0.0
  %1149 = vmatpush1.msra.mxu0 0.0
  %1150 = vmatprep.subr.mxu0 0.0
  %1151 = vmatpush1.msra.mxu0 0.0
  %1152 = vmatprep.subr.mxu0 0.0
  %1153 = vmatpush1.msra.mxu0 0.0
  %1154 = vmatprep.mubr.f32.mxu0 0.0
  %1155 = vmatmul.mubr.f32.gmra.mrb[0].mxu0 %v804
  %v1156 = vpop.f32.mrb[0].mxu0
  %v1157 = vadd.f32 0.0, %v1156
  %v1158 = vpop.f32.mrb[0].mxu0
  %v1159 = vadd.f32 0.0, %v1158
  %1160 = vdwg.mxu0
  %1161 = vmatprep.subr.mxu0 %v257
  %1162 = vmatpush1.msra.mxu0 %v256
  %1163 = vmatprep.subr.mxu0 %v271
  %1164 = vmatpush1.msra.mxu0 %v270
  %1165 = vmatprep.subr.mxu0 %v285
  %1166 = vmatpush1.msra.mxu0 %v284
  %1167 = vmatprep.subr.mxu0 %v299
  %1168 = vmatpush1.msra.mxu0 %v298
  %1169 = vmatprep.subr.mxu0 0.0
  %1170 = vmatpush1.msra.mxu0 0.0
  %1171 = vmatprep.subr.mxu0 0.0
  %1172 = vmatpush1.msra.mxu0 0.0
  %1173 = vmatprep.subr.mxu0 0.0
  %1174 = vmatpush1.msra.mxu0 0.0
  %1175 = vmatprep.subr.mxu0 0.0
  %1176 = vmatpush1.msra.mxu0 0.0
  %1177 = vmatprep.subr.mxu0 0.0
  %1178 = vmatpush1.msra.mxu0 0.0
  %1179 = vmatprep.subr.mxu0 0.0
  %1180 = vmatpush1.msra.mxu0 0.0
  %1181 = vmatprep.subr.mxu0 0.0
  %1182 = vmatpush1.msra.mxu0 0.0
  %1183 = vmatprep.subr.mxu0 0.0
  %1184 = vmatpush1.msra.mxu0 0.0
  %1185 = vmatprep.subr.mxu0 0.0
  %1186 = vmatpush1.msra.mxu0 0.0
  %1187 = vmatprep.subr.mxu0 0.0
  %1188 = vmatpush1.msra.mxu0 0.0
  %1189 = vmatprep.subr.mxu0 0.0
  %1190 = vmatpush1.msra.mxu0 0.0
  %1191 = vmatprep.subr.mxu0 0.0
  %1192 = vmatpush1.msra.mxu0 0.0
  %1193 = vmatprep.subr.mxu0 0.0
  %1194 = vmatpush1.msra.mxu0 0.0
  %1195 = vmatprep.subr.mxu0 0.0
  %1196 = vmatpush1.msra.mxu0 0.0
  %1197 = vmatprep.subr.mxu0 0.0
  %1198 = vmatpush1.msra.mxu0 0.0
  %1199 = vmatprep.subr.mxu0 0.0
  %1200 = vmatpush1.msra.mxu0 0.0
  %1201 = vmatprep.subr.mxu0 0.0
  %1202 = vmatpush1.msra.mxu0 0.0
  %1203 = vmatprep.subr.mxu0 0.0
  %1204 = vmatpush1.msra.mxu0 0.0
  %1205 = vmatprep.subr.mxu0 0.0
  %1206 = vmatpush1.msra.mxu0 0.0
  %1207 = vmatprep.subr.mxu0 0.0
  %1208 = vmatpush1.msra.mxu0 0.0
  %1209 = vmatprep.subr.mxu0 0.0
  %1210 = vmatpush1.msra.mxu0 0.0
  %1211 = vmatprep.subr.mxu0 0.0
  %1212 = vmatpush1.msra.mxu0 0.0
  %1213 = vmatprep.subr.mxu0 0.0
  %1214 = vmatpush1.msra.mxu0 0.0
  %1215 = vmatprep.subr.mxu0 0.0
  %1216 = vmatpush1.msra.mxu0 0.0
  %1217 = vmatprep.subr.mxu0 0.0
  %1218 = vmatpush1.msra.mxu0 0.0
  %1219 = vmatprep.subr.mxu0 0.0
  %1220 = vmatpush1.msra.mxu0 0.0
  %1221 = vmatprep.subr.mxu0 0.0
  %1222 = vmatpush1.msra.mxu0 0.0
  %1223 = vmatprep.subr.mxu0 0.0
  %1224 = vmatpush1.msra.mxu0 0.0
  %1225 = vmatprep.mubr.f32.mxu0 0.0
  %1226 = vmatmul.mubr.f32.gmra.mrb[0].mxu0 %v804
  %v1227 = vpop.f32.mrb[0].mxu0
  %v1228 = vadd.f32 0.0, %v1227
  %v1229 = vpop.f32.mrb[0].mxu0
  %v1230 = vadd.f32 0.0, %v1229
  %1231 = vdwg.mxu0
  %1232 = vmatprep.subr.mxu0 %v259
  %1233 = vmatpush1.msra.mxu0 %v258
  %1234 = vmatprep.subr.mxu0 %v273
  %1235 = vmatpush1.msra.mxu0 %v272
  %1236 = vmatprep.subr.mxu0 %v287
  %1237 = vmatpush1.msra.mxu0 %v286
  %1238 = vmatprep.subr.mxu0 %v301
  %1239 = vmatpush1.msra.mxu0 %v300
  %1240 = vmatprep.subr.mxu0 0.0
  %1241 = vmatpush1.msra.mxu0 0.0
  %1242 = vmatprep.subr.mxu0 0.0
  %1243 = vmatpush1.msra.mxu0 0.0
  %1244 = vmatprep.subr.mxu0 0.0
  %1245 = vmatpush1.msra.mxu0 0.0
  %1246 = vmatprep.subr.mxu0 0.0
  %1247 = vmatpush1.msra.mxu0 0.0
  %1248 = vmatprep.subr.mxu0 0.0
  %1249 = vmatpush1.msra.mxu0 0.0
  %1250 = vmatprep.subr.mxu0 0.0
  %1251 = vmatpush1.msra.mxu0 0.0
  %1252 = vmatprep.subr.mxu0 0.0
  %1253 = vmatpush1.msra.mxu0 0.0
  %1254 = vmatprep.subr.mxu0 0.0
  %1255 = vmatpush1.msra.mxu0 0.0
  %1256 = vmatprep.subr.mxu0 0.0
  %1257 = vmatpush1.msra.mxu0 0.0
  %1258 = vmatprep.subr.mxu0 0.0
  %1259 = vmatpush1.msra.mxu0 0.0
  %1260 = vmatprep.subr.mxu0 0.0
  %1261 = vmatpush1.msra.mxu0 0.0
  %1262 = vmatprep.subr.mxu0 0.0
  %1263 = vmatpush1.msra.mxu0 0.0
  %1264 = vmatprep.subr.mxu0 0.0
  %1265 = vmatpush1.msra.mxu0 0.0
  %1266 = vmatprep.subr.mxu0 0.0
  %1267 = vmatpush1.msra.mxu0 0.0
  %1268 = vmatprep.subr.mxu0 0.0
  %1269 = vmatpush1.msra.mxu0 0.0
  %1270 = vmatprep.subr.mxu0 0.0
  %1271 = vmatpush1.msra.mxu0 0.0
  %1272 = vmatprep.subr.mxu0 0.0
  %1273 = vmatpush1.msra.mxu0 0.0
  %1274 = vmatprep.subr.mxu0 0.0
  %1275 = vmatpush1.msra.mxu0 0.0
  %1276 = vmatprep.subr.mxu0 0.0
  %1277 = vmatpush1.msra.mxu0 0.0
  %1278 = vmatprep.subr.mxu0 0.0
  %1279 = vmatpush1.msra.mxu0 0.0
  %1280 = vmatprep.subr.mxu0 0.0
  %1281 = vmatpush1.msra.mxu0 0.0
  %1282 = vmatprep.subr.mxu0 0.0
  %1283 = vmatpush1.msra.mxu0 0.0
  %1284 = vmatprep.subr.mxu0 0.0
  %1285 = vmatpush1.msra.mxu0 0.0
  %1286 = vmatprep.subr.mxu0 0.0
  %1287 = vmatpush1.msra.mxu0 0.0
  %1288 = vmatprep.subr.mxu0 0.0
  %1289 = vmatpush1.msra.mxu0 0.0
  %1290 = vmatprep.subr.mxu0 0.0
  %1291 = vmatpush1.msra.mxu0 0.0
  %1292 = vmatprep.subr.mxu0 0.0
  %1293 = vmatpush1.msra.mxu0 0.0
  %1294 = vmatprep.subr.mxu0 0.0
  %1295 = vmatpush1.msra.mxu0 0.0
  %1296 = vmatprep.mubr.f32.mxu0 0.0
  %1297 = vmatmul.mubr.f32.gmra.mrb[0].mxu0 %v804
  %v1298 = vpop.f32.mrb[0].mxu0
  %v1299 = vadd.f32 0.0, %v1298
  %v1300 = vpop.f32.mrb[0].mxu0
  %v1301 = vadd.f32 0.0, %v1300
  %1302 = vdwg.mxu0
  %v1303 = vld [vmem:[%s1] sm:$0x3]
  %v1304 = vld [vmem:[%s7] sm:$0xff]
  %v1305 = vld [vmem:[%s7 + $0x8] sm:$0xff]
  %v1306 = vld [vmem:[%s7 + $0x10] sm:$0xff]
  %v1307 = vld [vmem:[%s7 + $0x18] sm:$0xff]
  %v1308 = vld [vmem:[%s7 + $0x20] sm:$0xff]
  %v1309 = vld [vmem:[%s7 + $0x28] sm:$0xff]
  %v1310 = vld [vmem:[%s7 + $0x30] sm:$0xff]
  %v1311 = vld [vmem:[%s7 + $0x38] sm:$0xff]
  %v1312 = vld [vmem:[%s7 + $0x40] sm:$0xff]
  %v1313 = vld [vmem:[%s7 + $0x48] sm:$0xff]
  %v1314 = vld [vmem:[%s7 + $0x50] sm:$0xff]
  %v1315 = vld [vmem:[%s7 + $0x58] sm:$0xff]
  %v1316 = vld [vmem:[%s7 + $0x60] sm:$0xff]
  %v1317 = vld [vmem:[%s7 + $0x68] sm:$0xff]
  %v1319 = vsel %vm34, %v1303, 0
  %1321 = vmatprep.subr.mxu0 %v1305
  %1322 = vmatpush1.msra.mxu0 %v1304
  %1323 = vmatprep.subr.mxu0 0.0
  %1324 = vmatpush1.msra.mxu0 0.0
  %1325 = vmatprep.subr.mxu0 0.0
  %1326 = vmatpush1.msra.mxu0 0.0
  %1327 = vmatprep.subr.mxu0 0.0
  %1328 = vmatpush1.msra.mxu0 0.0
  %1329 = vmatprep.subr.mxu0 0.0
  %1330 = vmatpush1.msra.mxu0 0.0
  %1331 = vmatprep.subr.mxu0 0.0
  %1332 = vmatpush1.msra.mxu0 0.0
  %1333 = vmatprep.subr.mxu0 0.0
  %1334 = vmatpush1.msra.mxu0 0.0
  %1335 = vmatprep.subr.mxu0 0.0
  %1336 = vmatpush1.msra.mxu0 0.0
  %1337 = vmatprep.subr.mxu0 0.0
  %1338 = vmatpush1.msra.mxu0 0.0
  %1339 = vmatprep.subr.mxu0 0.0
  %1340 = vmatpush1.msra.mxu0 0.0
  %1341 = vmatprep.subr.mxu0 0.0
  %1342 = vmatpush1.msra.mxu0 0.0
  %1343 = vmatprep.subr.mxu0 0.0
  %1344 = vmatpush1.msra.mxu0 0.0
  %1345 = vmatprep.subr.mxu0 0.0
  %1346 = vmatpush1.msra.mxu0 0.0
  %1347 = vmatprep.subr.mxu0 0.0
  %1348 = vmatpush1.msra.mxu0 0.0
  %1349 = vmatprep.subr.mxu0 0.0
  %1350 = vmatpush1.msra.mxu0 0.0
  %1351 = vmatprep.subr.mxu0 0.0
  %1352 = vmatpush1.msra.mxu0 0.0
  %1353 = vmatprep.subr.mxu0 0.0
  %1354 = vmatpush1.msra.mxu0 0.0
  %1355 = vmatprep.subr.mxu0 0.0
  %1356 = vmatpush1.msra.mxu0 0.0
  %1357 = vmatprep.subr.mxu0 0.0
  %1358 = vmatpush1.msra.mxu0 0.0
  %1359 = vmatprep.subr.mxu0 0.0
  %1360 = vmatpush1.msra.mxu0 0.0
  %1361 = vmatprep.subr.mxu0 0.0
  %1362 = vmatpush1.msra.mxu0 0.0
  %1363 = vmatprep.subr.mxu0 0.0
  %1364 = vmatpush1.msra.mxu0 0.0
  %1365 = vmatprep.subr.mxu0 0.0
  %1366 = vmatpush1.msra.mxu0 0.0
  %1367 = vmatprep.subr.mxu0 0.0
  %1368 = vmatpush1.msra.mxu0 0.0
  %1369 = vmatprep.subr.mxu0 0.0
  %1370 = vmatpush1.msra.mxu0 0.0
  %1371 = vmatprep.subr.mxu0 0.0
  %1372 = vmatpush1.msra.mxu0 0.0
  %1373 = vmatprep.subr.mxu0 0.0
  %1374 = vmatpush1.msra.mxu0 0.0
  %1375 = vmatprep.subr.mxu0 0.0
  %1376 = vmatpush1.msra.mxu0 0.0
  %1377 = vmatprep.subr.mxu0 0.0
  %1378 = vmatpush1.msra.mxu0 0.0
  %1379 = vmatprep.subr.mxu0 0.0
  %1380 = vmatpush1.msra.mxu0 0.0
  %1381 = vmatprep.subr.mxu0 0.0
  %1382 = vmatpush1.msra.mxu0 0.0
  %1383 = vmatprep.subr.mxu0 0.0
  %1384 = vmatpush1.msra.mxu0 0.0
  %1385 = vmatprep.mubr.f32.mxu0 0.0
  %1386 = vmatmul.mubr.f32.gmra.mrb[0].mxu0 %v1319
  %v1387 = vpop.f32.mrb[0].mxu0
  %v1388 = vadd.f32 0.0, %v1387
  %v1389 = vpop.f32.mrb[0].mxu0
  %v1390 = vadd.f32 0.0, %v1389
  %1391 = vdwg.mxu0
  %1392 = vmatprep.subr.mxu0 %v1307
  %1393 = vmatpush1.msra.mxu0 %v1306
  %1394 = vmatprep.subr.mxu0 0.0
  %1395 = vmatpush1.msra.mxu0 0.0
  %1396 = vmatprep.subr.mxu0 0.0
  %1397 = vmatpush1.msra.mxu0 0.0
  %1398 = vmatprep.subr.mxu0 0.0
  %1399 = vmatpush1.msra.mxu0 0.0
  %1400 = vmatprep.subr.mxu0 0.0
  %1401 = vmatpush1.msra.mxu0 0.0
  %1402 = vmatprep.subr.mxu0 0.0
  %1403 = vmatpush1.msra.mxu0 0.0
  %1404 = vmatprep.subr.mxu0 0.0
  %1405 = vmatpush1.msra.mxu0 0.0
  %1406 = vmatprep.subr.mxu0 0.0
  %1407 = vmatpush1.msra.mxu0 0.0
  %1408 = vmatprep.subr.mxu0 0.0
  %1409 = vmatpush1.msra.mxu0 0.0
  %1410 = vmatprep.subr.mxu0 0.0
  %1411 = vmatpush1.msra.mxu0 0.0
  %1412 = vmatprep.subr.mxu0 0.0
  %1413 = vmatpush1.msra.mxu0 0.0
  %1414 = vmatprep.subr.mxu0 0.0
  %1415 = vmatpush1.msra.mxu0 0.0
  %1416 = vmatprep.subr.mxu0 0.0
  %1417 = vmatpush1.msra.mxu0 0.0
  %1418 = vmatprep.subr.mxu0 0.0
  %1419 = vmatpush1.msra.mxu0 0.0
  %1420 = vmatprep.subr.mxu0 0.0
  %1421 = vmatpush1.msra.mxu0 0.0
  %1422 = vmatprep.subr.mxu0 0.0
  %1423 = vmatpush1.msra.mxu0 0.0
  %1424 = vmatprep.subr.mxu0 0.0
  %1425 = vmatpush1.msra.mxu0 0.0
  %1426 = vmatprep.subr.mxu0 0.0
  %1427 = vmatpush1.msra.mxu0 0.0
  %1428 = vmatprep.subr.mxu0 0.0
  %1429 = vmatpush1.msra.mxu0 0.0
  %1430 = vmatprep.subr.mxu0 0.0
  %1431 = vmatpush1.msra.mxu0 0.0
  %1432 = vmatprep.subr.mxu0 0.0
  %1433 = vmatpush1.msra.mxu0 0.0
  %1434 = vmatprep.subr.mxu0 0.0
  %1435 = vmatpush1.msra.mxu0 0.0
  %1436 = vmatprep.subr.mxu0 0.0
  %1437 = vmatpush1.msra.mxu0 0.0
  %1438 = vmatprep.subr.mxu0 0.0
  %1439 = vmatpush1.msra.mxu0 0.0
  %1440 = vmatprep.subr.mxu0 0.0
  %1441 = vmatpush1.msra.mxu0 0.0
  %1442 = vmatprep.subr.mxu0 0.0
  %1443 = vmatpush1.msra.mxu0 0.0
  %1444 = vmatprep.subr.mxu0 0.0
  %1445 = vmatpush1.msra.mxu0 0.0
  %1446 = vmatprep.subr.mxu0 0.0
  %1447 = vmatpush1.msra.mxu0 0.0
  %1448 = vmatprep.subr.mxu0 0.0
  %1449 = vmatpush1.msra.mxu0 0.0
  %1450 = vmatprep.subr.mxu0 0.0
  %1451 = vmatpush1.msra.mxu0 0.0
  %1452 = vmatprep.subr.mxu0 0.0
  %1453 = vmatpush1.msra.mxu0 0.0
  %1454 = vmatprep.subr.mxu0 0.0
  %1455 = vmatpush1.msra.mxu0 0.0
  %1456 = vmatprep.mubr.f32.mxu0 0.0
  %1457 = vmatmul.mubr.f32.gmra.mrb[0].mxu0 %v1319
  %v1458 = vpop.f32.mrb[0].mxu0
  %v1459 = vadd.f32 0.0, %v1458
  %v1460 = vpop.f32.mrb[0].mxu0
  %v1461 = vadd.f32 0.0, %v1460
  %1462 = vdwg.mxu0
  %1463 = vmatprep.subr.mxu0 %v1309
  %1464 = vmatpush1.msra.mxu0 %v1308
  %1465 = vmatprep.subr.mxu0 0.0
  %1466 = vmatpush1.msra.mxu0 0.0
  %1467 = vmatprep.subr.mxu0 0.0
  %1468 = vmatpush1.msra.mxu0 0.0
  %1469 = vmatprep.subr.mxu0 0.0
  %1470 = vmatpush1.msra.mxu0 0.0
  %1471 = vmatprep.subr.mxu0 0.0
  %1472 = vmatpush1.msra.mxu0 0.0
  %1473 = vmatprep.subr.mxu0 0.0
  %1474 = vmatpush1.msra.mxu0 0.0
  %1475 = vmatprep.subr.mxu0 0.0
  %1476 = vmatpush1.msra.mxu0 0.0
  %1477 = vmatprep.subr.mxu0 0.0
  %1478 = vmatpush1.msra.mxu0 0.0
  %1479 = vmatprep.subr.mxu0 0.0
  %1480 = vmatpush1.msra.mxu0 0.0
  %1481 = vmatprep.subr.mxu0 0.0
  %1482 = vmatpush1.msra.mxu0 0.0
  %1483 = vmatprep.subr.mxu0 0.0
  %1484 = vmatpush1.msra.mxu0 0.0
  %1485 = vmatprep.subr.mxu0 0.0
  %1486 = vmatpush1.msra.mxu0 0.0
  %1487 = vmatprep.subr.mxu0 0.0
  %1488 = vmatpush1.msra.mxu0 0.0
  %1489 = vmatprep.subr.mxu0 0.0
  %1490 = vmatpush1.msra.mxu0 0.0
  %1491 = vmatprep.subr.mxu0 0.0
  %1492 = vmatpush1.msra.mxu0 0.0
  %1493 = vmatprep.subr.mxu0 0.0
  %1494 = vmatpush1.msra.mxu0 0.0
  %1495 = vmatprep.subr.mxu0 0.0
  %1496 = vmatpush1.msra.mxu0 0.0
  %1497 = vmatprep.subr.mxu0 0.0
  %1498 = vmatpush1.msra.mxu0 0.0
  %1499 = vmatprep.subr.mxu0 0.0
  %1500 = vmatpush1.msra.mxu0 0.0
  %1501 = vmatprep.subr.mxu0 0.0
  %1502 = vmatpush1.msra.mxu0 0.0
  %1503 = vmatprep.subr.mxu0 0.0
  %1504 = vmatpush1.msra.mxu0 0.0
  %1505 = vmatprep.subr.mxu0 0.0
  %1506 = vmatpush1.msra.mxu0 0.0
  %1507 = vmatprep.subr.mxu0 0.0
  %1508 = vmatpush1.msra.mxu0 0.0
  %1509 = vmatprep.subr.mxu0 0.0
  %1510 = vmatpush1.msra.mxu0 0.0
  %1511 = vmatprep.subr.mxu0 0.0
  %1512 = vmatpush1.msra.mxu0 0.0
  %1513 = vmatprep.subr.mxu0 0.0
  %1514 = vmatpush1.msra.mxu0 0.0
  %1515 = vmatprep.subr.mxu0 0.0
  %1516 = vmatpush1.msra.mxu0 0.0
  %1517 = vmatprep.subr.mxu0 0.0
  %1518 = vmatpush1.msra.mxu0 0.0
  %1519 = vmatprep.subr.mxu0 0.0
  %1520 = vmatpush1.msra.mxu0 0.0
  %1521 = vmatprep.subr.mxu0 0.0
  %1522 = vmatpush1.msra.mxu0 0.0
  %1523 = vmatprep.subr.mxu0 0.0
  %1524 = vmatpush1.msra.mxu0 0.0
  %1525 = vmatprep.subr.mxu0 0.0
  %1526 = vmatpush1.msra.mxu0 0.0
  %1527 = vmatprep.mubr.f32.mxu0 0.0
  %1528 = vmatmul.mubr.f32.gmra.mrb[0].mxu0 %v1319
  %v1529 = vpop.f32.mrb[0].mxu0
  %v1530 = vadd.f32 0.0, %v1529
  %v1531 = vpop.f32.mrb[0].mxu0
  %v1532 = vadd.f32 0.0, %v1531
  %1533 = vdwg.mxu0
  %1534 = vmatprep.subr.mxu0 %v1311
  %1535 = vmatpush1.msra.mxu0 %v1310
  %1536 = vmatprep.subr.mxu0 0.0
  %1537 = vmatpush1.msra.mxu0 0.0
  %1538 = vmatprep.subr.mxu0 0.0
  %1539 = vmatpush1.msra.mxu0 0.0
  %1540 = vmatprep.subr.mxu0 0.0
  %1541 = vmatpush1.msra.mxu0 0.0
  %1542 = vmatprep.subr.mxu0 0.0
  %1543 = vmatpush1.msra.mxu0 0.0
  %1544 = vmatprep.subr.mxu0 0.0
  %1545 = vmatpush1.msra.mxu0 0.0
  %1546 = vmatprep.subr.mxu0 0.0
  %1547 = vmatpush1.msra.mxu0 0.0
  %1548 = vmatprep.subr.mxu0 0.0
  %1549 = vmatpush1.msra.mxu0 0.0
  %1550 = vmatprep.subr.mxu0 0.0
  %1551 = vmatpush1.msra.mxu0 0.0
  %1552 = vmatprep.subr.mxu0 0.0
  %1553 = vmatpush1.msra.mxu0 0.0
  %1554 = vmatprep.subr.mxu0 0.0
  %1555 = vmatpush1.msra.mxu0 0.0
  %1556 = vmatprep.subr.mxu0 0.0
  %1557 = vmatpush1.msra.mxu0 0.0
  %1558 = vmatprep.subr.mxu0 0.0
  %1559 = vmatpush1.msra.mxu0 0.0
  %1560 = vmatprep.subr.mxu0 0.0
  %1561 = vmatpush1.msra.mxu0 0.0
  %1562 = vmatprep.subr.mxu0 0.0
  %1563 = vmatpush1.msra.mxu0 0.0
  %1564 = vmatprep.subr.mxu0 0.0
  %1565 = vmatpush1.msra.mxu0 0.0
  %1566 = vmatprep.subr.mxu0 0.0
  %1567 = vmatpush1.msra.mxu0 0.0
  %1568 = vmatprep.subr.mxu0 0.0
  %1569 = vmatpush1.msra.mxu0 0.0
  %1570 = vmatprep.subr.mxu0 0.0
  %1571 = vmatpush1.msra.mxu0 0.0
  %1572 = vmatprep.subr.mxu0 0.0
  %1573 = vmatpush1.msra.mxu0 0.0
  %1574 = vmatprep.subr.mxu0 0.0
  %1575 = vmatpush1.msra.mxu0 0.0
  %1576 = vmatprep.subr.mxu0 0.0
  %1577 = vmatpush1.msra.mxu0 0.0
  %1578 = vmatprep.subr.mxu0 0.0
  %1579 = vmatpush1.msra.mxu0 0.0
  %1580 = vmatprep.subr.mxu0 0.0
  %1581 = vmatpush1.msra.mxu0 0.0
  %1582 = vmatprep.subr.mxu0 0.0
  %1583 = vmatpush1.msra.mxu0 0.0
  %1584 = vmatprep.subr.mxu0 0.0
  %1585 = vmatpush1.msra.mxu0 0.0
  %1586 = vmatprep.subr.mxu0 0.0
  %1587 = vmatpush1.msra.mxu0 0.0
  %1588 = vmatprep.subr.mxu0 0.0
  %1589 = vmatpush1.msra.mxu0 0.0
  %1590 = vmatprep.subr.mxu0 0.0
  %1591 = vmatpush1.msra.mxu0 0.0
  %1592 = vmatprep.subr.mxu0 0.0
  %1593 = vmatpush1.msra.mxu0 0.0
  %1594 = vmatprep.subr.mxu0 0.0
  %1595 = vmatpush1.msra.mxu0 0.0
  %1596 = vmatprep.subr.mxu0 0.0
  %1597 = vmatpush1.msra.mxu0 0.0
  %1598 = vmatprep.mubr.f32.mxu0 0.0
  %1599 = vmatmul.mubr.f32.gmra.mrb[0].mxu0 %v1319
  %v1600 = vpop.f32.mrb[0].mxu0
  %v1601 = vadd.f32 0.0, %v1600
  %v1602 = vpop.f32.mrb[0].mxu0
  %v1603 = vadd.f32 0.0, %v1602
  %1604 = vdwg.mxu0
  %1605 = vmatprep.subr.mxu0 %v1313
  %1606 = vmatpush1.msra.mxu0 %v1312
  %1607 = vmatprep.subr.mxu0 0.0
  %1608 = vmatpush1.msra.mxu0 0.0
  %1609 = vmatprep.subr.mxu0 0.0
  %1610 = vmatpush1.msra.mxu0 0.0
  %1611 = vmatprep.subr.mxu0 0.0
  %1612 = vmatpush1.msra.mxu0 0.0
  %1613 = vmatprep.subr.mxu0 0.0
  %1614 = vmatpush1.msra.mxu0 0.0
  %1615 = vmatprep.subr.mxu0 0.0
  %1616 = vmatpush1.msra.mxu0 0.0
  %1617 = vmatprep.subr.mxu0 0.0
  %1618 = vmatpush1.msra.mxu0 0.0
  %1619 = vmatprep.subr.mxu0 0.0
  %1620 = vmatpush1.msra.mxu0 0.0
  %1621 = vmatprep.subr.mxu0 0.0
  %1622 = vmatpush1.msra.mxu0 0.0
  %1623 = vmatprep.subr.mxu0 0.0
  %1624 = vmatpush1.msra.mxu0 0.0
  %1625 = vmatprep.subr.mxu0 0.0
  %1626 = vmatpush1.msra.mxu0 0.0
  %1627 = vmatprep.subr.mxu0 0.0
  %1628 = vmatpush1.msra.mxu0 0.0
  %1629 = vmatprep.subr.mxu0 0.0
  %1630 = vmatpush1.msra.mxu0 0.0
  %1631 = vmatprep.subr.mxu0 0.0
  %1632 = vmatpush1.msra.mxu0 0.0
  %1633 = vmatprep.subr.mxu0 0.0
  %1634 = vmatpush1.msra.mxu0 0.0
  %1635 = vmatprep.subr.mxu0 0.0
  %1636 = vmatpush1.msra.mxu0 0.0
  %1637 = vmatprep.subr.mxu0 0.0
  %1638 = vmatpush1.msra.mxu0 0.0
  %1639 = vmatprep.subr.mxu0 0.0
  %1640 = vmatpush1.msra.mxu0 0.0
  %1641 = vmatprep.subr.mxu0 0.0
  %1642 = vmatpush1.msra.mxu0 0.0
  %1643 = vmatprep.subr.mxu0 0.0
  %1644 = vmatpush1.msra.mxu0 0.0
  %1645 = vmatprep.subr.mxu0 0.0
  %1646 = vmatpush1.msra.mxu0 0.0
  %1647 = vmatprep.subr.mxu0 0.0
  %1648 = vmatpush1.msra.mxu0 0.0
  %1649 = vmatprep.subr.mxu0 0.0
  %1650 = vmatpush1.msra.mxu0 0.0
  %1651 = vmatprep.subr.mxu0 0.0
  %1652 = vmatpush1.msra.mxu0 0.0
  %1653 = vmatprep.subr.mxu0 0.0
  %1654 = vmatpush1.msra.mxu0 0.0
  %1655 = vmatprep.subr.mxu0 0.0
  %1656 = vmatpush1.msra.mxu0 0.0
  %1657 = vmatprep.subr.mxu0 0.0
  %1658 = vmatpush1.msra.mxu0 0.0
  %1659 = vmatprep.subr.mxu0 0.0
  %1660 = vmatpush1.msra.mxu0 0.0
  %1661 = vmatprep.subr.mxu0 0.0
  %1662 = vmatpush1.msra.mxu0 0.0
  %1663 = vmatprep.subr.mxu0 0.0
  %1664 = vmatpush1.msra.mxu0 0.0
  %1665 = vmatprep.subr.mxu0 0.0
  %1666 = vmatpush1.msra.mxu0 0.0
  %1667 = vmatprep.subr.mxu0 0.0
  %1668 = vmatpush1.msra.mxu0 0.0
  %1669 = vmatprep.mubr.f32.mxu0 0.0
  %1670 = vmatmul.mubr.f32.gmra.mrb[0].mxu0 %v1319
  %v1671 = vpop.f32.mrb[0].mxu0
  %v1672 = vadd.f32 0.0, %v1671
  %v1673 = vpop.f32.mrb[0].mxu0
  %v1674 = vadd.f32 0.0, %v1673
  %1675 = vdwg.mxu0
  %1676 = vmatprep.subr.mxu0 %v1315
  %1677 = vmatpush1.msra.mxu0 %v1314
  %1678 = vmatprep.subr.mxu0 0.0
  %1679 = vmatpush1.msra.mxu0 0.0
  %1680 = vmatprep.subr.mxu0 0.0
  %1681 = vmatpush1.msra.mxu0 0.0
  %1682 = vmatprep.subr.mxu0 0.0
  %1683 = vmatpush1.msra.mxu0 0.0
  %1684 = vmatprep.subr.mxu0 0.0
  %1685 = vmatpush1.msra.mxu0 0.0
  %1686 = vmatprep.subr.mxu0 0.0
  %1687 = vmatpush1.msra.mxu0 0.0
  %1688 = vmatprep.subr.mxu0 0.0
  %1689 = vmatpush1.msra.mxu0 0.0
  %1690 = vmatprep.subr.mxu0 0.0
  %1691 = vmatpush1.msra.mxu0 0.0
  %1692 = vmatprep.subr.mxu0 0.0
  %1693 = vmatpush1.msra.mxu0 0.0
  %1694 = vmatprep.subr.mxu0 0.0
  %1695 = vmatpush1.msra.mxu0 0.0
  %1696 = vmatprep.subr.mxu0 0.0
  %1697 = vmatpush1.msra.mxu0 0.0
  %1698 = vmatprep.subr.mxu0 0.0
  %1699 = vmatpush1.msra.mxu0 0.0
  %1700 = vmatprep.subr.mxu0 0.0
  %1701 = vmatpush1.msra.mxu0 0.0
  %1702 = vmatprep.subr.mxu0 0.0
  %1703 = vmatpush1.msra.mxu0 0.0
  %1704 = vmatprep.subr.mxu0 0.0
  %1705 = vmatpush1.msra.mxu0 0.0
  %1706 = vmatprep.subr.mxu0 0.0
  %1707 = vmatpush1.msra.mxu0 0.0
  %1708 = vmatprep.subr.mxu0 0.0
  %1709 = vmatpush1.msra.mxu0 0.0
  %1710 = vmatprep.subr.mxu0 0.0
  %1711 = vmatpush1.msra.mxu0 0.0
  %1712 = vmatprep.subr.mxu0 0.0
  %1713 = vmatpush1.msra.mxu0 0.0
  %1714 = vmatprep.subr.mxu0 0.0
  %1715 = vmatpush1.msra.mxu0 0.0
  %1716 = vmatprep.subr.mxu0 0.0
  %1717 = vmatpush1.msra.mxu0 0.0
  %1718 = vmatprep.subr.mxu0 0.0
  %1719 = vmatpush1.msra.mxu0 0.0
  %1720 = vmatprep.subr.mxu0 0.0
  %1721 = vmatpush1.msra.mxu0 0.0
  %1722 = vmatprep.subr.mxu0 0.0
  %1723 = vmatpush1.msra.mxu0 0.0
  %1724 = vmatprep.subr.mxu0 0.0
  %1725 = vmatpush1.msra.mxu0 0.0
  %1726 = vmatprep.subr.mxu0 0.0
  %1727 = vmatpush1.msra.mxu0 0.0
  %1728 = vmatprep.subr.mxu0 0.0
  %1729 = vmatpush1.msra.mxu0 0.0
  %1730 = vmatprep.subr.mxu0 0.0
  %1731 = vmatpush1.msra.mxu0 0.0
  %1732 = vmatprep.subr.mxu0 0.0
  %1733 = vmatpush1.msra.mxu0 0.0
  %1734 = vmatprep.subr.mxu0 0.0
  %1735 = vmatpush1.msra.mxu0 0.0
  %1736 = vmatprep.subr.mxu0 0.0
  %1737 = vmatpush1.msra.mxu0 0.0
  %1738 = vmatprep.subr.mxu0 0.0
  %1739 = vmatpush1.msra.mxu0 0.0
  %1740 = vmatprep.mubr.f32.mxu0 0.0
  %1741 = vmatmul.mubr.f32.gmra.mrb[0].mxu0 %v1319
  %v1742 = vpop.f32.mrb[0].mxu0
  %v1743 = vadd.f32 0.0, %v1742
  %v1744 = vpop.f32.mrb[0].mxu0
  %v1745 = vadd.f32 0.0, %v1744
  %1746 = vdwg.mxu0
  %1747 = vmatprep.subr.mxu0 %v1317
  %1748 = vmatpush1.msra.mxu0 %v1316
  %1749 = vmatprep.subr.mxu0 0.0
  %1750 = vmatpush1.msra.mxu0 0.0
  %1751 = vmatprep.subr.mxu0 0.0
  %1752 = vmatpush1.msra.mxu0 0.0
  %1753 = vmatprep.subr.mxu0 0.0
  %1754 = vmatpush1.msra.mxu0 0.0
  %1755 = vmatprep.subr.mxu0 0.0
  %1756 = vmatpush1.msra.mxu0 0.0
  %1757 = vmatprep.subr.mxu0 0.0
  %1758 = vmatpush1.msra.mxu0 0.0
  %1759 = vmatprep.subr.mxu0 0.0
  %1760 = vmatpush1.msra.mxu0 0.0
  %1761 = vmatprep.subr.mxu0 0.0
  %1762 = vmatpush1.msra.mxu0 0.0
  %1763 = vmatprep.subr.mxu0 0.0
  %1764 = vmatpush1.msra.mxu0 0.0
  %1765 = vmatprep.subr.mxu0 0.0
  %1766 = vmatpush1.msra.mxu0 0.0
  %1767 = vmatprep.subr.mxu0 0.0
  %1768 = vmatpush1.msra.mxu0 0.0
  %1769 = vmatprep.subr.mxu0 0.0
  %1770 = vmatpush1.msra.mxu0 0.0
  %1771 = vmatprep.subr.mxu0 0.0
  %1772 = vmatpush1.msra.mxu0 0.0
  %1773 = vmatprep.subr.mxu0 0.0
  %1774 = vmatpush1.msra.mxu0 0.0
  %1775 = vmatprep.subr.mxu0 0.0
  %1776 = vmatpush1.msra.mxu0 0.0
  %1777 = vmatprep.subr.mxu0 0.0
  %1778 = vmatpush1.msra.mxu0 0.0
  %1779 = vmatprep.subr.mxu0 0.0
  %1780 = vmatpush1.msra.mxu0 0.0
  %1781 = vmatprep.subr.mxu0 0.0
  %1782 = vmatpush1.msra.mxu0 0.0
  %1783 = vmatprep.subr.mxu0 0.0
  %1784 = vmatpush1.msra.mxu0 0.0
  %1785 = vmatprep.subr.mxu0 0.0
  %1786 = vmatpush1.msra.mxu0 0.0
  %1787 = vmatprep.subr.mxu0 0.0
  %1788 = vmatpush1.msra.mxu0 0.0
  %1789 = vmatprep.subr.mxu0 0.0
  %1790 = vmatpush1.msra.mxu0 0.0
  %1791 = vmatprep.subr.mxu0 0.0
  %1792 = vmatpush1.msra.mxu0 0.0
  %1793 = vmatprep.subr.mxu0 0.0
  %1794 = vmatpush1.msra.mxu0 0.0
  %1795 = vmatprep.subr.mxu0 0.0
  %1796 = vmatpush1.msra.mxu0 0.0
  %1797 = vmatprep.subr.mxu0 0.0
  %1798 = vmatpush1.msra.mxu0 0.0
  %1799 = vmatprep.subr.mxu0 0.0
  %1800 = vmatpush1.msra.mxu0 0.0
  %1801 = vmatprep.subr.mxu0 0.0
  %1802 = vmatpush1.msra.mxu0 0.0
  %1803 = vmatprep.subr.mxu0 0.0
  %1804 = vmatpush1.msra.mxu0 0.0
  %1805 = vmatprep.subr.mxu0 0.0
  %1806 = vmatpush1.msra.mxu0 0.0
  %1807 = vmatprep.subr.mxu0 0.0
  %1808 = vmatpush1.msra.mxu0 0.0
  %1809 = vmatprep.subr.mxu0 0.0
  %1810 = vmatpush1.msra.mxu0 0.0
  %1811 = vmatprep.mubr.f32.mxu0 0.0
  %1812 = vmatmul.mubr.f32.gmra.mrb[0].mxu0 %v1319
  %v1813 = vpop.f32.mrb[0].mxu0
  %v1814 = vadd.f32 0.0, %v1813
  %v1815 = vpop.f32.mrb[0].mxu0
  %v1816 = vadd.f32 0.0, %v1815
  %1817 = vdwg.mxu0
  %v1818 = vmul.f32 %v1388, -1.0
  %v1819 = vmul.f32 %v1390, -1.0
  %v1820 = vmul.f32 %v1459, -1.0
  %v1821 = vmul.f32 %v1461, -1.0
  %v1822 = vmul.f32 %v1530, -1.0
  %v1823 = vmul.f32 %v1532, -1.0
  %v1824 = vmul.f32 %v1601, -1.0
  %v1825 = vmul.f32 %v1603, -1.0
  %v1826 = vmul.f32 %v1672, -1.0
  %v1827 = vmul.f32 %v1674, -1.0
  %v1828 = vmul.f32 %v1743, -1.0
  %v1829 = vmul.f32 %v1745, -1.0
  %v1830 = vmul.f32 %v1814, -1.0
  %v1831 = vmul.f32 %v1816, -1.0
  %v1832 = vmul.f32 %v373, 5.0
  %v1833 = vmul.f32 %v375, 5.0
  %v1834 = vmul.f32 %v444, 5.0
  %v1835 = vmul.f32 %v446, 5.0
  %v1836 = vmul.f32 %v515, 5.0
  %v1837 = vmul.f32 %v517, 5.0
  %v1838 = vmul.f32 %v586, 5.0
  %v1839 = vmul.f32 %v588, 5.0
  %v1840 = vmul.f32 %v657, 5.0
  %v1841 = vmul.f32 %v659, 5.0
  %v1842 = vmul.f32 %v728, 5.0
  %v1843 = vmul.f32 %v730, 5.0
  %v1844 = vmul.f32 %v799, 5.0
  %v1845 = vmul.f32 %v801, 5.0
  %v1846 = vadd.f32 %v1818, %v1832
  %v1847 = vadd.f32 %v1819, %v1833
  %v1848 = vadd.f32 %v1820, %v1834
  %v1849 = vadd.f32 %v1821, %v1835
  %v1850 = vadd.f32 %v1822, %v1836
  %v1851 = vadd.f32 %v1823, %v1837
  %v1852 = vadd.f32 %v1824, %v1838
  %v1853 = vadd.f32 %v1825, %v1839
  %v1854 = vadd.f32 %v1826, %v1840
  %v1855 = vadd.f32 %v1827, %v1841
  %v1856 = vadd.f32 %v1828, %v1842
  %v1857 = vadd.f32 %v1829, %v1843
  %v1858 = vadd.f32 %v1830, %v1844
  %v1859 = vadd.f32 %v1831, %v1845
  %v1860 = vmul.f32 %v873, 2.0
  %v1861 = vmul.f32 %v875, 2.0
  %v1862 = vmul.f32 %v944, 2.0
  %v1863 = vmul.f32 %v946, 2.0
  %v1864 = vmul.f32 %v1015, 2.0
  %v1865 = vmul.f32 %v1017, 2.0
  %v1866 = vmul.f32 %v1086, 2.0
  %v1867 = vmul.f32 %v1088, 2.0
  %v1868 = vmul.f32 %v1157, 2.0
  %v1869 = vmul.f32 %v1159, 2.0
  %v1870 = vmul.f32 %v1228, 2.0
  %v1871 = vmul.f32 %v1230, 2.0
  %v1872 = vmul.f32 %v1299, 2.0
  %v1873 = vmul.f32 %v1301, 2.0
  %v1874 = vsub.f32 %v1846, %v1860
  %v1875 = vsub.f32 %v1847, %v1861
  %v1876 = vsub.f32 %v1848, %v1862
  %v1877 = vsub.f32 %v1849, %v1863
  %v1878 = vsub.f32 %v1850, %v1864
  %v1879 = vsub.f32 %v1851, %v1865
  %v1880 = vsub.f32 %v1852, %v1866
  %v1881 = vsub.f32 %v1853, %v1867
  %v1882 = vsub.f32 %v1854, %v1868
  %v1883 = vsub.f32 %v1855, %v1869
  %v1884 = vsub.f32 %v1856, %v1870
  %v1885 = vsub.f32 %v1857, %v1871
  %v1886 = vsub.f32 %v1858, %v1872
  %v1887 = vsub.f32 %v1859, %v1873
  %v1888 = vlaneseq
  %v1889 = vand.u32 %v1888, 127
  %v1890 = vadd.s32 %v1889, 128
  %v1891 = vadd.s32 %v1889, 256
  %v1892 = vadd.s32 %v1889, 384
  %v1893 = vadd.s32 %v1889, 512
  %v1894 = vadd.s32 %v1889, 640
  %v1895 = vadd.s32 %v1889, 768
  %v1896 = vadd.s32 %v1889, 896
  %v1897 = vadd.s32 %v1889, 1024
  %v1898 = vadd.s32 %v1889, 1152
  %v1899 = vadd.s32 %v1889, 1280
  %v1900 = vadd.s32 %v1889, 1408
  %v1901 = vadd.s32 %v1889, 1536
  %v1902 = vadd.s32 %v1889, 1664
  %vm1903 = vcmp.lt.s32.totalorder %v1889, 1680
  %vm1904 = vcmp.lt.s32.totalorder %v1890, 1680
  %vm1905 = vcmp.lt.s32.totalorder %v1891, 1680
  %vm1906 = vcmp.lt.s32.totalorder %v1892, 1680
  %vm1907 = vcmp.lt.s32.totalorder %v1893, 1680
  %vm1908 = vcmp.lt.s32.totalorder %v1894, 1680
  %vm1909 = vcmp.lt.s32.totalorder %v1895, 1680
  %vm1910 = vcmp.lt.s32.totalorder %v1896, 1680
  %vm1911 = vcmp.lt.s32.totalorder %v1897, 1680
  %vm1912 = vcmp.lt.s32.totalorder %v1898, 1680
  %vm1913 = vcmp.lt.s32.totalorder %v1899, 1680
  %vm1914 = vcmp.lt.s32.totalorder %v1900, 1680
  %vm1915 = vcmp.lt.s32.totalorder %v1901, 1680
  %vm1916 = vcmp.lt.s32.totalorder %v1902, 1680
  %v1917 = vsel %vm1903, %v1874, inf
  %v1918 = vsel %vm1904, %v1875, inf
  %v1919 = vsel %vm1905, %v1876, inf
  %v1920 = vsel %vm1906, %v1877, inf
  %v1921 = vsel %vm1907, %v1878, inf
  %v1922 = vsel %vm1908, %v1879, inf
  %v1923 = vsel %vm1909, %v1880, inf
  %v1924 = vsel %vm1910, %v1881, inf
  %v1925 = vsel %vm1911, %v1882, inf
  %v1926 = vsel %vm1912, %v1883, inf
  %v1927 = vsel %vm1913, %v1884, inf
  %v1928 = vsel %vm1914, %v1885, inf
  %v1929 = vsel %vm1915, %v1886, inf
  %v1930 = vsel %vm1916, %v1887, inf
  %vm1931 = vcmask 1041408
  %v1932 = vsel %vm1931, %v1917, inf
  %v1933 = vsel %vm1931, %v1918, inf
  %v1934 = vsel %vm1931, %v1919, inf
  %v1935 = vsel %vm1931, %v1920, inf
  %v1936 = vsel %vm1931, %v1921, inf
  %v1937 = vmin.f32 %v1932, %v1936
  %v1938 = vsel %vm1931, %v1922, inf
  %v1939 = vmin.f32 %v1933, %v1938
  %v1940 = vsel %vm1931, %v1923, inf
  %v1941 = vmin.f32 %v1934, %v1940
  %v1942 = vsel %vm1931, %v1924, inf
  %v1943 = vmin.f32 %v1935, %v1942
  %v1944 = vsel %vm1931, %v1925, inf
  %v1945 = vmin.f32 %v1937, %v1944
  %v1946 = vsel %vm1931, %v1926, inf
  %v1947 = vmin.f32 %v1939, %v1946
  %v1948 = vsel %vm1931, %v1927, inf
  %v1949 = vmin.f32 %v1941, %v1948
  %v1950 = vsel %vm1931, %v1928, inf
  %v1951 = vmin.f32 %v1943, %v1950
  %v1952 = vsel %vm1931, %v1929, inf
  %v1953 = vmin.f32 %v1945, %v1952
  %v1954 = vsel %vm1931, %v1930, inf
  %v1955 = vmin.f32 %v1947, %v1954
  %v1956 = vmin.f32 %v1953, %v1955
  %v1957 = vmin.f32 %v1949, %v1951
  %v1958 = vmin.f32 %v1956, %v1957
  %1959 = vmin.xlane.f32.xlu0 %v1958
  %v1960 = vpop.xlane.xlu0 %1959
  %vm1961 = vcmp.eq.f32.partialorder %v1917, %v1960
  %vm1962 = vcmp.eq.f32.partialorder %v1918, %v1960
  %vm1963 = vcmp.eq.f32.partialorder %v1919, %v1960
  %vm1964 = vcmp.eq.f32.partialorder %v1920, %v1960
  %vm1965 = vcmp.eq.f32.partialorder %v1921, %v1960
  %vm1966 = vcmp.eq.f32.partialorder %v1922, %v1960
  %vm1967 = vcmp.eq.f32.partialorder %v1923, %v1960
  %vm1968 = vcmp.eq.f32.partialorder %v1924, %v1960
  %vm1969 = vcmp.eq.f32.partialorder %v1925, %v1960
  %vm1970 = vcmp.eq.f32.partialorder %v1926, %v1960
  %vm1971 = vcmp.eq.f32.partialorder %v1927, %v1960
  %vm1972 = vcmp.eq.f32.partialorder %v1928, %v1960
  %vm1973 = vcmp.eq.f32.partialorder %v1929, %v1960
  %vm1974 = vcmp.eq.f32.partialorder %v1930, %v1960
  %v1975 = vsel %vm1961, %v1889, 1792
  %v1976 = vsel %vm1962, %v1890, 1792
  %v1977 = vsel %vm1963, %v1891, 1792
  %v1978 = vsel %vm1964, %v1892, 1792
  %v1979 = vsel %vm1965, %v1893, 1792
  %v1980 = vsel %vm1966, %v1894, 1792
  %v1981 = vsel %vm1967, %v1895, 1792
  %v1982 = vsel %vm1968, %v1896, 1792
  %v1983 = vsel %vm1969, %v1897, 1792
  %v1984 = vsel %vm1970, %v1898, 1792
  %v1985 = vsel %vm1971, %v1899, 1792
  %v1986 = vsel %vm1972, %v1900, 1792
  %v1987 = vsel %vm1973, %v1901, 1792
  %v1988 = vsel %vm1974, %v1902, 1792
  %v1989 = vsel %vm1931, %v1975, 2147483647
  %v1990 = vsel %vm1931, %v1976, 2147483647
  %v1991 = vsel %vm1931, %v1977, 2147483647
  %v1992 = vsel %vm1931, %v1978, 2147483647
  %v1993 = vsel %vm1931, %v1979, 2147483647
  %vm1994 = vcmp.lt.s32.totalorder %v1989, %v1993
  %v1995 = vsel %vm1994, %v1989, %v1993
  %v1996 = vsel %vm1931, %v1980, 2147483647
  %vm1997 = vcmp.lt.s32.totalorder %v1990, %v1996
  %v1998 = vsel %vm1997, %v1990, %v1996
  %v1999 = vsel %vm1931, %v1981, 2147483647
  %vm2000 = vcmp.lt.s32.totalorder %v1991, %v1999
  %v2001 = vsel %vm2000, %v1991, %v1999
  %v2002 = vsel %vm1931, %v1982, 2147483647
  %vm2003 = vcmp.lt.s32.totalorder %v1992, %v2002
  %v2004 = vsel %vm2003, %v1992, %v2002
  %v2005 = vsel %vm1931, %v1983, 2147483647
  %vm2006 = vcmp.lt.s32.totalorder %v1995, %v2005
  %v2007 = vsel %vm2006, %v1995, %v2005
  %v2008 = vsel %vm1931, %v1984, 2147483647
  %vm2009 = vcmp.lt.s32.totalorder %v1998, %v2008
  %v2010 = vsel %vm2009, %v1998, %v2008
  %v2011 = vsel %vm1931, %v1985, 2147483647
  %vm2012 = vcmp.lt.s32.totalorder %v2001, %v2011
  %v2013 = vsel %vm2012, %v2001, %v2011
  %v2014 = vsel %vm1931, %v1986, 2147483647
  %vm2015 = vcmp.lt.s32.totalorder %v2004, %v2014
  %v2016 = vsel %vm2015, %v2004, %v2014
  %v2017 = vsel %vm1931, %v1987, 2147483647
  %vm2018 = vcmp.lt.s32.totalorder %v2007, %v2017
  %v2019 = vsel %vm2018, %v2007, %v2017
  %v2020 = vsel %vm1931, %v1988, 2147483647
  %vm2021 = vcmp.lt.s32.totalorder %v2010, %v2020
  %v2022 = vsel %vm2021, %v2010, %v2020
  %vm2023 = vcmp.lt.s32.totalorder %v2019, %v2022
  %v2024 = vsel %vm2023, %v2019, %v2022
  %vm2025 = vcmp.lt.s32.totalorder %v2013, %v2016
  %v2026 = vsel %vm2025, %v2013, %v2016
  %vm2027 = vcmp.lt.s32.totalorder %v2024, %v2026
  %v2028 = vsel %vm2027, %v2024, %v2026
  %v2029 = vand.u32 %v2028, 65535
  %v2030 = vshra.s32 %v2028, 16
  %v2031 = vcvt.s32.f32 %v2029
  %v2032 = vcvt.s32.f32 %v2030
  %2033 = vmin.xlane.f32.xlu0 %v2032
  %v2034 = vpop.xlane.xlu0 %2033
  %vm2035 = vcmp.eq.f32.partialorder %v2032, %v2034
  %v2036 = vsel %vm2035, %v2031, inf
  %2037 = vmin.xlane.f32.xlu0 %v2036
  %v2038 = vpop.xlane.xlu0 %2037
  %v2039 = vcvt.f32.s32 %v2038
  %v2040 = vcvt.f32.s32 %v2034
  %v2041 = vshll.u32 %v2040, 16
  %v2042 = vadd.s32 %v2041, %v2039
  %vm2043 = vcmp.eq.s32.totalorder %v1889, %v2042
  %vm2044 = vcmp.eq.s32.totalorder %v1890, %v2042
  %vm2045 = vcmp.eq.s32.totalorder %v1891, %v2042
  %vm2046 = vcmp.eq.s32.totalorder %v1892, %v2042
  %vm2047 = vcmp.eq.s32.totalorder %v1893, %v2042
  %vm2048 = vcmp.eq.s32.totalorder %v1894, %v2042
  %vm2049 = vcmp.eq.s32.totalorder %v1895, %v2042
  %vm2050 = vcmp.eq.s32.totalorder %v1896, %v2042
  %vm2051 = vcmp.eq.s32.totalorder %v1897, %v2042
  %vm2052 = vcmp.eq.s32.totalorder %v1898, %v2042
  %vm2053 = vcmp.eq.s32.totalorder %v1899, %v2042
  %vm2054 = vcmp.eq.s32.totalorder %v1900, %v2042
  %vm2055 = vcmp.eq.s32.totalorder %v1901, %v2042
  %vm2056 = vcmp.eq.s32.totalorder %v1902, %v2042
  %v2057 = vsel %vm2043, 1, 0
  %v2058 = vsel %vm2044, 1, 0
  %v2059 = vsel %vm2045, 1, 0
  %v2060 = vsel %vm2046, 1, 0
  %v2061 = vsel %vm2047, 1, 0
  %v2062 = vsel %vm2048, 1, 0
  %v2063 = vsel %vm2049, 1, 0
  %v2064 = vsel %vm2050, 1, 0
  %v2065 = vsel %vm2051, 1, 0
  %v2066 = vsel %vm2052, 1, 0
  %v2067 = vsel %vm2053, 1, 0
  %v2068 = vsel %vm2054, 1, 0
  %v2069 = vsel %vm2055, 1, 0
  %v2070 = vsel %vm2056, 1, 0
  %v2071 = vcvt.s32.f32 %v2057
  %v2072 = vcvt.s32.f32 %v2058
  %v2073 = vcvt.s32.f32 %v2059
  %v2074 = vcvt.s32.f32 %v2060
  %v2075 = vcvt.s32.f32 %v2061
  %v2076 = vcvt.s32.f32 %v2062
  %v2077 = vcvt.s32.f32 %v2063
  %v2078 = vcvt.s32.f32 %v2064
  %v2079 = vcvt.s32.f32 %v2065
  %v2080 = vcvt.s32.f32 %v2066
  %v2081 = vcvt.s32.f32 %v2067
  %v2082 = vcvt.s32.f32 %v2068
  %v2083 = vcvt.s32.f32 %v2069
  %v2084 = vcvt.s32.f32 %v2070
  %v2085 = vmul.f32 %v2071, %v373
  %v2086 = vmul.f32 %v2072, %v375
  %v2087 = vmul.f32 %v2073, %v444
  %v2088 = vmul.f32 %v2074, %v446
  %v2089 = vmul.f32 %v2075, %v515
  %v2090 = vmul.f32 %v2076, %v517
  %v2091 = vmul.f32 %v2077, %v586
  %v2092 = vmul.f32 %v2078, %v588
  %v2093 = vmul.f32 %v2079, %v657
  %v2094 = vmul.f32 %v2080, %v659
  %v2095 = vmul.f32 %v2081, %v728
  %v2096 = vmul.f32 %v2082, %v730
  %v2097 = vmul.f32 %v2083, %v799
  %v2098 = vmul.f32 %v2084, %v801
  %v2099 = vsel %vm1931, %v2085, 0.0
  %v2100 = vsel %vm1931, %v2086, 0.0
  %v2101 = vadd.f32 %v2099, %v2100
  %v2102 = vsel %vm1931, %v2087, 0.0
  %v2103 = vadd.f32 %v2101, %v2102
  %v2104 = vsel %vm1931, %v2088, 0.0
  %v2105 = vadd.f32 %v2103, %v2104
  %v2106 = vsel %vm1931, %v2089, 0.0
  %v2107 = vadd.f32 %v2105, %v2106
  %v2108 = vsel %vm1931, %v2090, 0.0
  %v2109 = vadd.f32 %v2107, %v2108
  %v2110 = vsel %vm1931, %v2091, 0.0
  %v2111 = vadd.f32 %v2109, %v2110
  %v2112 = vsel %vm1931, %v2092, 0.0
  %v2113 = vadd.f32 %v2111, %v2112
  %v2114 = vsel %vm1931, %v2093, 0.0
  %v2115 = vadd.f32 %v2113, %v2114
  %v2116 = vsel %vm1931, %v2094, 0.0
  %v2117 = vadd.f32 %v2115, %v2116
  %v2118 = vsel %vm1931, %v2095, 0.0
  %v2119 = vadd.f32 %v2117, %v2118
  %v2120 = vsel %vm1931, %v2096, 0.0
  %v2121 = vadd.f32 %v2119, %v2120
  %v2122 = vsel %vm1931, %v2097, 0.0
  %v2123 = vadd.f32 %v2121, %v2122
  %v2124 = vsel %vm1931, %v2098, 0.0
  %v2125 = vadd.f32 %v2123, %v2124
  %2126 = vadd.xlane.f32.xlu0 %v2125
  %v2127 = vpop.xlane.xlu0 %2126
  %v2128 = vrot.slane %v2127, 4
  %v2129 = vadd.f32 %v2127, %v2128
  %v2130 = vrot.slane %v2129, 2
  %v2131 = vadd.f32 %v2129, %v2130
  %v2132 = vrot.slane %v2131, 1
  %v2133 = vadd.f32 %v2131, %v2132
  %s2134 = vtos %v2133
  %v2135 = vstv %s2134
  %v2136 = vrcp.pop 32.0
  %v2137 = vmul.f32 %v2135, %v2136
  %v2138 = vmul.f32 %v2071, %v873
  %v2139 = vmul.f32 %v2072, %v875
  %v2140 = vmul.f32 %v2073, %v944
  %v2141 = vmul.f32 %v2074, %v946
  %v2142 = vmul.f32 %v2075, %v1015
  %v2143 = vmul.f32 %v2076, %v1017
  %v2144 = vmul.f32 %v2077, %v1086
  %v2145 = vmul.f32 %v2078, %v1088
  %v2146 = vmul.f32 %v2079, %v1157
  %v2147 = vmul.f32 %v2080, %v1159
  %v2148 = vmul.f32 %v2081, %v1228
  %v2149 = vmul.f32 %v2082, %v1230
  %v2150 = vmul.f32 %v2083, %v1299
  %v2151 = vmul.f32 %v2084, %v1301
  %v2152 = vsel %vm1931, %v2138, 0.0
  %v2153 = vsel %vm1931, %v2139, 0.0
  %v2154 = vadd.f32 %v2152, %v2153
  %v2155 = vsel %vm1931, %v2140, 0.0
  %v2156 = vadd.f32 %v2154, %v2155
  %v2157 = vsel %vm1931, %v2141, 0.0
  %v2158 = vadd.f32 %v2156, %v2157
  %v2159 = vsel %vm1931, %v2142, 0.0
  %v2160 = vadd.f32 %v2158, %v2159
  %v2161 = vsel %vm1931, %v2143, 0.0
  %v2162 = vadd.f32 %v2160, %v2161
  %v2163 = vsel %vm1931, %v2144, 0.0
  %v2164 = vadd.f32 %v2162, %v2163
  %v2165 = vsel %vm1931, %v2145, 0.0
  %v2166 = vadd.f32 %v2164, %v2165
  %v2167 = vsel %vm1931, %v2146, 0.0
  %v2168 = vadd.f32 %v2166, %v2167
  %v2169 = vsel %vm1931, %v2147, 0.0
  %v2170 = vadd.f32 %v2168, %v2169
  %v2171 = vsel %vm1931, %v2148, 0.0
  %v2172 = vadd.f32 %v2170, %v2171
  %v2173 = vsel %vm1931, %v2149, 0.0
  %v2174 = vadd.f32 %v2172, %v2173
  %v2175 = vsel %vm1931, %v2150, 0.0
  %v2176 = vadd.f32 %v2174, %v2175
  %v2177 = vsel %vm1931, %v2151, 0.0
  %v2178 = vadd.f32 %v2176, %v2177
  %2179 = vadd.xlane.f32.xlu0 %v2178
  %v2180 = vpop.xlane.xlu0 %2179
  %v2181 = vrot.slane %v2180, 4
  %v2182 = vadd.f32 %v2180, %v2181
  %v2183 = vrot.slane %v2182, 2
  %v2184 = vadd.f32 %v2182, %v2183
  %v2185 = vrot.slane %v2184, 1
  %v2186 = vadd.f32 %v2184, %v2185
  %s2187 = vtos %v2186
  %v2188 = vstv %s2187
  %v2189 = vrcp.pop 8.0
  %v2190 = vmul.f32 %v2188, %v2189
  %v2191 = vsub.f32 1.0, %v2190
  %v2192 = vld [vmem:[%s8] sm:$0xff]
  %v2193 = vld [vmem:[%s8 + $0x8] sm:$0xff]
  %v2194 = vld [vmem:[%s8 + $0x10] sm:$0xff]
  %v2195 = vld [vmem:[%s8 + $0x18] sm:$0xff]
  %v2196 = vld [vmem:[%s8 + $0x20] sm:$0xff]
  %v2197 = vld [vmem:[%s8 + $0x28] sm:$0xff]
  %v2198 = vld [vmem:[%s8 + $0x30] sm:$0xff]
  %v2199 = vld [vmem:[%s8 + $0x38] sm:$0xff]
  %v2200 = vld [vmem:[%s8 + $0x40] sm:$0xff]
  %v2201 = vld [vmem:[%s8 + $0x48] sm:$0xff]
  %v2202 = vld [vmem:[%s8 + $0x50] sm:$0xff]
  %v2203 = vld [vmem:[%s8 + $0x58] sm:$0xff]
  %v2204 = vld [vmem:[%s8 + $0x60] sm:$0xff]
  %v2205 = vld [vmem:[%s8 + $0x68] sm:$0xff]
  %v2206 = vld [vmem:[%s8 + $0x70] sm:$0xff]
  %v2207 = vld [vmem:[%s8 + $0x78] sm:$0xff]
  %v2208 = vld [vmem:[%s8 + $0x80] sm:$0xff]
  %v2209 = vld [vmem:[%s8 + $0x88] sm:$0xff]
  %v2210 = vld [vmem:[%s8 + $0x90] sm:$0xff]
  %v2211 = vld [vmem:[%s8 + $0x98] sm:$0xff]
  %v2212 = vld [vmem:[%s8 + $0xa0] sm:$0xff]
  %v2213 = vld [vmem:[%s8 + $0xa8] sm:$0xff]
  %v2214 = vld [vmem:[%s8 + $0xb0] sm:$0xff]
  %v2215 = vld [vmem:[%s8 + $0xb8] sm:$0xff]
  %v2216 = vld [vmem:[%s8 + $0xc0] sm:$0xff]
  %v2217 = vld [vmem:[%s8 + $0xc8] sm:$0xff]
  %v2218 = vld [vmem:[%s8 + $0xd0] sm:$0xff]
  %v2219 = vld [vmem:[%s8 + $0xd8] sm:$0xff]
  %v2220 = vld [vmem:[%s8 + $0xe0] sm:$0xff]
  %v2221 = vld [vmem:[%s8 + $0xe8] sm:$0xff]
  %v2222 = vld [vmem:[%s8 + $0xf0] sm:$0xff]
  %v2223 = vld [vmem:[%s8 + $0xf8] sm:$0xff]
  %v2224 = vld [vmem:[%s8 + $0x100] sm:$0xff]
  %v2225 = vld [vmem:[%s8 + $0x108] sm:$0xff]
  %v2226 = vld [vmem:[%s8 + $0x110] sm:$0xff]
  %v2227 = vld [vmem:[%s8 + $0x118] sm:$0xff]
  %v2228 = vld [vmem:[%s8 + $0x120] sm:$0xff]
  %v2229 = vld [vmem:[%s8 + $0x128] sm:$0xff]
  %v2230 = vld [vmem:[%s8 + $0x130] sm:$0xff]
  %v2231 = vld [vmem:[%s8 + $0x138] sm:$0xff]
  %v2232 = vld [vmem:[%s8 + $0x140] sm:$0xff]
  %v2233 = vld [vmem:[%s8 + $0x148] sm:$0xff]
  %v2234 = vld [vmem:[%s8 + $0x150] sm:$0xff]
  %v2235 = vld [vmem:[%s8 + $0x158] sm:$0xff]
  %v2236 = vld [vmem:[%s8 + $0x160] sm:$0xff]
  %v2237 = vld [vmem:[%s8 + $0x168] sm:$0xff]
  %v2238 = vld [vmem:[%s8 + $0x170] sm:$0xff]
  %v2239 = vld [vmem:[%s8 + $0x178] sm:$0xff]
  %v2240 = vld [vmem:[%s8 + $0x180] sm:$0xff]
  %v2241 = vld [vmem:[%s8 + $0x188] sm:$0xff]
  %v2242 = vld [vmem:[%s8 + $0x190] sm:$0xff]
  %v2243 = vld [vmem:[%s8 + $0x198] sm:$0xff]
  %v2244 = vld [vmem:[%s8 + $0x1a0] sm:$0xff]
  %v2245 = vld [vmem:[%s8 + $0x1a8] sm:$0xff]
  %v2246 = vld [vmem:[%s8 + $0x1b0] sm:$0xff]
  %v2247 = vld [vmem:[%s8 + $0x1b8] sm:$0xff]
  %v2248 = vld [vmem:[%s8 + $0x1c0] sm:$0xff]
  %v2249 = vld [vmem:[%s8 + $0x1c8] sm:$0xff]
  %v2250 = vld [vmem:[%s8 + $0x1d0] sm:$0xff]
  %v2251 = vld [vmem:[%s8 + $0x1d8] sm:$0xff]
  %v2252 = vld [vmem:[%s8 + $0x1e0] sm:$0xff]
  %v2253 = vld [vmem:[%s8 + $0x1e8] sm:$0xff]
  %v2254 = vld [vmem:[%s8 + $0x1f0] sm:$0xff]
  %v2255 = vld [vmem:[%s8 + $0x1f8] sm:$0xff]
  %v2256 = vld [vmem:[%s8 + $0x200] sm:$0xff]
  %v2257 = vld [vmem:[%s8 + $0x208] sm:$0xff]
  %v2258 = vld [vmem:[%s8 + $0x210] sm:$0xff]
  %v2259 = vld [vmem:[%s8 + $0x218] sm:$0xff]
  %v2260 = vld [vmem:[%s8 + $0x220] sm:$0xff]
  %v2261 = vld [vmem:[%s8 + $0x228] sm:$0xff]
  %v2262 = vld [vmem:[%s8 + $0x230] sm:$0xff]
  %v2263 = vld [vmem:[%s8 + $0x238] sm:$0xff]
  %v2264 = vld [vmem:[%s8 + $0x240] sm:$0xff]
  %v2265 = vld [vmem:[%s8 + $0x248] sm:$0xff]
  %v2266 = vld [vmem:[%s8 + $0x250] sm:$0xff]
  %v2267 = vld [vmem:[%s8 + $0x258] sm:$0xff]
  %v2268 = vld [vmem:[%s8 + $0x260] sm:$0xff]
  %v2269 = vld [vmem:[%s8 + $0x268] sm:$0xff]
  %v2270 = vld [vmem:[%s8 + $0x270] sm:$0xff]
  %v2271 = vld [vmem:[%s8 + $0x278] sm:$0xff]
  %v2272 = vld [vmem:[%s8 + $0x280] sm:$0xff]
  %v2273 = vld [vmem:[%s8 + $0x288] sm:$0xff]
  %v2274 = vld [vmem:[%s8 + $0x290] sm:$0xff]
  %v2275 = vld [vmem:[%s8 + $0x298] sm:$0xff]
  %v2276 = vld [vmem:[%s8 + $0x2a0] sm:$0xff]
  %v2277 = vld [vmem:[%s8 + $0x2a8] sm:$0xff]
  %v2278 = vld [vmem:[%s8 + $0x2b0] sm:$0xff]
  %v2279 = vld [vmem:[%s8 + $0x2b8] sm:$0xff]
  %v2280 = vld [vmem:[%s8 + $0x2c0] sm:$0xff]
  %v2281 = vld [vmem:[%s8 + $0x2c8] sm:$0xff]
  %v2282 = vld [vmem:[%s8 + $0x2d0] sm:$0xff]
  %v2283 = vld [vmem:[%s8 + $0x2d8] sm:$0xff]
  %v2284 = vld [vmem:[%s8 + $0x2e0] sm:$0xff]
  %v2285 = vld [vmem:[%s8 + $0x2e8] sm:$0xff]
  %v2286 = vld [vmem:[%s8 + $0x2f0] sm:$0xff]
  %v2287 = vld [vmem:[%s8 + $0x2f8] sm:$0xff]
  %v2288 = vld [vmem:[%s8 + $0x300] sm:$0xff]
  %v2289 = vld [vmem:[%s8 + $0x308] sm:$0xff]
  %v2290 = vld [vmem:[%s8 + $0x310] sm:$0xff]
  %v2291 = vld [vmem:[%s8 + $0x318] sm:$0xff]
  %v2292 = vld [vmem:[%s8 + $0x320] sm:$0xff]
  %v2293 = vld [vmem:[%s8 + $0x328] sm:$0xff]
  %v2294 = vld [vmem:[%s8 + $0x330] sm:$0xff]
  %v2295 = vld [vmem:[%s8 + $0x338] sm:$0xff]
  %v2296 = vld [vmem:[%s8 + $0x340] sm:$0xff]
  %v2297 = vld [vmem:[%s8 + $0x348] sm:$0xff]
  %v2298 = vld [vmem:[%s8 + $0x350] sm:$0xff]
  %v2299 = vld [vmem:[%s8 + $0x358] sm:$0xff]
  %v2300 = vld [vmem:[%s8 + $0x360] sm:$0xff]
  %v2301 = vld [vmem:[%s8 + $0x368] sm:$0xff]
  %v2302 = vld [vmem:[%s8 + $0x370] sm:$0xff]
  %v2303 = vld [vmem:[%s8 + $0x378] sm:$0xff]
  %v2304 = vld [vmem:[%s8 + $0x380] sm:$0xff]
  %v2305 = vld [vmem:[%s8 + $0x388] sm:$0xff]
  %v2306 = vld [vmem:[%s8 + $0x390] sm:$0xff]
  %v2307 = vld [vmem:[%s8 + $0x398] sm:$0xff]
  %v2308 = vld [vmem:[%s8 + $0x3a0] sm:$0xff]
  %v2309 = vld [vmem:[%s8 + $0x3a8] sm:$0xff]
  %v2310 = vld [vmem:[%s8 + $0x3b0] sm:$0xff]
  %v2311 = vld [vmem:[%s8 + $0x3b8] sm:$0xff]
  %v2312 = vld [vmem:[%s8 + $0x3c0] sm:$0xff]
  %v2313 = vld [vmem:[%s8 + $0x3c8] sm:$0xff]
  %v2314 = vld [vmem:[%s8 + $0x3d0] sm:$0xff]
  %v2315 = vld [vmem:[%s8 + $0x3d8] sm:$0xff]
  %v2316 = vld [vmem:[%s8 + $0x3e0] sm:$0xff]
  %v2317 = vld [vmem:[%s8 + $0x3e8] sm:$0xff]
  %v2318 = vld [vmem:[%s8 + $0x3f0] sm:$0xff]
  %v2319 = vld [vmem:[%s8 + $0x3f8] sm:$0xff]
  %v2320 = vld [vmem:[%s8 + $0x400] sm:$0xff]
  %v2321 = vld [vmem:[%s8 + $0x408] sm:$0xff]
  %v2322 = vld [vmem:[%s8 + $0x410] sm:$0xff]
  %v2323 = vld [vmem:[%s8 + $0x418] sm:$0xff]
  %v2324 = vld [vmem:[%s8 + $0x420] sm:$0xff]
  %v2325 = vld [vmem:[%s8 + $0x428] sm:$0xff]
  %v2326 = vld [vmem:[%s8 + $0x430] sm:$0xff]
  %v2327 = vld [vmem:[%s8 + $0x438] sm:$0xff]
  %v2328 = vld [vmem:[%s8 + $0x440] sm:$0xff]
  %v2329 = vld [vmem:[%s8 + $0x448] sm:$0xff]
  %v2330 = vld [vmem:[%s8 + $0x450] sm:$0xff]
  %v2331 = vld [vmem:[%s8 + $0x458] sm:$0xff]
  %v2332 = vld [vmem:[%s8 + $0x460] sm:$0xff]
  %v2333 = vld [vmem:[%s8 + $0x468] sm:$0xff]
  %v2334 = vld [vmem:[%s8 + $0x470] sm:$0xff]
  %v2335 = vld [vmem:[%s8 + $0x478] sm:$0xff]
  %v2336 = vld [vmem:[%s8 + $0x480] sm:$0xff]
  %v2337 = vld [vmem:[%s8 + $0x488] sm:$0xff]
  %v2338 = vld [vmem:[%s8 + $0x490] sm:$0xff]
  %v2339 = vld [vmem:[%s8 + $0x498] sm:$0xff]
  %v2340 = vld [vmem:[%s8 + $0x4a0] sm:$0xff]
  %v2341 = vld [vmem:[%s8 + $0x4a8] sm:$0xff]
  %v2342 = vld [vmem:[%s8 + $0x4b0] sm:$0xff]
  %v2343 = vld [vmem:[%s8 + $0x4b8] sm:$0xff]
  %v2344 = vld [vmem:[%s8 + $0x4c0] sm:$0xff]
  %v2345 = vld [vmem:[%s8 + $0x4c8] sm:$0xff]
  %v2346 = vld [vmem:[%s8 + $0x4d0] sm:$0xff]
  %v2347 = vld [vmem:[%s8 + $0x4d8] sm:$0xff]
  %v2348 = vld [vmem:[%s8 + $0x4e0] sm:$0xff]
  %v2349 = vld [vmem:[%s8 + $0x4e8] sm:$0xff]
  %v2350 = vld [vmem:[%s8 + $0x4f0] sm:$0xff]
  %v2351 = vld [vmem:[%s8 + $0x4f8] sm:$0xff]
  %v2352 = vld [vmem:[%s8 + $0x500] sm:$0xff]
  %v2353 = vld [vmem:[%s8 + $0x508] sm:$0xff]
  %v2354 = vld [vmem:[%s8 + $0x510] sm:$0xff]
  %v2355 = vld [vmem:[%s8 + $0x518] sm:$0xff]
  %v2356 = vld [vmem:[%s8 + $0x520] sm:$0xff]
  %v2357 = vld [vmem:[%s8 + $0x528] sm:$0xff]
  %v2358 = vld [vmem:[%s8 + $0x530] sm:$0xff]
  %v2359 = vld [vmem:[%s8 + $0x538] sm:$0xff]
  %v2360 = vld [vmem:[%s8 + $0x540] sm:$0xff]
  %v2361 = vld [vmem:[%s8 + $0x548] sm:$0xff]
  %v2362 = vld [vmem:[%s8 + $0x550] sm:$0xff]
  %v2363 = vld [vmem:[%s8 + $0x558] sm:$0xff]
  %v2364 = vld [vmem:[%s8 + $0x560] sm:$0xff]
  %v2365 = vld [vmem:[%s8 + $0x568] sm:$0xff]
  %v2366 = vld [vmem:[%s8 + $0x570] sm:$0xff]
  %v2367 = vld [vmem:[%s8 + $0x578] sm:$0xff]
  %v2368 = vld [vmem:[%s8 + $0x580] sm:$0xff]
  %v2369 = vld [vmem:[%s8 + $0x588] sm:$0xff]
  %v2370 = vld [vmem:[%s8 + $0x590] sm:$0xff]
  %v2371 = vld [vmem:[%s8 + $0x598] sm:$0xff]
  %v2372 = vld [vmem:[%s8 + $0x5a0] sm:$0xff]
  %v2373 = vld [vmem:[%s8 + $0x5a8] sm:$0xff]
  %v2374 = vld [vmem:[%s8 + $0x5b0] sm:$0xff]
  %v2375 = vld [vmem:[%s8 + $0x5b8] sm:$0xff]
  %v2376 = vld [vmem:[%s8 + $0x5c0] sm:$0xff]
  %v2377 = vld [vmem:[%s8 + $0x5c8] sm:$0xff]
  %v2378 = vld [vmem:[%s8 + $0x5d0] sm:$0xff]
  %v2379 = vld [vmem:[%s8 + $0x5d8] sm:$0xff]
  %v2380 = vld [vmem:[%s8 + $0x5e0] sm:$0xff]
  %v2381 = vld [vmem:[%s8 + $0x5e8] sm:$0xff]
  %v2382 = vld [vmem:[%s8 + $0x5f0] sm:$0xff]
  %v2383 = vld [vmem:[%s8 + $0x5f8] sm:$0xff]
  %v2384 = vld [vmem:[%s8 + $0x600] sm:$0xff]
  %v2385 = vld [vmem:[%s8 + $0x608] sm:$0xff]
  %v2386 = vld [vmem:[%s8 + $0x610] sm:$0xff]
  %v2387 = vld [vmem:[%s8 + $0x618] sm:$0xff]
  %v2388 = vld [vmem:[%s8 + $0x620] sm:$0xff]
  %v2389 = vld [vmem:[%s8 + $0x628] sm:$0xff]
  %v2390 = vld [vmem:[%s8 + $0x630] sm:$0xff]
  %v2391 = vld [vmem:[%s8 + $0x638] sm:$0xff]
  %v2392 = vld [vmem:[%s8 + $0x640] sm:$0xff]
  %v2393 = vld [vmem:[%s8 + $0x648] sm:$0xff]
  %v2394 = vld [vmem:[%s8 + $0x650] sm:$0xff]
  %v2395 = vld [vmem:[%s8 + $0x658] sm:$0xff]
  %v2396 = vld [vmem:[%s8 + $0x660] sm:$0xff]
  %v2397 = vld [vmem:[%s8 + $0x668] sm:$0xff]
  %v2398 = vld [vmem:[%s8 + $0x670] sm:$0xff]
  %v2399 = vld [vmem:[%s8 + $0x678] sm:$0xff]
  %v2400 = vld [vmem:[%s8 + $0x680] sm:$0xff]
  %v2401 = vld [vmem:[%s8 + $0x688] sm:$0xff]
  %v2402 = vld [vmem:[%s8 + $0x690] sm:$0xff]
  %v2403 = vld [vmem:[%s8 + $0x698] sm:$0xff]
  %v2404 = vld [vmem:[%s8 + $0x6a0] sm:$0xff]
  %v2405 = vld [vmem:[%s8 + $0x6a8] sm:$0xff]
  %v2406 = vld [vmem:[%s8 + $0x6b0] sm:$0xff]
  %v2407 = vld [vmem:[%s8 + $0x6b8] sm:$0xff]
  %v2408 = vld [vmem:[%s8 + $0x6c0] sm:$0xff]
  %v2409 = vld [vmem:[%s8 + $0x6c8] sm:$0xff]
  %v2410 = vld [vmem:[%s8 + $0x6d0] sm:$0xff]
  %v2411 = vld [vmem:[%s8 + $0x6d8] sm:$0xff]
  %v2412 = vld [vmem:[%s8 + $0x6e0] sm:$0xff]
  %v2413 = vld [vmem:[%s8 + $0x6e8] sm:$0xff]
  %v2414 = vld [vmem:[%s8 + $0x6f0] sm:$0xff]
  %v2415 = vld [vmem:[%s8 + $0x6f8] sm:$0xff]
  %2416 = vmatprep.subr.mxu0 0.0
  %2417 = vmatpush1.msra.mxu0 %v2192
  %2418 = vmatprep.subr.mxu0 0.0
  %2419 = vmatpush1.msra.mxu0 %v2193
  %2420 = vmatprep.subr.mxu0 0.0
  %2421 = vmatpush1.msra.mxu0 %v2194
  %2422 = vmatprep.subr.mxu0 0.0
  %2423 = vmatpush1.msra.mxu0 %v2195
  %2424 = vmatprep.subr.mxu0 0.0
  %2425 = vmatpush1.msra.mxu0 %v2196
  %2426 = vmatprep.subr.mxu0 0.0
  %2427 = vmatpush1.msra.mxu0 %v2197
  %2428 = vmatprep.subr.mxu0 0.0
  %2429 = vmatpush1.msra.mxu0 %v2198
  %2430 = vmatprep.subr.mxu0 0.0
  %2431 = vmatpush1.msra.mxu0 %v2199
  %2432 = vmatprep.subr.mxu0 0.0
  %2433 = vmatpush1.msra.mxu0 %v2200
  %2434 = vmatprep.subr.mxu0 0.0
  %2435 = vmatpush1.msra.mxu0 %v2201
  %2436 = vmatprep.subr.mxu0 0.0
  %2437 = vmatpush1.msra.mxu0 %v2202
  %2438 = vmatprep.subr.mxu0 0.0
  %2439 = vmatpush1.msra.mxu0 %v2203
  %2440 = vmatprep.subr.mxu0 0.0
  %2441 = vmatpush1.msra.mxu0 %v2204
  %2442 = vmatprep.subr.mxu0 0.0
  %2443 = vmatpush1.msra.mxu0 %v2205
  %2444 = vmatprep.subr.mxu0 0.0
  %2445 = vmatpush1.msra.mxu0 %v2206
  %2446 = vmatprep.subr.mxu0 0.0
  %2447 = vmatpush1.msra.mxu0 %v2207
  %2448 = vmatprep.subr.mxu0 0.0
  %2449 = vmatpush1.msra.mxu0 %v2208
  %2450 = vmatprep.subr.mxu0 0.0
  %2451 = vmatpush1.msra.mxu0 %v2209
  %2452 = vmatprep.subr.mxu0 0.0
  %2453 = vmatpush1.msra.mxu0 %v2210
  %2454 = vmatprep.subr.mxu0 0.0
  %2455 = vmatpush1.msra.mxu0 %v2211
  %2456 = vmatprep.subr.mxu0 0.0
  %2457 = vmatpush1.msra.mxu0 %v2212
  %2458 = vmatprep.subr.mxu0 0.0
  %2459 = vmatpush1.msra.mxu0 %v2213
  %2460 = vmatprep.subr.mxu0 0.0
  %2461 = vmatpush1.msra.mxu0 %v2214
  %2462 = vmatprep.subr.mxu0 0.0
  %2463 = vmatpush1.msra.mxu0 %v2215
  %2464 = vmatprep.subr.mxu0 0.0
  %2465 = vmatpush1.msra.mxu0 %v2216
  %2466 = vmatprep.subr.mxu0 0.0
  %2467 = vmatpush1.msra.mxu0 %v2217
  %2468 = vmatprep.subr.mxu0 0.0
  %2469 = vmatpush1.msra.mxu0 %v2218
  %2470 = vmatprep.subr.mxu0 0.0
  %2471 = vmatpush1.msra.mxu0 %v2219
  %2472 = vmatprep.subr.mxu0 0.0
  %2473 = vmatpush1.msra.mxu0 %v2220
  %2474 = vmatprep.subr.mxu0 0.0
  %2475 = vmatpush1.msra.mxu0 %v2221
  %2476 = vmatprep.subr.mxu0 0.0
  %2477 = vmatpush1.msra.mxu0 %v2222
  %2478 = vmatprep.subr.mxu0 0.0
  %2479 = vmatpush1.msra.mxu0 %v2223
  %2480 = vmatprep.mubr.f32.mxu0 %v2072
  %2481 = vmatmul.mubr.f32.gmra.mrb[0].mxu0 %v2071
  %v2482 = vpop.f32.mrb[0].mxu0
  %v2483 = vadd.f32 0.0, %v2482
  %v2484 = vpop.f32.mrb[0].mxu0
  %2485 = vdwg.mxu0
  %2486 = vmatprep.subr.mxu0 0.0
  %2487 = vmatpush1.msra.mxu0 %v2224
  %2488 = vmatprep.subr.mxu0 0.0
  %2489 = vmatpush1.msra.mxu0 %v2225
  %2490 = vmatprep.subr.mxu0 0.0
  %2491 = vmatpush1.msra.mxu0 %v2226
  %2492 = vmatprep.subr.mxu0 0.0
  %2493 = vmatpush1.msra.mxu0 %v2227
  %2494 = vmatprep.subr.mxu0 0.0
  %2495 = vmatpush1.msra.mxu0 %v2228
  %2496 = vmatprep.subr.mxu0 0.0
  %2497 = vmatpush1.msra.mxu0 %v2229
  %2498 = vmatprep.subr.mxu0 0.0
  %2499 = vmatpush1.msra.mxu0 %v2230
  %2500 = vmatprep.subr.mxu0 0.0
  %2501 = vmatpush1.msra.mxu0 %v2231
  %2502 = vmatprep.subr.mxu0 0.0
  %2503 = vmatpush1.msra.mxu0 %v2232
  %2504 = vmatprep.subr.mxu0 0.0
  %2505 = vmatpush1.msra.mxu0 %v2233
  %2506 = vmatprep.subr.mxu0 0.0
  %2507 = vmatpush1.msra.mxu0 %v2234
  %2508 = vmatprep.subr.mxu0 0.0
  %2509 = vmatpush1.msra.mxu0 %v2235
  %2510 = vmatprep.subr.mxu0 0.0
  %2511 = vmatpush1.msra.mxu0 %v2236
  %2512 = vmatprep.subr.mxu0 0.0
  %2513 = vmatpush1.msra.mxu0 %v2237
  %2514 = vmatprep.subr.mxu0 0.0
  %2515 = vmatpush1.msra.mxu0 %v2238
  %2516 = vmatprep.subr.mxu0 0.0
  %2517 = vmatpush1.msra.mxu0 %v2239
  %2518 = vmatprep.subr.mxu0 0.0
  %2519 = vmatpush1.msra.mxu0 %v2240
  %2520 = vmatprep.subr.mxu0 0.0
  %2521 = vmatpush1.msra.mxu0 %v2241
  %2522 = vmatprep.subr.mxu0 0.0
  %2523 = vmatpush1.msra.mxu0 %v2242
  %2524 = vmatprep.subr.mxu0 0.0
  %2525 = vmatpush1.msra.mxu0 %v2243
  %2526 = vmatprep.subr.mxu0 0.0
  %2527 = vmatpush1.msra.mxu0 %v2244
  %2528 = vmatprep.subr.mxu0 0.0
  %2529 = vmatpush1.msra.mxu0 %v2245
  %2530 = vmatprep.subr.mxu0 0.0
  %2531 = vmatpush1.msra.mxu0 %v2246
  %2532 = vmatprep.subr.mxu0 0.0
  %2533 = vmatpush1.msra.mxu0 %v2247
  %2534 = vmatprep.subr.mxu0 0.0
  %2535 = vmatpush1.msra.mxu0 %v2248
  %2536 = vmatprep.subr.mxu0 0.0
  %2537 = vmatpush1.msra.mxu0 %v2249
  %2538 = vmatprep.subr.mxu0 0.0
  %2539 = vmatpush1.msra.mxu0 %v2250
  %2540 = vmatprep.subr.mxu0 0.0
  %2541 = vmatpush1.msra.mxu0 %v2251
  %2542 = vmatprep.subr.mxu0 0.0
  %2543 = vmatpush1.msra.mxu0 %v2252
  %2544 = vmatprep.subr.mxu0 0.0
  %2545 = vmatpush1.msra.mxu0 %v2253
  %2546 = vmatprep.subr.mxu0 0.0
  %2547 = vmatpush1.msra.mxu0 %v2254
  %2548 = vmatprep.subr.mxu0 0.0
  %2549 = vmatpush1.msra.mxu0 %v2255
  %2550 = vmatprep.mubr.f32.mxu0 %v2074
  %2551 = vmatmul.mubr.f32.gmra.mrb[0].mxu0 %v2073
  %v2552 = vpop.f32.mrb[0].mxu0
  %v2553 = vadd.f32 %v2483, %v2552
  %v2554 = vpop.f32.mrb[0].mxu0
  %2555 = vdwg.mxu0
  %2556 = vmatprep.subr.mxu0 0.0
  %2557 = vmatpush1.msra.mxu0 %v2256
  %2558 = vmatprep.subr.mxu0 0.0
  %2559 = vmatpush1.msra.mxu0 %v2257
  %2560 = vmatprep.subr.mxu0 0.0
  %2561 = vmatpush1.msra.mxu0 %v2258
  %2562 = vmatprep.subr.mxu0 0.0
  %2563 = vmatpush1.msra.mxu0 %v2259
  %2564 = vmatprep.subr.mxu0 0.0
  %2565 = vmatpush1.msra.mxu0 %v2260
  %2566 = vmatprep.subr.mxu0 0.0
  %2567 = vmatpush1.msra.mxu0 %v2261
  %2568 = vmatprep.subr.mxu0 0.0
  %2569 = vmatpush1.msra.mxu0 %v2262
  %2570 = vmatprep.subr.mxu0 0.0
  %2571 = vmatpush1.msra.mxu0 %v2263
  %2572 = vmatprep.subr.mxu0 0.0
  %2573 = vmatpush1.msra.mxu0 %v2264
  %2574 = vmatprep.subr.mxu0 0.0
  %2575 = vmatpush1.msra.mxu0 %v2265
  %2576 = vmatprep.subr.mxu0 0.0
  %2577 = vmatpush1.msra.mxu0 %v2266
  %2578 = vmatprep.subr.mxu0 0.0
  %2579 = vmatpush1.msra.mxu0 %v2267
  %2580 = vmatprep.subr.mxu0 0.0
  %2581 = vmatpush1.msra.mxu0 %v2268
  %2582 = vmatprep.subr.mxu0 0.0
  %2583 = vmatpush1.msra.mxu0 %v2269
  %2584 = vmatprep.subr.mxu0 0.0
  %2585 = vmatpush1.msra.mxu0 %v2270
  %2586 = vmatprep.subr.mxu0 0.0
  %2587 = vmatpush1.msra.mxu0 %v2271
  %2588 = vmatprep.subr.mxu0 0.0
  %2589 = vmatpush1.msra.mxu0 %v2272
  %2590 = vmatprep.subr.mxu0 0.0
  %2591 = vmatpush1.msra.mxu0 %v2273
  %2592 = vmatprep.subr.mxu0 0.0
  %2593 = vmatpush1.msra.mxu0 %v2274
  %2594 = vmatprep.subr.mxu0 0.0
  %2595 = vmatpush1.msra.mxu0 %v2275
  %2596 = vmatprep.subr.mxu0 0.0
  %2597 = vmatpush1.msra.mxu0 %v2276
  %2598 = vmatprep.subr.mxu0 0.0
  %2599 = vmatpush1.msra.mxu0 %v2277
  %2600 = vmatprep.subr.mxu0 0.0
  %2601 = vmatpush1.msra.mxu0 %v2278
  %2602 = vmatprep.subr.mxu0 0.0
  %2603 = vmatpush1.msra.mxu0 %v2279
  %2604 = vmatprep.subr.mxu0 0.0
  %2605 = vmatpush1.msra.mxu0 %v2280
  %2606 = vmatprep.subr.mxu0 0.0
  %2607 = vmatpush1.msra.mxu0 %v2281
  %2608 = vmatprep.subr.mxu0 0.0
  %2609 = vmatpush1.msra.mxu0 %v2282
  %2610 = vmatprep.subr.mxu0 0.0
  %2611 = vmatpush1.msra.mxu0 %v2283
  %2612 = vmatprep.subr.mxu0 0.0
  %2613 = vmatpush1.msra.mxu0 %v2284
  %2614 = vmatprep.subr.mxu0 0.0
  %2615 = vmatpush1.msra.mxu0 %v2285
  %2616 = vmatprep.subr.mxu0 0.0
  %2617 = vmatpush1.msra.mxu0 %v2286
  %2618 = vmatprep.subr.mxu0 0.0
  %2619 = vmatpush1.msra.mxu0 %v2287
  %2620 = vmatprep.mubr.f32.mxu0 %v2076
  %2621 = vmatmul.mubr.f32.gmra.mrb[0].mxu0 %v2075
  %v2622 = vpop.f32.mrb[0].mxu0
  %v2623 = vadd.f32 %v2553, %v2622
  %v2624 = vpop.f32.mrb[0].mxu0
  %2625 = vdwg.mxu0
  %2626 = vmatprep.subr.mxu0 0.0
  %2627 = vmatpush1.msra.mxu0 %v2288
  %2628 = vmatprep.subr.mxu0 0.0
  %2629 = vmatpush1.msra.mxu0 %v2289
  %2630 = vmatprep.subr.mxu0 0.0
  %2631 = vmatpush1.msra.mxu0 %v2290
  %2632 = vmatprep.subr.mxu0 0.0
  %2633 = vmatpush1.msra.mxu0 %v2291
  %2634 = vmatprep.subr.mxu0 0.0
  %2635 = vmatpush1.msra.mxu0 %v2292
  %2636 = vmatprep.subr.mxu0 0.0
  %2637 = vmatpush1.msra.mxu0 %v2293
  %2638 = vmatprep.subr.mxu0 0.0
  %2639 = vmatpush1.msra.mxu0 %v2294
  %2640 = vmatprep.subr.mxu0 0.0
  %2641 = vmatpush1.msra.mxu0 %v2295
  %2642 = vmatprep.subr.mxu0 0.0
  %2643 = vmatpush1.msra.mxu0 %v2296
  %2644 = vmatprep.subr.mxu0 0.0
  %2645 = vmatpush1.msra.mxu0 %v2297
  %2646 = vmatprep.subr.mxu0 0.0
  %2647 = vmatpush1.msra.mxu0 %v2298
  %2648 = vmatprep.subr.mxu0 0.0
  %2649 = vmatpush1.msra.mxu0 %v2299
  %2650 = vmatprep.subr.mxu0 0.0
  %2651 = vmatpush1.msra.mxu0 %v2300
  %2652 = vmatprep.subr.mxu0 0.0
  %2653 = vmatpush1.msra.mxu0 %v2301
  %2654 = vmatprep.subr.mxu0 0.0
  %2655 = vmatpush1.msra.mxu0 %v2302
  %2656 = vmatprep.subr.mxu0 0.0
  %2657 = vmatpush1.msra.mxu0 %v2303
  %2658 = vmatprep.subr.mxu0 0.0
  %2659 = vmatpush1.msra.mxu0 %v2304
  %2660 = vmatprep.subr.mxu0 0.0
  %2661 = vmatpush1.msra.mxu0 %v2305
  %2662 = vmatprep.subr.mxu0 0.0
  %2663 = vmatpush1.msra.mxu0 %v2306
  %2664 = vmatprep.subr.mxu0 0.0
  %2665 = vmatpush1.msra.mxu0 %v2307
  %2666 = vmatprep.subr.mxu0 0.0
  %2667 = vmatpush1.msra.mxu0 %v2308
  %2668 = vmatprep.subr.mxu0 0.0
  %2669 = vmatpush1.msra.mxu0 %v2309
  %2670 = vmatprep.subr.mxu0 0.0
  %2671 = vmatpush1.msra.mxu0 %v2310
  %2672 = vmatprep.subr.mxu0 0.0
  %2673 = vmatpush1.msra.mxu0 %v2311
  %2674 = vmatprep.subr.mxu0 0.0
  %2675 = vmatpush1.msra.mxu0 %v2312
  %2676 = vmatprep.subr.mxu0 0.0
  %2677 = vmatpush1.msra.mxu0 %v2313
  %2678 = vmatprep.subr.mxu0 0.0
  %2679 = vmatpush1.msra.mxu0 %v2314
  %2680 = vmatprep.subr.mxu0 0.0
  %2681 = vmatpush1.msra.mxu0 %v2315
  %2682 = vmatprep.subr.mxu0 0.0
  %2683 = vmatpush1.msra.mxu0 %v2316
  %2684 = vmatprep.subr.mxu0 0.0
  %2685 = vmatpush1.msra.mxu0 %v2317
  %2686 = vmatprep.subr.mxu0 0.0
  %2687 = vmatpush1.msra.mxu0 %v2318
  %2688 = vmatprep.subr.mxu0 0.0
  %2689 = vmatpush1.msra.mxu0 %v2319
  %2690 = vmatprep.mubr.f32.mxu0 %v2078
  %2691 = vmatmul.mubr.f32.gmra.mrb[0].mxu0 %v2077
  %v2692 = vpop.f32.mrb[0].mxu0
  %v2693 = vadd.f32 %v2623, %v2692
  %v2694 = vpop.f32.mrb[0].mxu0
  %2695 = vdwg.mxu0
  %2696 = vmatprep.subr.mxu0 0.0
  %2697 = vmatpush1.msra.mxu0 %v2320
  %2698 = vmatprep.subr.mxu0 0.0
  %2699 = vmatpush1.msra.mxu0 %v2321
  %2700 = vmatprep.subr.mxu0 0.0
  %2701 = vmatpush1.msra.mxu0 %v2322
  %2702 = vmatprep.subr.mxu0 0.0
  %2703 = vmatpush1.msra.mxu0 %v2323
  %2704 = vmatprep.subr.mxu0 0.0
  %2705 = vmatpush1.msra.mxu0 %v2324
  %2706 = vmatprep.subr.mxu0 0.0
  %2707 = vmatpush1.msra.mxu0 %v2325
  %2708 = vmatprep.subr.mxu0 0.0
  %2709 = vmatpush1.msra.mxu0 %v2326
  %2710 = vmatprep.subr.mxu0 0.0
  %2711 = vmatpush1.msra.mxu0 %v2327
  %2712 = vmatprep.subr.mxu0 0.0
  %2713 = vmatpush1.msra.mxu0 %v2328
  %2714 = vmatprep.subr.mxu0 0.0
  %2715 = vmatpush1.msra.mxu0 %v2329
  %2716 = vmatprep.subr.mxu0 0.0
  %2717 = vmatpush1.msra.mxu0 %v2330
  %2718 = vmatprep.subr.mxu0 0.0
  %2719 = vmatpush1.msra.mxu0 %v2331
  %2720 = vmatprep.subr.mxu0 0.0
  %2721 = vmatpush1.msra.mxu0 %v2332
  %2722 = vmatprep.subr.mxu0 0.0
  %2723 = vmatpush1.msra.mxu0 %v2333
  %2724 = vmatprep.subr.mxu0 0.0
  %2725 = vmatpush1.msra.mxu0 %v2334
  %2726 = vmatprep.subr.mxu0 0.0
  %2727 = vmatpush1.msra.mxu0 %v2335
  %2728 = vmatprep.subr.mxu0 0.0
  %2729 = vmatpush1.msra.mxu0 %v2336
  %2730 = vmatprep.subr.mxu0 0.0
  %2731 = vmatpush1.msra.mxu0 %v2337
  %2732 = vmatprep.subr.mxu0 0.0
  %2733 = vmatpush1.msra.mxu0 %v2338
  %2734 = vmatprep.subr.mxu0 0.0
  %2735 = vmatpush1.msra.mxu0 %v2339
  %2736 = vmatprep.subr.mxu0 0.0
  %2737 = vmatpush1.msra.mxu0 %v2340
  %2738 = vmatprep.subr.mxu0 0.0
  %2739 = vmatpush1.msra.mxu0 %v2341
  %2740 = vmatprep.subr.mxu0 0.0
  %2741 = vmatpush1.msra.mxu0 %v2342
  %2742 = vmatprep.subr.mxu0 0.0
  %2743 = vmatpush1.msra.mxu0 %v2343
  %2744 = vmatprep.subr.mxu0 0.0
  %2745 = vmatpush1.msra.mxu0 %v2344
  %2746 = vmatprep.subr.mxu0 0.0
  %2747 = vmatpush1.msra.mxu0 %v2345
  %2748 = vmatprep.subr.mxu0 0.0
  %2749 = vmatpush1.msra.mxu0 %v2346
  %2750 = vmatprep.subr.mxu0 0.0
  %2751 = vmatpush1.msra.mxu0 %v2347
  %2752 = vmatprep.subr.mxu0 0.0
  %2753 = vmatpush1.msra.mxu0 %v2348
  %2754 = vmatprep.subr.mxu0 0.0
  %2755 = vmatpush1.msra.mxu0 %v2349
  %2756 = vmatprep.subr.mxu0 0.0
  %2757 = vmatpush1.msra.mxu0 %v2350
  %2758 = vmatprep.subr.mxu0 0.0
  %2759 = vmatpush1.msra.mxu0 %v2351
  %2760 = vmatprep.mubr.f32.mxu0 %v2080
  %2761 = vmatmul.mubr.f32.gmra.mrb[0].mxu0 %v2079
  %v2762 = vpop.f32.mrb[0].mxu0
  %v2763 = vadd.f32 %v2693, %v2762
  %v2764 = vpop.f32.mrb[0].mxu0
  %2765 = vdwg.mxu0
  %2766 = vmatprep.subr.mxu0 0.0
  %2767 = vmatpush1.msra.mxu0 %v2352
  %2768 = vmatprep.subr.mxu0 0.0
  %2769 = vmatpush1.msra.mxu0 %v2353
  %2770 = vmatprep.subr.mxu0 0.0
  %2771 = vmatpush1.msra.mxu0 %v2354
  %2772 = vmatprep.subr.mxu0 0.0
  %2773 = vmatpush1.msra.mxu0 %v2355
  %2774 = vmatprep.subr.mxu0 0.0
  %2775 = vmatpush1.msra.mxu0 %v2356
  %2776 = vmatprep.subr.mxu0 0.0
  %2777 = vmatpush1.msra.mxu0 %v2357
  %2778 = vmatprep.subr.mxu0 0.0
  %2779 = vmatpush1.msra.mxu0 %v2358
  %2780 = vmatprep.subr.mxu0 0.0
  %2781 = vmatpush1.msra.mxu0 %v2359
  %2782 = vmatprep.subr.mxu0 0.0
  %2783 = vmatpush1.msra.mxu0 %v2360
  %2784 = vmatprep.subr.mxu0 0.0
  %2785 = vmatpush1.msra.mxu0 %v2361
  %2786 = vmatprep.subr.mxu0 0.0
  %2787 = vmatpush1.msra.mxu0 %v2362
  %2788 = vmatprep.subr.mxu0 0.0
  %2789 = vmatpush1.msra.mxu0 %v2363
  %2790 = vmatprep.subr.mxu0 0.0
  %2791 = vmatpush1.msra.mxu0 %v2364
  %2792 = vmatprep.subr.mxu0 0.0
  %2793 = vmatpush1.msra.mxu0 %v2365
  %2794 = vmatprep.subr.mxu0 0.0
  %2795 = vmatpush1.msra.mxu0 %v2366
  %2796 = vmatprep.subr.mxu0 0.0
  %2797 = vmatpush1.msra.mxu0 %v2367
  %2798 = vmatprep.subr.mxu0 0.0
  %2799 = vmatpush1.msra.mxu0 %v2368
  %2800 = vmatprep.subr.mxu0 0.0
  %2801 = vmatpush1.msra.mxu0 %v2369
  %2802 = vmatprep.subr.mxu0 0.0
  %2803 = vmatpush1.msra.mxu0 %v2370
  %2804 = vmatprep.subr.mxu0 0.0
  %2805 = vmatpush1.msra.mxu0 %v2371
  %2806 = vmatprep.subr.mxu0 0.0
  %2807 = vmatpush1.msra.mxu0 %v2372
  %2808 = vmatprep.subr.mxu0 0.0
  %2809 = vmatpush1.msra.mxu0 %v2373
  %2810 = vmatprep.subr.mxu0 0.0
  %2811 = vmatpush1.msra.mxu0 %v2374
  %2812 = vmatprep.subr.mxu0 0.0
  %2813 = vmatpush1.msra.mxu0 %v2375
  %2814 = vmatprep.subr.mxu0 0.0
  %2815 = vmatpush1.msra.mxu0 %v2376
  %2816 = vmatprep.subr.mxu0 0.0
  %2817 = vmatpush1.msra.mxu0 %v2377
  %2818 = vmatprep.subr.mxu0 0.0
  %2819 = vmatpush1.msra.mxu0 %v2378
  %2820 = vmatprep.subr.mxu0 0.0
  %2821 = vmatpush1.msra.mxu0 %v2379
  %2822 = vmatprep.subr.mxu0 0.0
  %2823 = vmatpush1.msra.mxu0 %v2380
  %2824 = vmatprep.subr.mxu0 0.0
  %2825 = vmatpush1.msra.mxu0 %v2381
  %2826 = vmatprep.subr.mxu0 0.0
  %2827 = vmatpush1.msra.mxu0 %v2382
  %2828 = vmatprep.subr.mxu0 0.0
  %2829 = vmatpush1.msra.mxu0 %v2383
  %2830 = vmatprep.mubr.f32.mxu0 %v2082
  %2831 = vmatmul.mubr.f32.gmra.mrb[0].mxu0 %v2081
  %v2832 = vpop.f32.mrb[0].mxu0
  %v2833 = vadd.f32 %v2763, %v2832
  %v2834 = vpop.f32.mrb[0].mxu0
  %2835 = vdwg.mxu0
  %2836 = vmatprep.subr.mxu0 0.0
  %2837 = vmatpush1.msra.mxu0 %v2384
  %2838 = vmatprep.subr.mxu0 0.0
  %2839 = vmatpush1.msra.mxu0 %v2385
  %2840 = vmatprep.subr.mxu0 0.0
  %2841 = vmatpush1.msra.mxu0 %v2386
  %2842 = vmatprep.subr.mxu0 0.0
  %2843 = vmatpush1.msra.mxu0 %v2387
  %2844 = vmatprep.subr.mxu0 0.0
  %2845 = vmatpush1.msra.mxu0 %v2388
  %2846 = vmatprep.subr.mxu0 0.0
  %2847 = vmatpush1.msra.mxu0 %v2389
  %2848 = vmatprep.subr.mxu0 0.0
  %2849 = vmatpush1.msra.mxu0 %v2390
  %2850 = vmatprep.subr.mxu0 0.0
  %2851 = vmatpush1.msra.mxu0 %v2391
  %2852 = vmatprep.subr.mxu0 0.0
  %2853 = vmatpush1.msra.mxu0 %v2392
  %2854 = vmatprep.subr.mxu0 0.0
  %2855 = vmatpush1.msra.mxu0 %v2393
  %2856 = vmatprep.subr.mxu0 0.0
  %2857 = vmatpush1.msra.mxu0 %v2394
  %2858 = vmatprep.subr.mxu0 0.0
  %2859 = vmatpush1.msra.mxu0 %v2395
  %2860 = vmatprep.subr.mxu0 0.0
  %2861 = vmatpush1.msra.mxu0 %v2396
  %2862 = vmatprep.subr.mxu0 0.0
  %2863 = vmatpush1.msra.mxu0 %v2397
  %2864 = vmatprep.subr.mxu0 0.0
  %2865 = vmatpush1.msra.mxu0 %v2398
  %2866 = vmatprep.subr.mxu0 0.0
  %2867 = vmatpush1.msra.mxu0 %v2399
  %2868 = vmatprep.subr.mxu0 0.0
  %2869 = vmatpush1.msra.mxu0 %v2400
  %2870 = vmatprep.subr.mxu0 0.0
  %2871 = vmatpush1.msra.mxu0 %v2401
  %2872 = vmatprep.subr.mxu0 0.0
  %2873 = vmatpush1.msra.mxu0 %v2402
  %2874 = vmatprep.subr.mxu0 0.0
  %2875 = vmatpush1.msra.mxu0 %v2403
  %2876 = vmatprep.subr.mxu0 0.0
  %2877 = vmatpush1.msra.mxu0 %v2404
  %2878 = vmatprep.subr.mxu0 0.0
  %2879 = vmatpush1.msra.mxu0 %v2405
  %2880 = vmatprep.subr.mxu0 0.0
  %2881 = vmatpush1.msra.mxu0 %v2406
  %2882 = vmatprep.subr.mxu0 0.0
  %2883 = vmatpush1.msra.mxu0 %v2407
  %2884 = vmatprep.subr.mxu0 0.0
  %2885 = vmatpush1.msra.mxu0 %v2408
  %2886 = vmatprep.subr.mxu0 0.0
  %2887 = vmatpush1.msra.mxu0 %v2409
  %2888 = vmatprep.subr.mxu0 0.0
  %2889 = vmatpush1.msra.mxu0 %v2410
  %2890 = vmatprep.subr.mxu0 0.0
  %2891 = vmatpush1.msra.mxu0 %v2411
  %2892 = vmatprep.subr.mxu0 0.0
  %2893 = vmatpush1.msra.mxu0 %v2412
  %2894 = vmatprep.subr.mxu0 0.0
  %2895 = vmatpush1.msra.mxu0 %v2413
  %2896 = vmatprep.subr.mxu0 0.0
  %2897 = vmatpush1.msra.mxu0 %v2414
  %2898 = vmatprep.subr.mxu0 0.0
  %2899 = vmatpush1.msra.mxu0 %v2415
  %2900 = vmatprep.mubr.f32.mxu0 %v2084
  %2901 = vmatmul.mubr.f32.gmra.mrb[0].mxu0 %v2083
  %v2902 = vpop.f32.mrb[0].mxu0
  %v2903 = vadd.f32 %v2833, %v2902
  %v2904 = vpop.f32.mrb[0].mxu0
  %2905 = vdwg.mxu0
  %v2906 = vld [vmem:[%s0] sm:$0x3]
  %v2907 = vmax.f32 %v2906, %v1303
  %v2908 = vsub.f32 %v2906, %v2907
  %v2909 = vmul.f32 %v2908, 1.442695
  %v2910 = vpow.pop %v2909
  %v2911 = vsub.f32 %v1303, %v2907
  %v2912 = vmul.f32 %v2911, 1.442695
  %v2913 = vpow.pop %v2912
  %v2914 = vadd.f32 %v2910, %v2913
  %v2915 = vlog2.pop %v2914
  %v2916 = vmul.f32 %v2915, 0.6931472
  %v2917 = vadd.f32 %v2907, %v2916
  %vm2918 = vcmp.gt.f32.partialorder %v2903, 0.5
  %v2919 = vsub.f32 %v1303, %v2917
  %v2920 = vsub.f32 %v2906, %v2917
  %v2921 = vsel %vm2918, %v2919, %v2920
  %v2922 = vsel %vm2918, 1.0, 0.25
  %v2923 = vsub.f32 0.0, %v2922
  %v2924 = vmul.f32 %v2923, %v2921
  %vm2925 = vcmask 58368
  %v2926 = vsel %vm2925, %v2924, 0.0
  %2927 = vadd.xlane.f32.xlu0 %v2926
  %v2928 = vpop.xlane.xlu0 %2927
  %v2929 = vrot.slane %v2928, 4
  %v2930 = vadd.f32 %v2928, %v2929
  %v2931 = vrot.slane %v2930, 2
  %v2932 = vadd.f32 %v2930, %v2931
  %v2933 = vrot.slane %v2932, 1
  %v2934 = vadd.f32 %v2932, %v2933
  %s2935 = vtos %v2934
  %v2936 = vstv %s2935
  %v2937 = vsel %vm2925, %v2922, 0.0
  %2938 = vadd.xlane.f32.xlu0 %v2937
  %v2939 = vpop.xlane.xlu0 %2938
  %v2940 = vrot.slane %v2939, 4
  %v2941 = vadd.f32 %v2939, %v2940
  %v2942 = vrot.slane %v2941, 2
  %v2943 = vadd.f32 %v2941, %v2942
  %v2944 = vrot.slane %v2943, 1
  %v2945 = vadd.f32 %v2943, %v2944
  %s2946 = vtos %v2945
  %v2947 = vstv %s2946
  %v2948 = vrcp.pop %v2947
  %v2949 = vmul.f32 %v2936, %v2948
  %v2950 = vlaneseq
  %v2951 = vshrl.u32 %v2950, 7
  %vm2952 = vcmp.eq.s32.totalorder %v2951, 0
  %vm2953 = vcmp.eq.s32.totalorder %v2951, 1
  %v2954 = vsel %vm2953, %v2137, %v2191
  %v2955 = vsel %vm2952, %v2949, %v2954
  %2956 = vst [vmem:[%s9] sm:$0xff] %v2955
  // Predicated region
  $region38: #{_forward.1} parent=0 // pred_check
    _
  $region39: #{_forward.1} parent=0 // pred_check_branch
    %2958 = sbr.rel (0) target = $region41
  $region40: #{_forward.1} parent=0 // pred_region
    _
  $region41: #{_forward.1} parent=0 // pred_fallthru
    _
  // Predicated region
  $region42: #{_forward.1} parent=0 // pred_check
    _
  $region43: #{_forward.1} parent=0 // pred_check_branch
    %2960 = sbr.rel (0) target = $region45
  $region44: #{_forward.1} parent=0 // pred_region
    _
  $region45: #{_forward.1} parent=0 // pred_fallthru
    _

</llo_original>
